<compile_context>
chip_gen: v7x
topology: tpu7x:2x2x1
jax: 0.10.0
libtpu: 0.0.40
codegen_flags: <defaults>
</compile_context>

<pallas_src>
import numpy as np
import jax
import jax.numpy as jnp
from jax import lax
from jax.experimental import pallas as pl
from jax.experimental.pallas import tpu as pltpu

# ---------------- small synthetic GPT-J config ----------------
B, S = 2, 8              # batch, sequence
E = 32                   # hidden size (n_embd)
H = 4                    # attention heads
D = E // H               # head dim
ROT = 4                  # rotary_dim (partial, GPT-J style; ROT < D)
MLP_DIM = 4 * E          # MLP intermediate size (= 128, lane dense)
V = 64                   # vocab size
VP = 128                 # vocab padded to a full lane tile for lane-dense stores
N_BLOCKS = 2             # = n_layer - split_point_2
LN_EPS = 1e-5
SCALE = float(np.sqrt(D))                      # GPT-J scale_attn = sqrt(head_dim)
INV_SCALE = float(1.0 / np.sqrt(D))
MASK_VALUE = float(np.finfo(np.float32).min)   # torch.finfo(f32).min
BS = B * S


# ---------------- in-kernel helpers ----------------
def _layernorm_2d(x2, w, b):
    mu = jnp.mean(x2, axis=-1, keepdims=True)
    var = jnp.mean((x2 - mu) ** 2, axis=-1, keepdims=True)
    return (x2 - mu) * lax.rsqrt(var + LN_EPS) * w + b


def _gelu_new(x):
    # GPT-J NewGELUActivation (tanh approximation)
    c = np.sqrt(2.0 / np.pi).astype(np.float32)
    return 0.5 * x * (1.0 + jnp.tanh(c * (x + 0.044715 * x * x * x)))


# ---------------- fused Pallas kernel (all blocks + ln_f + lm_head) ----------------
def gptj_top_kernel(x_ref, ln1w_ref, ln1b_ref, wqkv_ref, wo_ref,
                    wfi_ref, bfi_ref, wfo_ref, bfo_ref,
                    cos_ref, sin_ref, rot_ref, hmask_ref, causal_ref,
                    lnfw_ref, lnfb_ref, wh_ref, bh_ref, o_ref):
    x2 = x_ref[...]                      # (BS, E) residual stream, stays in VMEM/vregs
    cosb = cos_ref[...]                  # (BS, E) cos (padded with ones past ROT, tiled)
    sinb = sin_ref[...]                  # (BS, E) sin (padded with zeros past ROT, tiled)
    rfull = rot_ref[...]                 # (E, E) block-diag rotate_every_two matrix
    hm = hmask_ref[...]                  # (H, E) per-head lane masks (0/1)
    causal = causal_ref[...] > 0.5       # (H*S, S) causal mask tiled over heads

    for l in range(N_BLOCKS):            # static unroll over layers
        # ---- ln_1 ----
        h2 = _layernorm_2d(x2, ln1w_ref[l], ln1b_ref[l])            # (BS, E)

        # ---- fused q/k/v projection (no bias in GPT-J) ----
        qkv = jnp.dot(h2, wqkv_ref[l], preferred_element_type=jnp.float32)  # (BS, 3E)
        q2 = qkv[:, 0:E]
        k2 = qkv[:, E:2 * E]
        v2 = qkv[:, 2 * E:3 * E]

        # ---- partial interleaved rotary, applied once on full-width q/k ----
        q2 = q2 * cosb + jnp.dot(q2, rfull, preferred_element_type=jnp.float32) * sinb
        k2 = k2 * cosb + jnp.dot(k2, rfull, preferred_element_type=jnp.float32) * sinb

        q3 = q2.reshape(B, S, E)
        k3 = k2.reshape(B, S, E)
        v3 = v2.reshape(B, S, E)

        # ---- attention for all B*H heads via two batched dot_generals ----
        # Stack head-masked queries along the (tile-aligned) sublane axis: because
        # each masked query only has lanes of its own head, contracting over full E
        # against k3 gives exactly that head's q.k^T scores.
        qstack = jnp.concatenate([q3 * hm[h] for h in range(H)], axis=1)   # (B, H*S, E)
        scores = lax.dot_general(qstack, k3, (((2,), (2,)), ((0,), (0,))),
                                 preferred_element_type=jnp.float32)       # (B, H*S, S)
        # GPT-J order: mask -> divide by sqrt(head_dim) -> softmax
        scores = jnp.where(causal, scores, MASK_VALUE) * INV_SCALE
        m = jnp.max(scores, axis=-1, keepdims=True)
        e = jnp.exp(scores - m)
        p = e * pl.reciprocal(jnp.sum(e, axis=-1, keepdims=True), approx=True)
        ostack = lax.dot_general(p, v3, (((2,), (1,)), ((0,), (0,))),
                                 preferred_element_type=jnp.float32)       # (B, H*S, E)
        # Recombine heads: each head keeps only its own lanes (H=4 cheap vector adds).
        attn3 = ostack[:, 0:S, :] * hm[0]
        for h in range(1, H):
            attn3 = attn3 + ostack[:, h * S:(h + 1) * S, :] * hm[h]
        attn2 = attn3.reshape(BS, E)

        # ---- single output projection ----
        attn_out = jnp.dot(attn2, wo_ref[l], preferred_element_type=jnp.float32)

        # ---- parallel MLP branch on the same ln_1 output (GPT-J parallel block) ----
        f = jnp.dot(h2, wfi_ref[l], preferred_element_type=jnp.float32) + bfi_ref[l]
        f = _gelu_new(f)
        mlp_out = jnp.dot(f, wfo_ref[l], preferred_element_type=jnp.float32) + bfo_ref[l]

        # ---- residual ----
        x2 = attn_out + mlp_out + x2

    # ---- ln_f + lm_head (vocab padded to 128 lanes for an unmasked store) ----
    hf = _layernorm_2d(x2, lnfw_ref[...], lnfb_ref[...])
    o_ref[...] = jnp.dot(hf, wh_ref[...], preferred_element_type=jnp.float32) + bh_ref[...]


# ---------------- wrapper ----------------
@jax.jit
def gptj_top_forward(x, params):
    x2 = x.reshape(BS, E)
    args = (x2,
            params["ln1_w"], params["ln1_b"], params["wqkv"], params["wo"],
            params["wfi"], params["bfi"], params["wfo"], params["bfo"],
            params["rope_cos"], params["rope_sin"], params["rope_rot"],
            params["head_mask"], params["causal"],
            params["lnf_w"], params["lnf_b"], params["w_head_p"], params["b_head_p"])
    logits_p = pl.pallas_call(
        gptj_top_kernel,
        out_shape=jax.ShapeDtypeStruct((BS, VP), jnp.float32),
        in_specs=[pl.BlockSpec(memory_space=pltpu.MemorySpace.VMEM)] * len(args),
        out_specs=pl.BlockSpec(memory_space=pltpu.MemorySpace.VMEM),
    )(*args)
    return logits_p[:, :V].reshape(B, S, V)


# ---------------- deterministic parameter / rope construction ----------------
def _make_rope():
    inv_freq = 1.0 / (10000.0 ** (np.arange(0, ROT, 2, dtype=np.float32) / ROT))
    pos = np.arange(S, dtype=np.float32)
    sinusoid = np.einsum("i,j->ij", pos, inv_freq)              # (S, ROT//2)
    sin_i = np.repeat(np.sin(sinusoid), 2, axis=-1)             # interleaved (S, ROT)
    cos_i = np.repeat(np.cos(sinusoid), 2, axis=-1)
    cos_sd = np.concatenate([cos_i, np.ones((S, D - ROT), np.float32)], 1)   # (S, D)
    sin_sd = np.concatenate([sin_i, np.zeros((S, D - ROT), np.float32)], 1)  # (S, D)
    # rotate_every_two as a right-multiplied matrix: y = x @ R
    R = np.zeros((D, D), np.float32)
    for i in range(ROT // 2):
        R[2 * i + 1, 2 * i] = -1.0
        R[2 * i, 2 * i + 1] = 1.0
    # full-lane versions for the fused kernel
    cos_se = np.tile(cos_sd, (1, H))                            # (S, E)
    sin_se = np.tile(sin_sd, (1, H))
    cos_bse = np.tile(cos_se, (B, 1)).astype(np.float32)        # (B*S, E)
    sin_bse = np.tile(sin_se, (B, 1)).astype(np.float32)
    r_full = np.kron(np.eye(H, dtype=np.float32), R)            # (E, E) block-diag
    return cos_sd.astype(np.float32), sin_sd.astype(np.float32), R, cos_bse, sin_bse, r_full


def init_params(key):
    ks = list(jax.random.split(key, 64))

    def nrm(shape, scale):
        return scale * jax.random.normal(ks.pop(), shape, jnp.float32)

    L = N_BLOCKS
    wq = nrm((L, E, E), 0.02)
    wk = nrm((L, E, E), 0.02)
    wv = nrm((L, E, E), 0.02)
    wqkv = jnp.concatenate([wq, wk, wv], axis=-1)               # (L, E, 3E)

    cos_sd, sin_sd, R, cos_bse, sin_bse, r_full = _make_rope()
    head_mask = np.kron(np.eye(H, dtype=np.float32), np.ones((1, D), np.float32))  # (H, E)
    causal = np.tile(np.tril(np.ones((S, S), np.float32)), (H, 1))                 # (H*S, S)

    w_head = nrm((E, V), 0.02)
    b_head = nrm((1, V), 0.01)
    w_head_p = jnp.concatenate([w_head, jnp.zeros((E, VP - V), jnp.float32)], axis=1)
    b_head_p = jnp.concatenate([b_head, jnp.zeros((1, VP - V), jnp.float32)], axis=1)

    return dict(
        # stacked per-layer weights (leading layer axis)
        ln1_w=1.0 + nrm((L, 1, E), 0.01), ln1_b=nrm((L, 1, E), 0.01),
        wqkv=wqkv, wo=nrm((L, E, E), 0.02),
        wfi=nrm((L, E, MLP_DIM), 0.02), bfi=nrm((L, 1, MLP_DIM), 0.01),
        wfo=nrm((L, MLP_DIM, E), 0.02), bfo=nrm((L, 1, E), 0.01),
        # head
        lnf_w=1.0 + nrm((1, E), 0.01), lnf_b=nrm((1, E), 0.01),
        w_head=w_head, b_head=b_head, w_head_p=w_head_p, b_head_p=b_head_p,
        # kernel-side rope / masks
        rope_cos=jnp.asarray(cos_bse), rope_sin=jnp.asarray(sin_bse),
        rope_rot=jnp.asarray(r_full),
        head_mask=jnp.asarray(head_mask), causal=jnp.asarray(causal),
        # reference-side rope
        ref_cos=jnp.asarray(cos_sd), ref_sin=jnp.asarray(sin_sd), ref_R=jnp.asarray(R),
    )


# ---------------- pure-JAX reference (different code path, for sanity) ----------------
def reference_forward(x, params):
    cos_sd, sin_sd, R = params["ref_cos"], params["ref_sin"], params["ref_R"]

    def ln(x2, w, b):
        mu = x2.mean(-1, keepdims=True)
        var = ((x2 - mu) ** 2).mean(-1, keepdims=True)
        return (x2 - mu) / jnp.sqrt(var + LN_EPS) * w + b

    causal = np.tril(np.ones((S, S), bool))
    for l in range(N_BLOCKS):
        x2 = x.reshape(BS, E)
        h2 = ln(x2, params["ln1_w"][l], params["ln1_b"][l])
        wqkv = params["wqkv"][l]
        q = (h2 @ wqkv[:, :E]).reshape(B, S, H, D)
        k = (h2 @ wqkv[:, E:2 * E]).reshape(B, S, H, D)
        v = (h2 @ wqkv[:, 2 * E:]).reshape(B, S, H, D)
        rope = lambda t: (t * cos_sd[None, :, None, :]
                          + jnp.einsum("bshd,de->bshe", t, R) * sin_sd[None, :, None, :])
        q, k = rope(q), rope(k)
        scores = jnp.einsum("bqhd,bkhd->bhqk", q, k)
        scores = jnp.where(causal, scores, MASK_VALUE) / SCALE
        p = jax.nn.softmax(scores, axis=-1)
        o = jnp.einsum("bhqk,bkhd->bqhd", p, v).reshape(BS, E)
        attn_out = o @ params["wo"][l]
        f = jax.nn.gelu(h2 @ params["wfi"][l] + params["bfi"][l], approximate=True)
        mlp_out = f @ params["wfo"][l] + params["bfo"][l]
        x = (attn_out + mlp_out + x2).reshape(B, S, E)
    x2 = x.reshape(BS, E)
    h2 = ln(x2, params["lnf_w"], params["lnf_b"])
    return (h2 @ params["w_head"] + params["b_head"]).reshape(B, S, V)


if __name__ == "__main__":
    key = jax.random.PRNGKey(0)
    kx, kp = jax.random.split(key)
    params = init_params(kp)
    x = jax.random.normal(kx, (B, S, E), jnp.float32)

    out = gptj_top_forward(x, params)
    out = jax.block_until_ready(out)

    ref = reference_forward(x, params)
    np.testing.assert_allclose(np.asarray(out), np.asarray(ref), rtol=2e-2, atol=2e-2)
    print("KERNEL_OK")
</pallas_src>

<mosaic_0001>
module attributes {stable_mosaic.version = 11 : i64} {
  func.func @gptj_top_kernel(%arg0: memref<16x32xf32, #tpu.memory_space<vmem>>, %arg1: memref<2x1x32xf32, #tpu.memory_space<vmem>>, %arg2: memref<2x1x32xf32, #tpu.memory_space<vmem>>, %arg3: memref<2x32x96xf32, #tpu.memory_space<vmem>>, %arg4: memref<2x32x32xf32, #tpu.memory_space<vmem>>, %arg5: memref<2x32x128xf32, #tpu.memory_space<vmem>>, %arg6: memref<2x1x128xf32, #tpu.memory_space<vmem>>, %arg7: memref<2x128x32xf32, #tpu.memory_space<vmem>>, %arg8: memref<2x1x32xf32, #tpu.memory_space<vmem>>, %arg9: memref<16x32xf32, #tpu.memory_space<vmem>>, %arg10: memref<16x32xf32, #tpu.memory_space<vmem>>, %arg11: memref<32x32xf32, #tpu.memory_space<vmem>>, %arg12: memref<4x32xf32, #tpu.memory_space<vmem>>, %arg13: memref<32x8xf32, #tpu.memory_space<vmem>>, %arg14: memref<1x32xf32, #tpu.memory_space<vmem>>, %arg15: memref<1x32xf32, #tpu.memory_space<vmem>>, %arg16: memref<32x128xf32, #tpu.memory_space<vmem>>, %arg17: memref<1x128xf32, #tpu.memory_space<vmem>>, %arg18: memref<16x128xf32, #tpu.memory_space<vmem>>) attributes {dimension_semantics = [], scalar_prefetch = 0 : i64, scratch_operands = 0 : i64, tpu.core_type = #tpu.core_type<tc>} {
    %c0 = arith.constant 0 : index
    %c0_0 = arith.constant 0 : index
    %0 = vector.load %arg0[%c0, %c0_0] : memref<16x32xf32, #tpu.memory_space<vmem>>, vector<16x32xf32>
    %c0_1 = arith.constant 0 : index
    %c0_2 = arith.constant 0 : index
    %1 = vector.load %arg9[%c0_1, %c0_2] : memref<16x32xf32, #tpu.memory_space<vmem>>, vector<16x32xf32>
    %c0_3 = arith.constant 0 : index
    %c0_4 = arith.constant 0 : index
    %2 = vector.load %arg10[%c0_3, %c0_4] : memref<16x32xf32, #tpu.memory_space<vmem>>, vector<16x32xf32>
    %c0_5 = arith.constant 0 : index
    %c0_6 = arith.constant 0 : index
    %3 = vector.load %arg11[%c0_5, %c0_6] : memref<32x32xf32, #tpu.memory_space<vmem>>, vector<32x32xf32>
    %c0_7 = arith.constant 0 : index
    %c0_8 = arith.constant 0 : index
    %4 = vector.load %arg12[%c0_7, %c0_8] : memref<4x32xf32, #tpu.memory_space<vmem>>, vector<4x32xf32>
    %c0_9 = arith.constant 0 : index
    %c0_10 = arith.constant 0 : index
    %5 = vector.load %arg13[%c0_9, %c0_10] : memref<32x8xf32, #tpu.memory_space<vmem>>, vector<32x8xf32>
    %cst = arith.constant 5.000000e-01 : f32
    %6 = vector.broadcast %cst : f32 to vector<32x8xf32>
    %7 = arith.cmpf ogt, %5, %6 : vector<32x8xf32>
    %c0_11 = arith.constant 0 : index
    %c0_12 = arith.constant 0 : index
    %c0_13 = arith.constant 0 : index
    %8 = vector.load %arg1[%c0_11, %c0_12, %c0_13] : memref<2x1x32xf32, #tpu.memory_space<vmem>>, vector<1x1x32xf32>
    %9 = vector.shape_cast %8 : vector<1x1x32xf32> to vector<1x32xf32>
    %c0_14 = arith.constant 0 : index
    %c0_15 = arith.constant 0 : index
    %c0_16 = arith.constant 0 : index
    %10 = vector.load %arg2[%c0_14, %c0_15, %c0_16] : memref<2x1x32xf32, #tpu.memory_space<vmem>>, vector<1x1x32xf32>
    %11 = vector.shape_cast %10 : vector<1x1x32xf32> to vector<1x32xf32>
    %cst_17 = arith.constant dense<0.000000e+00> : vector<16xf32>
    %12 = vector.multi_reduction <add>, %0, %cst_17 [1] : vector<16x32xf32> to vector<16xf32>
    %13 = vector.shape_cast %12 : vector<16xf32> to vector<16x1xf32>
    %cst_18 = arith.constant 3.200000e+01 : f32
    %14 = vector.broadcast %cst_18 : f32 to vector<16x1xf32>
    %15 = arith.divf %13, %14 : vector<16x1xf32>
    %16 = vector.broadcast %15 : vector<16x1xf32> to vector<16x32xf32>
    %17 = arith.subf %0, %16 : vector<16x32xf32>
    %18 = arith.mulf %17, %17 : vector<16x32xf32>
    %cst_19 = arith.constant dense<0.000000e+00> : vector<16xf32>
    %19 = vector.multi_reduction <add>, %18, %cst_19 [1] : vector<16x32xf32> to vector<16xf32>
    %20 = vector.shape_cast %19 : vector<16xf32> to vector<16x1xf32>
    %cst_20 = arith.constant 3.200000e+01 : f32
    %21 = vector.broadcast %cst_20 : f32 to vector<16x1xf32>
    %22 = arith.divf %20, %21 : vector<16x1xf32>
    %23 = vector.broadcast %15 : vector<16x1xf32> to vector<16x32xf32>
    %24 = arith.subf %0, %23 : vector<16x32xf32>
    %cst_21 = arith.constant 9.99999974E-6 : f32
    %25 = vector.broadcast %cst_21 : f32 to vector<16x1xf32>
    %26 = arith.addf %22, %25 : vector<16x1xf32>
    %27 = math.rsqrt %26 : vector<16x1xf32>
    %28 = vector.broadcast %27 : vector<16x1xf32> to vector<16x32xf32>
    %29 = arith.mulf %24, %28 : vector<16x32xf32>
    %30 = vector.broadcast %9 : vector<1x32xf32> to vector<16x32xf32>
    %31 = arith.mulf %29, %30 : vector<16x32xf32>
    %32 = vector.broadcast %11 : vector<1x32xf32> to vector<16x32xf32>
    %33 = arith.addf %31, %32 : vector<16x32xf32>
    %c0_22 = arith.constant 0 : index
    %c0_23 = arith.constant 0 : index
    %c0_24 = arith.constant 0 : index
    %34 = vector.load %arg3[%c0_22, %c0_23, %c0_24] : memref<2x32x96xf32, #tpu.memory_space<vmem>>, vector<1x32x96xf32>
    %35 = vector.shape_cast %34 : vector<1x32x96xf32> to vector<32x96xf32>
    %cst_25 = arith.constant dense<0.000000e+00> : vector<16x96xf32>
    %36 = tpu.matmul %33, %35, %cst_25 {dimension_numbers = #tpu.dot_dimension_numbers<[1], [0], [0], [1], [0, 0, 1, 1], [], []>} : vector<16x32xf32>, vector<32x96xf32>, vector<16x96xf32> -> vector<16x96xf32>
    %37 = vector.extract_strided_slice %36 {offsets = [0, 0], sizes = [16, 32], strides = [1, 1]} : vector<16x96xf32> to vector<16x32xf32>
    %38 = vector.extract_strided_slice %36 {offsets = [0, 32], sizes = [16, 32], strides = [1, 1]} : vector<16x96xf32> to vector<16x32xf32>
    %39 = vector.extract_strided_slice %36 {offsets = [0, 64], sizes = [16, 32], strides = [1, 1]} : vector<16x96xf32> to vector<16x32xf32>
    %40 = arith.mulf %37, %1 : vector<16x32xf32>
    %cst_26 = arith.constant dense<0.000000e+00> : vector<16x32xf32>
    %41 = tpu.matmul %37, %3, %cst_26 {dimension_numbers = #tpu.dot_dimension_numbers<[1], [0], [0], [1], [0, 0, 1, 1], [], []>} : vector<16x32xf32>, vector<32x32xf32>, vector<16x32xf32> -> vector<16x32xf32>
    %42 = arith.mulf %41, %2 : vector<16x32xf32>
    %43 = arith.addf %40, %42 : vector<16x32xf32>
    %44 = arith.mulf %38, %1 : vector<16x32xf32>
    %cst_27 = arith.constant dense<0.000000e+00> : vector<16x32xf32>
    %45 = tpu.matmul %38, %3, %cst_27 {dimension_numbers = #tpu.dot_dimension_numbers<[1], [0], [0], [1], [0, 0, 1, 1], [], []>} : vector<16x32xf32>, vector<32x32xf32>, vector<16x32xf32> -> vector<16x32xf32>
    %46 = arith.mulf %45, %2 : vector<16x32xf32>
    %47 = arith.addf %44, %46 : vector<16x32xf32>
    %48 = vector.shape_cast %43 : vector<16x32xf32> to vector<2x8x32xf32>
    %49 = vector.shape_cast %47 : vector<16x32xf32> to vector<2x8x32xf32>
    %50 = vector.shape_cast %39 : vector<16x32xf32> to vector<2x8x32xf32>
    %51 = vector.extract_strided_slice %4 {offsets = [0, 0], sizes = [1, 32], strides = [1, 1]} : vector<4x32xf32> to vector<1x32xf32>
    %52 = vector.shape_cast %51 : vector<1x32xf32> to vector<32xf32>
    %53 = vector.shape_cast %52 : vector<32xf32> to vector<1x1x32xf32>
    %54 = vector.broadcast %53 : vector<1x1x32xf32> to vector<2x8x32xf32>
    %55 = arith.mulf %48, %54 : vector<2x8x32xf32>
    %56 = vector.extract_strided_slice %4 {offsets = [1, 0], sizes = [1, 32], strides = [1, 1]} : vector<4x32xf32> to vector<1x32xf32>
    %57 = vector.shape_cast %56 : vector<1x32xf32> to vector<32xf32>
    %58 = vector.shape_cast %57 : vector<32xf32> to vector<1x1x32xf32>
    %59 = vector.broadcast %58 : vector<1x1x32xf32> to vector<2x8x32xf32>
    %60 = arith.mulf %48, %59 : vector<2x8x32xf32>
    %61 = vector.extract_strided_slice %4 {offsets = [2, 0], sizes = [1, 32], strides = [1, 1]} : vector<4x32xf32> to vector<1x32xf32>
    %62 = vector.shape_cast %61 : vector<1x32xf32> to vector<32xf32>
    %63 = vector.shape_cast %62 : vector<32xf32> to vector<1x1x32xf32>
    %64 = vector.broadcast %63 : vector<1x1x32xf32> to vector<2x8x32xf32>
    %65 = arith.mulf %48, %64 : vector<2x8x32xf32>
    %66 = vector.extract_strided_slice %4 {offsets = [3, 0], sizes = [1, 32], strides = [1, 1]} : vector<4x32xf32> to vector<1x32xf32>
    %67 = vector.shape_cast %66 : vector<1x32xf32> to vector<32xf32>
    %68 = vector.shape_cast %67 : vector<32xf32> to vector<1x1x32xf32>
    %69 = vector.broadcast %68 : vector<1x1x32xf32> to vector<2x8x32xf32>
    %70 = arith.mulf %48, %69 : vector<2x8x32xf32>
    %71 = tpu.concatenate %55, %60, %65, %70 in 1 : vector<2x8x32xf32>, vector<2x8x32xf32>, vector<2x8x32xf32>, vector<2x8x32xf32> -> vector<2x32x32xf32>
    %cst_28 = arith.constant dense<0.000000e+00> : vector<2x32x8xf32>
    %72 = tpu.matmul %71, %49, %cst_28 {dimension_numbers = #tpu.dot_dimension_numbers<[2], [2], [1], [1], [0, 0, 0, 1, 1, 1], [0], [0]>} : vector<2x32x32xf32>, vector<2x8x32xf32>, vector<2x32x8xf32> -> vector<2x32x8xf32>
    %cst_29 = arith.constant -3.40282347E+38 : f32
    %73 = vector.shape_cast %7 : vector<32x8xi1> to vector<1x32x8xi1>
    %74 = vector.broadcast %73 : vector<1x32x8xi1> to vector<2x32x8xi1>
    %75 = vector.broadcast %cst_29 : f32 to vector<2x32x8xf32>
    %76 = arith.select %74, %72, %75 : vector<2x32x8xi1>, vector<2x32x8xf32>
    %cst_30 = arith.constant 0.353553385 : f32
    %77 = vector.broadcast %cst_30 : f32 to vector<2x32x8xf32>
    %78 = arith.mulf %76, %77 : vector<2x32x8xf32>
    %cst_31 = arith.constant dense<0xFF800000> : vector<2x32xf32>
    %79 = vector.multi_reduction <maximumf>, %78, %cst_31 [2] : vector<2x32x8xf32> to vector<2x32xf32>
    %80 = vector.shape_cast %79 : vector<2x32xf32> to vector<2x32x1xf32>
    %81 = vector.broadcast %80 : vector<2x32x1xf32> to vector<2x32x8xf32>
    %82 = arith.subf %78, %81 : vector<2x32x8xf32>
    %83 = math.exp %82 : vector<2x32x8xf32>
    %cst_32 = arith.constant dense<0.000000e+00> : vector<2x32xf32>
    %84 = vector.multi_reduction <add>, %83, %cst_32 [2] : vector<2x32x8xf32> to vector<2x32xf32>
    %85 = vector.shape_cast %84 : vector<2x32xf32> to vector<2x32x1xf32>
    %86 = tpu.reciprocal %85 {approx = true} : vector<2x32x1xf32> -> vector<2x32x1xf32>
    %87 = vector.broadcast %86 : vector<2x32x1xf32> to vector<2x32x8xf32>
    %88 = arith.mulf %83, %87 : vector<2x32x8xf32>
    %cst_33 = arith.constant dense<0.000000e+00> : vector<2x32x32xf32>
    %89 = tpu.matmul %88, %50, %cst_33 {dimension_numbers = #tpu.dot_dimension_numbers<[2], [1], [1], [2], [0, 0, 0, 1, 1, 2], [0], [0]>} : vector<2x32x8xf32>, vector<2x8x32xf32>, vector<2x32x32xf32> -> vector<2x32x32xf32>
    %90 = vector.extract_strided_slice %89 {offsets = [0, 0, 0], sizes = [2, 8, 32], strides = [1, 1, 1]} : vector<2x32x32xf32> to vector<2x8x32xf32>
    %91 = vector.extract_strided_slice %4 {offsets = [0, 0], sizes = [1, 32], strides = [1, 1]} : vector<4x32xf32> to vector<1x32xf32>
    %92 = vector.shape_cast %91 : vector<1x32xf32> to vector<32xf32>
    %93 = vector.shape_cast %92 : vector<32xf32> to vector<1x1x32xf32>
    %94 = vector.broadcast %93 : vector<1x1x32xf32> to vector<2x8x32xf32>
    %95 = arith.mulf %90, %94 : vector<2x8x32xf32>
    %96 = vector.extract_strided_slice %89 {offsets = [0, 8, 0], sizes = [2, 8, 32], strides = [1, 1, 1]} : vector<2x32x32xf32> to vector<2x8x32xf32>
    %97 = vector.extract_strided_slice %4 {offsets = [1, 0], sizes = [1, 32], strides = [1, 1]} : vector<4x32xf32> to vector<1x32xf32>
    %98 = vector.shape_cast %97 : vector<1x32xf32> to vector<32xf32>
    %99 = vector.shape_cast %98 : vector<32xf32> to vector<1x1x32xf32>
    %100 = vector.broadcast %99 : vector<1x1x32xf32> to vector<2x8x32xf32>
    %101 = arith.mulf %96, %100 : vector<2x8x32xf32>
    %102 = arith.addf %95, %101 : vector<2x8x32xf32>
    %103 = vector.extract_strided_slice %89 {offsets = [0, 16, 0], sizes = [2, 8, 32], strides = [1, 1, 1]} : vector<2x32x32xf32> to vector<2x8x32xf32>
    %104 = vector.extract_strided_slice %4 {offsets = [2, 0], sizes = [1, 32], strides = [1, 1]} : vector<4x32xf32> to vector<1x32xf32>
    %105 = vector.shape_cast %104 : vector<1x32xf32> to vector<32xf32>
    %106 = vector.shape_cast %105 : vector<32xf32> to vector<1x1x32xf32>
    %107 = vector.broadcast %106 : vector<1x1x32xf32> to vector<2x8x32xf32>
    %108 = arith.mulf %103, %107 : vector<2x8x32xf32>
    %109 = arith.addf %102, %108 : vector<2x8x32xf32>
    %110 = vector.extract_strided_slice %89 {offsets = [0, 24, 0], sizes = [2, 8, 32], strides = [1, 1, 1]} : vector<2x32x32xf32> to vector<2x8x32xf32>
    %111 = vector.extract_strided_slice %4 {offsets = [3, 0], sizes = [1, 32], strides = [1, 1]} : vector<4x32xf32> to vector<1x32xf32>
    %112 = vector.shape_cast %111 : vector<1x32xf32> to vector<32xf32>
    %113 = vector.shape_cast %112 : vector<32xf32> to vector<1x1x32xf32>
    %114 = vector.broadcast %113 : vector<1x1x32xf32> to vector<2x8x32xf32>
    %115 = arith.mulf %110, %114 : vector<2x8x32xf32>
    %116 = arith.addf %109, %115 : vector<2x8x32xf32>
    %117 = vector.shape_cast %116 : vector<2x8x32xf32> to vector<16x32xf32>
    %c0_34 = arith.constant 0 : index
    %c0_35 = arith.constant 0 : index
    %c0_36 = arith.constant 0 : index
    %118 = vector.load %arg4[%c0_34, %c0_35, %c0_36] : memref<2x32x32xf32, #tpu.memory_space<vmem>>, vector<1x32x32xf32>
    %119 = vector.shape_cast %118 : vector<1x32x32xf32> to vector<32x32xf32>
    %cst_37 = arith.constant dense<0.000000e+00> : vector<16x32xf32>
    %120 = tpu.matmul %117, %119, %cst_37 {dimension_numbers = #tpu.dot_dimension_numbers<[1], [0], [0], [1], [0, 0, 1, 1], [], []>} : vector<16x32xf32>, vector<32x32xf32>, vector<16x32xf32> -> vector<16x32xf32>
    %c0_38 = arith.constant 0 : index
    %c0_39 = arith.constant 0 : index
    %c0_40 = arith.constant 0 : index
    %121 = vector.load %arg5[%c0_38, %c0_39, %c0_40] : memref<2x32x128xf32, #tpu.memory_space<vmem>>, vector<1x32x128xf32>
    %122 = vector.shape_cast %121 : vector<1x32x128xf32> to vector<32x128xf32>
    %cst_41 = arith.constant dense<0.000000e+00> : vector<16x128xf32>
    %123 = tpu.matmul %33, %122, %cst_41 {dimension_numbers = #tpu.dot_dimension_numbers<[1], [0], [0], [1], [0, 0, 1, 1], [], []>} : vector<16x32xf32>, vector<32x128xf32>, vector<16x128xf32> -> vector<16x128xf32>
    %c0_42 = arith.constant 0 : index
    %c0_43 = arith.constant 0 : index
    %c0_44 = arith.constant 0 : index
    %124 = vector.load %arg6[%c0_42, %c0_43, %c0_44] : memref<2x1x128xf32, #tpu.memory_space<vmem>>, vector<1x1x128xf32>
    %125 = vector.shape_cast %124 : vector<1x1x128xf32> to vector<1x128xf32>
    %126 = vector.broadcast %125 : vector<1x128xf32> to vector<16x128xf32>
    %127 = arith.addf %123, %126 : vector<16x128xf32>
    %cst_45 = arith.constant 5.000000e-01 : f32
    %128 = vector.broadcast %cst_45 : f32 to vector<16x128xf32>
    %129 = arith.mulf %128, %127 : vector<16x128xf32>
    %cst_46 = arith.constant 4.471500e-02 : f32
    %130 = vector.broadcast %cst_46 : f32 to vector<16x128xf32>
    %131 = arith.mulf %130, %127 : vector<16x128xf32>
    %132 = arith.mulf %131, %127 : vector<16x128xf32>
    %133 = arith.mulf %132, %127 : vector<16x128xf32>
    %134 = arith.addf %127, %133 : vector<16x128xf32>
    %cst_47 = arith.constant 0.797884583 : f32
    %135 = vector.broadcast %cst_47 : f32 to vector<16x128xf32>
    %136 = arith.mulf %135, %134 : vector<16x128xf32>
    %137 = math.tanh %136 : vector<16x128xf32>
    %cst_48 = arith.constant 1.000000e+00 : f32
    %138 = vector.broadcast %cst_48 : f32 to vector<16x128xf32>
    %139 = arith.addf %138, %137 : vector<16x128xf32>
    %140 = arith.mulf %129, %139 : vector<16x128xf32>
    %c0_49 = arith.constant 0 : index
    %c0_50 = arith.constant 0 : index
    %c0_51 = arith.constant 0 : index
    %141 = vector.load %arg7[%c0_49, %c0_50, %c0_51] : memref<2x128x32xf32, #tpu.memory_space<vmem>>, vector<1x128x32xf32>
    %142 = vector.shape_cast %141 : vector<1x128x32xf32> to vector<128x32xf32>
    %cst_52 = arith.constant dense<0.000000e+00> : vector<16x32xf32>
    %143 = tpu.matmul %140, %142, %cst_52 {dimension_numbers = #tpu.dot_dimension_numbers<[1], [0], [0], [1], [0, 0, 1, 1], [], []>} : vector<16x128xf32>, vector<128x32xf32>, vector<16x32xf32> -> vector<16x32xf32>
    %c0_53 = arith.constant 0 : index
    %c0_54 = arith.constant 0 : index
    %c0_55 = arith.constant 0 : index
    %144 = vector.load %arg8[%c0_53, %c0_54, %c0_55] : memref<2x1x32xf32, #tpu.memory_space<vmem>>, vector<1x1x32xf32>
    %145 = vector.shape_cast %144 : vector<1x1x32xf32> to vector<1x32xf32>
    %146 = vector.broadcast %145 : vector<1x32xf32> to vector<16x32xf32>
    %147 = arith.addf %143, %146 : vector<16x32xf32>
    %148 = arith.addf %120, %147 : vector<16x32xf32>
    %149 = arith.addf %148, %0 : vector<16x32xf32>
    %c1 = arith.constant 1 : index
    %c0_56 = arith.constant 0 : index
    %c0_57 = arith.constant 0 : index
    %150 = vector.load %arg1[%c1, %c0_56, %c0_57] : memref<2x1x32xf32, #tpu.memory_space<vmem>>, vector<1x1x32xf32>
    %151 = vector.shape_cast %150 : vector<1x1x32xf32> to vector<1x32xf32>
    %c1_58 = arith.constant 1 : index
    %c0_59 = arith.constant 0 : index
    %c0_60 = arith.constant 0 : index
    %152 = vector.load %arg2[%c1_58, %c0_59, %c0_60] : memref<2x1x32xf32, #tpu.memory_space<vmem>>, vector<1x1x32xf32>
    %153 = vector.shape_cast %152 : vector<1x1x32xf32> to vector<1x32xf32>
    %cst_61 = arith.constant dense<0.000000e+00> : vector<16xf32>
    %154 = vector.multi_reduction <add>, %149, %cst_61 [1] : vector<16x32xf32> to vector<16xf32>
    %155 = vector.shape_cast %154 : vector<16xf32> to vector<16x1xf32>
    %cst_62 = arith.constant 3.200000e+01 : f32
    %156 = vector.broadcast %cst_62 : f32 to vector<16x1xf32>
    %157 = arith.divf %155, %156 : vector<16x1xf32>
    %158 = vector.broadcast %157 : vector<16x1xf32> to vector<16x32xf32>
    %159 = arith.subf %149, %158 : vector<16x32xf32>
    %160 = arith.mulf %159, %159 : vector<16x32xf32>
    %cst_63 = arith.constant dense<0.000000e+00> : vector<16xf32>
    %161 = vector.multi_reduction <add>, %160, %cst_63 [1] : vector<16x32xf32> to vector<16xf32>
    %162 = vector.shape_cast %161 : vector<16xf32> to vector<16x1xf32>
    %cst_64 = arith.constant 3.200000e+01 : f32
    %163 = vector.broadcast %cst_64 : f32 to vector<16x1xf32>
    %164 = arith.divf %162, %163 : vector<16x1xf32>
    %165 = vector.broadcast %157 : vector<16x1xf32> to vector<16x32xf32>
    %166 = arith.subf %149, %165 : vector<16x32xf32>
    %cst_65 = arith.constant 9.99999974E-6 : f32
    %167 = vector.broadcast %cst_65 : f32 to vector<16x1xf32>
    %168 = arith.addf %164, %167 : vector<16x1xf32>
    %169 = math.rsqrt %168 : vector<16x1xf32>
    %170 = vector.broadcast %169 : vector<16x1xf32> to vector<16x32xf32>
    %171 = arith.mulf %166, %170 : vector<16x32xf32>
    %172 = vector.broadcast %151 : vector<1x32xf32> to vector<16x32xf32>
    %173 = arith.mulf %171, %172 : vector<16x32xf32>
    %174 = vector.broadcast %153 : vector<1x32xf32> to vector<16x32xf32>
    %175 = arith.addf %173, %174 : vector<16x32xf32>
    %c1_66 = arith.constant 1 : index
    %c0_67 = arith.constant 0 : index
    %c0_68 = arith.constant 0 : index
    %176 = vector.load %arg3[%c1_66, %c0_67, %c0_68] : memref<2x32x96xf32, #tpu.memory_space<vmem>>, vector<1x32x96xf32>
    %177 = vector.shape_cast %176 : vector<1x32x96xf32> to vector<32x96xf32>
    %cst_69 = arith.constant dense<0.000000e+00> : vector<16x96xf32>
    %178 = tpu.matmul %175, %177, %cst_69 {dimension_numbers = #tpu.dot_dimension_numbers<[1], [0], [0], [1], [0, 0, 1, 1], [], []>} : vector<16x32xf32>, vector<32x96xf32>, vector<16x96xf32> -> vector<16x96xf32>
    %179 = vector.extract_strided_slice %178 {offsets = [0, 0], sizes = [16, 32], strides = [1, 1]} : vector<16x96xf32> to vector<16x32xf32>
    %180 = vector.extract_strided_slice %178 {offsets = [0, 32], sizes = [16, 32], strides = [1, 1]} : vector<16x96xf32> to vector<16x32xf32>
    %181 = vector.extract_strided_slice %178 {offsets = [0, 64], sizes = [16, 32], strides = [1, 1]} : vector<16x96xf32> to vector<16x32xf32>
    %182 = arith.mulf %179, %1 : vector<16x32xf32>
    %cst_70 = arith.constant dense<0.000000e+00> : vector<16x32xf32>
    %183 = tpu.matmul %179, %3, %cst_70 {dimension_numbers = #tpu.dot_dimension_numbers<[1], [0], [0], [1], [0, 0, 1, 1], [], []>} : vector<16x32xf32>, vector<32x32xf32>, vector<16x32xf32> -> vector<16x32xf32>
    %184 = arith.mulf %183, %2 : vector<16x32xf32>
    %185 = arith.addf %182, %184 : vector<16x32xf32>
    %186 = arith.mulf %180, %1 : vector<16x32xf32>
    %cst_71 = arith.constant dense<0.000000e+00> : vector<16x32xf32>
    %187 = tpu.matmul %180, %3, %cst_71 {dimension_numbers = #tpu.dot_dimension_numbers<[1], [0], [0], [1], [0, 0, 1, 1], [], []>} : vector<16x32xf32>, vector<32x32xf32>, vector<16x32xf32> -> vector<16x32xf32>
    %188 = arith.mulf %187, %2 : vector<16x32xf32>
    %189 = arith.addf %186, %188 : vector<16x32xf32>
    %190 = vector.shape_cast %185 : vector<16x32xf32> to vector<2x8x32xf32>
    %191 = vector.shape_cast %189 : vector<16x32xf32> to vector<2x8x32xf32>
    %192 = vector.shape_cast %181 : vector<16x32xf32> to vector<2x8x32xf32>
    %193 = vector.extract_strided_slice %4 {offsets = [0, 0], sizes = [1, 32], strides = [1, 1]} : vector<4x32xf32> to vector<1x32xf32>
    %194 = vector.shape_cast %193 : vector<1x32xf32> to vector<32xf32>
    %195 = vector.shape_cast %194 : vector<32xf32> to vector<1x1x32xf32>
    %196 = vector.broadcast %195 : vector<1x1x32xf32> to vector<2x8x32xf32>
    %197 = arith.mulf %190, %196 : vector<2x8x32xf32>
    %198 = vector.extract_strided_slice %4 {offsets = [1, 0], sizes = [1, 32], strides = [1, 1]} : vector<4x32xf32> to vector<1x32xf32>
    %199 = vector.shape_cast %198 : vector<1x32xf32> to vector<32xf32>
    %200 = vector.shape_cast %199 : vector<32xf32> to vector<1x1x32xf32>
    %201 = vector.broadcast %200 : vector<1x1x32xf32> to vector<2x8x32xf32>
    %202 = arith.mulf %190, %201 : vector<2x8x32xf32>
    %203 = vector.extract_strided_slice %4 {offsets = [2, 0], sizes = [1, 32], strides = [1, 1]} : vector<4x32xf32> to vector<1x32xf32>
    %204 = vector.shape_cast %203 : vector<1x32xf32> to vector<32xf32>
    %205 = vector.shape_cast %204 : vector<32xf32> to vector<1x1x32xf32>
    %206 = vector.broadcast %205 : vector<1x1x32xf32> to vector<2x8x32xf32>
    %207 = arith.mulf %190, %206 : vector<2x8x32xf32>
    %208 = vector.extract_strided_slice %4 {offsets = [3, 0], sizes = [1, 32], strides = [1, 1]} : vector<4x32xf32> to vector<1x32xf32>
    %209 = vector.shape_cast %208 : vector<1x32xf32> to vector<32xf32>
    %210 = vector.shape_cast %209 : vector<32xf32> to vector<1x1x32xf32>
    %211 = vector.broadcast %210 : vector<1x1x32xf32> to vector<2x8x32xf32>
    %212 = arith.mulf %190, %211 : vector<2x8x32xf32>
    %213 = tpu.concatenate %197, %202, %207, %212 in 1 : vector<2x8x32xf32>, vector<2x8x32xf32>, vector<2x8x32xf32>, vector<2x8x32xf32> -> vector<2x32x32xf32>
    %cst_72 = arith.constant dense<0.000000e+00> : vector<2x32x8xf32>
    %214 = tpu.matmul %213, %191, %cst_72 {dimension_numbers = #tpu.dot_dimension_numbers<[2], [2], [1], [1], [0, 0, 0, 1, 1, 1], [0], [0]>} : vector<2x32x32xf32>, vector<2x8x32xf32>, vector<2x32x8xf32> -> vector<2x32x8xf32>
    %cst_73 = arith.constant -3.40282347E+38 : f32
    %215 = vector.shape_cast %7 : vector<32x8xi1> to vector<1x32x8xi1>
    %216 = vector.broadcast %215 : vector<1x32x8xi1> to vector<2x32x8xi1>
    %217 = vector.broadcast %cst_73 : f32 to vector<2x32x8xf32>
    %218 = arith.select %216, %214, %217 : vector<2x32x8xi1>, vector<2x32x8xf32>
    %cst_74 = arith.constant 0.353553385 : f32
    %219 = vector.broadcast %cst_74 : f32 to vector<2x32x8xf32>
    %220 = arith.mulf %218, %219 : vector<2x32x8xf32>
    %cst_75 = arith.constant dense<0xFF800000> : vector<2x32xf32>
    %221 = vector.multi_reduction <maximumf>, %220, %cst_75 [2] : vector<2x32x8xf32> to vector<2x32xf32>
    %222 = vector.shape_cast %221 : vector<2x32xf32> to vector<2x32x1xf32>
    %223 = vector.broadcast %222 : vector<2x32x1xf32> to vector<2x32x8xf32>
    %224 = arith.subf %220, %223 : vector<2x32x8xf32>
    %225 = math.exp %224 : vector<2x32x8xf32>
    %cst_76 = arith.constant dense<0.000000e+00> : vector<2x32xf32>
    %226 = vector.multi_reduction <add>, %225, %cst_76 [2] : vector<2x32x8xf32> to vector<2x32xf32>
    %227 = vector.shape_cast %226 : vector<2x32xf32> to vector<2x32x1xf32>
    %228 = tpu.reciprocal %227 {approx = true} : vector<2x32x1xf32> -> vector<2x32x1xf32>
    %229 = vector.broadcast %228 : vector<2x32x1xf32> to vector<2x32x8xf32>
    %230 = arith.mulf %225, %229 : vector<2x32x8xf32>
    %cst_77 = arith.constant dense<0.000000e+00> : vector<2x32x32xf32>
    %231 = tpu.matmul %230, %192, %cst_77 {dimension_numbers = #tpu.dot_dimension_numbers<[2], [1], [1], [2], [0, 0, 0, 1, 1, 2], [0], [0]>} : vector<2x32x8xf32>, vector<2x8x32xf32>, vector<2x32x32xf32> -> vector<2x32x32xf32>
    %232 = vector.extract_strided_slice %231 {offsets = [0, 0, 0], sizes = [2, 8, 32], strides = [1, 1, 1]} : vector<2x32x32xf32> to vector<2x8x32xf32>
    %233 = vector.extract_strided_slice %4 {offsets = [0, 0], sizes = [1, 32], strides = [1, 1]} : vector<4x32xf32> to vector<1x32xf32>
    %234 = vector.shape_cast %233 : vector<1x32xf32> to vector<32xf32>
    %235 = vector.shape_cast %234 : vector<32xf32> to vector<1x1x32xf32>
    %236 = vector.broadcast %235 : vector<1x1x32xf32> to vector<2x8x32xf32>
    %237 = arith.mulf %232, %236 : vector<2x8x32xf32>
    %238 = vector.extract_strided_slice %231 {offsets = [0, 8, 0], sizes = [2, 8, 32], strides = [1, 1, 1]} : vector<2x32x32xf32> to vector<2x8x32xf32>
    %239 = vector.extract_strided_slice %4 {offsets = [1, 0], sizes = [1, 32], strides = [1, 1]} : vector<4x32xf32> to vector<1x32xf32>
    %240 = vector.shape_cast %239 : vector<1x32xf32> to vector<32xf32>
    %241 = vector.shape_cast %240 : vector<32xf32> to vector<1x1x32xf32>
    %242 = vector.broadcast %241 : vector<1x1x32xf32> to vector<2x8x32xf32>
    %243 = arith.mulf %238, %242 : vector<2x8x32xf32>
    %244 = arith.addf %237, %243 : vector<2x8x32xf32>
    %245 = vector.extract_strided_slice %231 {offsets = [0, 16, 0], sizes = [2, 8, 32], strides = [1, 1, 1]} : vector<2x32x32xf32> to vector<2x8x32xf32>
    %246 = vector.extract_strided_slice %4 {offsets = [2, 0], sizes = [1, 32], strides = [1, 1]} : vector<4x32xf32> to vector<1x32xf32>
    %247 = vector.shape_cast %246 : vector<1x32xf32> to vector<32xf32>
    %248 = vector.shape_cast %247 : vector<32xf32> to vector<1x1x32xf32>
    %249 = vector.broadcast %248 : vector<1x1x32xf32> to vector<2x8x32xf32>
    %250 = arith.mulf %245, %249 : vector<2x8x32xf32>
    %251 = arith.addf %244, %250 : vector<2x8x32xf32>
    %252 = vector.extract_strided_slice %231 {offsets = [0, 24, 0], sizes = [2, 8, 32], strides = [1, 1, 1]} : vector<2x32x32xf32> to vector<2x8x32xf32>
    %253 = vector.extract_strided_slice %4 {offsets = [3, 0], sizes = [1, 32], strides = [1, 1]} : vector<4x32xf32> to vector<1x32xf32>
    %254 = vector.shape_cast %253 : vector<1x32xf32> to vector<32xf32>
    %255 = vector.shape_cast %254 : vector<32xf32> to vector<1x1x32xf32>
    %256 = vector.broadcast %255 : vector<1x1x32xf32> to vector<2x8x32xf32>
    %257 = arith.mulf %252, %256 : vector<2x8x32xf32>
    %258 = arith.addf %251, %257 : vector<2x8x32xf32>
    %259 = vector.shape_cast %258 : vector<2x8x32xf32> to vector<16x32xf32>
    %c1_78 = arith.constant 1 : index
    %c0_79 = arith.constant 0 : index
    %c0_80 = arith.constant 0 : index
    %260 = vector.load %arg4[%c1_78, %c0_79, %c0_80] : memref<2x32x32xf32, #tpu.memory_space<vmem>>, vector<1x32x32xf32>
    %261 = vector.shape_cast %260 : vector<1x32x32xf32> to vector<32x32xf32>
    %cst_81 = arith.constant dense<0.000000e+00> : vector<16x32xf32>
    %262 = tpu.matmul %259, %261, %cst_81 {dimension_numbers = #tpu.dot_dimension_numbers<[1], [0], [0], [1], [0, 0, 1, 1], [], []>} : vector<16x32xf32>, vector<32x32xf32>, vector<16x32xf32> -> vector<16x32xf32>
    %c1_82 = arith.constant 1 : index
    %c0_83 = arith.constant 0 : index
    %c0_84 = arith.constant 0 : index
    %263 = vector.load %arg5[%c1_82, %c0_83, %c0_84] : memref<2x32x128xf32, #tpu.memory_space<vmem>>, vector<1x32x128xf32>
    %264 = vector.shape_cast %263 : vector<1x32x128xf32> to vector<32x128xf32>
    %cst_85 = arith.constant dense<0.000000e+00> : vector<16x128xf32>
    %265 = tpu.matmul %175, %264, %cst_85 {dimension_numbers = #tpu.dot_dimension_numbers<[1], [0], [0], [1], [0, 0, 1, 1], [], []>} : vector<16x32xf32>, vector<32x128xf32>, vector<16x128xf32> -> vector<16x128xf32>
    %c1_86 = arith.constant 1 : index
    %c0_87 = arith.constant 0 : index
    %c0_88 = arith.constant 0 : index
    %266 = vector.load %arg6[%c1_86, %c0_87, %c0_88] : memref<2x1x128xf32, #tpu.memory_space<vmem>>, vector<1x1x128xf32>
    %267 = vector.shape_cast %266 : vector<1x1x128xf32> to vector<1x128xf32>
    %268 = vector.broadcast %267 : vector<1x128xf32> to vector<16x128xf32>
    %269 = arith.addf %265, %268 : vector<16x128xf32>
    %cst_89 = arith.constant 5.000000e-01 : f32
    %270 = vector.broadcast %cst_89 : f32 to vector<16x128xf32>
    %271 = arith.mulf %270, %269 : vector<16x128xf32>
    %cst_90 = arith.constant 4.471500e-02 : f32
    %272 = vector.broadcast %cst_90 : f32 to vector<16x128xf32>
    %273 = arith.mulf %272, %269 : vector<16x128xf32>
    %274 = arith.mulf %273, %269 : vector<16x128xf32>
    %275 = arith.mulf %274, %269 : vector<16x128xf32>
    %276 = arith.addf %269, %275 : vector<16x128xf32>
    %cst_91 = arith.constant 0.797884583 : f32
    %277 = vector.broadcast %cst_91 : f32 to vector<16x128xf32>
    %278 = arith.mulf %277, %276 : vector<16x128xf32>
    %279 = math.tanh %278 : vector<16x128xf32>
    %cst_92 = arith.constant 1.000000e+00 : f32
    %280 = vector.broadcast %cst_92 : f32 to vector<16x128xf32>
    %281 = arith.addf %280, %279 : vector<16x128xf32>
    %282 = arith.mulf %271, %281 : vector<16x128xf32>
    %c1_93 = arith.constant 1 : index
    %c0_94 = arith.constant 0 : index
    %c0_95 = arith.constant 0 : index
    %283 = vector.load %arg7[%c1_93, %c0_94, %c0_95] : memref<2x128x32xf32, #tpu.memory_space<vmem>>, vector<1x128x32xf32>
    %284 = vector.shape_cast %283 : vector<1x128x32xf32> to vector<128x32xf32>
    %cst_96 = arith.constant dense<0.000000e+00> : vector<16x32xf32>
    %285 = tpu.matmul %282, %284, %cst_96 {dimension_numbers = #tpu.dot_dimension_numbers<[1], [0], [0], [1], [0, 0, 1, 1], [], []>} : vector<16x128xf32>, vector<128x32xf32>, vector<16x32xf32> -> vector<16x32xf32>
    %c1_97 = arith.constant 1 : index
    %c0_98 = arith.constant 0 : index
    %c0_99 = arith.constant 0 : index
    %286 = vector.load %arg8[%c1_97, %c0_98, %c0_99] : memref<2x1x32xf32, #tpu.memory_space<vmem>>, vector<1x1x32xf32>
    %287 = vector.shape_cast %286 : vector<1x1x32xf32> to vector<1x32xf32>
    %288 = vector.broadcast %287 : vector<1x32xf32> to vector<16x32xf32>
    %289 = arith.addf %285, %288 : vector<16x32xf32>
    %290 = arith.addf %262, %289 : vector<16x32xf32>
    %291 = arith.addf %290, %149 : vector<16x32xf32>
    %c0_100 = arith.constant 0 : index
    %c0_101 = arith.constant 0 : index
    %292 = vector.load %arg14[%c0_100, %c0_101] : memref<1x32xf32, #tpu.memory_space<vmem>>, vector<1x32xf32>
    %c0_102 = arith.constant 0 : index
    %c0_103 = arith.constant 0 : index
    %293 = vector.load %arg15[%c0_102, %c0_103] : memref<1x32xf32, #tpu.memory_space<vmem>>, vector<1x32xf32>
    %cst_104 = arith.constant dense<0.000000e+00> : vector<16xf32>
    %294 = vector.multi_reduction <add>, %291, %cst_104 [1] : vector<16x32xf32> to vector<16xf32>
    %295 = vector.shape_cast %294 : vector<16xf32> to vector<16x1xf32>
    %cst_105 = arith.constant 3.200000e+01 : f32
    %296 = vector.broadcast %cst_105 : f32 to vector<16x1xf32>
    %297 = arith.divf %295, %296 : vector<16x1xf32>
    %298 = vector.broadcast %297 : vector<16x1xf32> to vector<16x32xf32>
    %299 = arith.subf %291, %298 : vector<16x32xf32>
    %300 = arith.mulf %299, %299 : vector<16x32xf32>
    %cst_106 = arith.constant dense<0.000000e+00> : vector<16xf32>
    %301 = vector.multi_reduction <add>, %300, %cst_106 [1] : vector<16x32xf32> to vector<16xf32>
    %302 = vector.shape_cast %301 : vector<16xf32> to vector<16x1xf32>
    %cst_107 = arith.constant 3.200000e+01 : f32
    %303 = vector.broadcast %cst_107 : f32 to vector<16x1xf32>
    %304 = arith.divf %302, %303 : vector<16x1xf32>
    %305 = vector.broadcast %297 : vector<16x1xf32> to vector<16x32xf32>
    %306 = arith.subf %291, %305 : vector<16x32xf32>
    %cst_108 = arith.constant 9.99999974E-6 : f32
    %307 = vector.broadcast %cst_108 : f32 to vector<16x1xf32>
    %308 = arith.addf %304, %307 : vector<16x1xf32>
    %309 = math.rsqrt %308 : vector<16x1xf32>
    %310 = vector.broadcast %309 : vector<16x1xf32> to vector<16x32xf32>
    %311 = arith.mulf %306, %310 : vector<16x32xf32>
    %312 = vector.broadcast %292 : vector<1x32xf32> to vector<16x32xf32>
    %313 = arith.mulf %311, %312 : vector<16x32xf32>
    %314 = vector.broadcast %293 : vector<1x32xf32> to vector<16x32xf32>
    %315 = arith.addf %313, %314 : vector<16x32xf32>
    %c0_109 = arith.constant 0 : index
    %c0_110 = arith.constant 0 : index
    %316 = vector.load %arg16[%c0_109, %c0_110] : memref<32x128xf32, #tpu.memory_space<vmem>>, vector<32x128xf32>
    %cst_111 = arith.constant dense<0.000000e+00> : vector<16x128xf32>
    %317 = tpu.matmul %315, %316, %cst_111 {dimension_numbers = #tpu.dot_dimension_numbers<[1], [0], [0], [1], [0, 0, 1, 1], [], []>} : vector<16x32xf32>, vector<32x128xf32>, vector<16x128xf32> -> vector<16x128xf32>
    %c0_112 = arith.constant 0 : index
    %c0_113 = arith.constant 0 : index
    %318 = vector.load %arg17[%c0_112, %c0_113] : memref<1x128xf32, #tpu.memory_space<vmem>>, vector<1x128xf32>
    %319 = vector.broadcast %318 : vector<1x128xf32> to vector<16x128xf32>
    %320 = arith.addf %317, %319 : vector<16x128xf32>
    %c0_114 = arith.constant 0 : index
    %c0_115 = arith.constant 0 : index
    %321 = vector.load %arg18[%c0_114, %c0_115] : memref<16x128xf32, #tpu.memory_space<vmem>>, vector<16x128xf32>
    tpu.vector_store %arg18[%c0_114, %c0_115], %320 {strides = array<i32>} : memref<16x128xf32, #tpu.memory_space<vmem>>, vector<16x128xf32>,
    return
  }
}

</mosaic_0001>

<llo_original>
// kernel: gptj_top_forward.1
$region0: #{gptj_top_forward.1}
  #allocation0 [shape = 'u32[]', space=smem, size = 0x4, offset = 0x4, fixed_abs, tag = 'smem constant byte address 0x4 - core index']
  #allocation1 [shape = 'u32[144,128]{1,0:T(1,128)}', space=vmem, size = 0x12000, scoped, tag = 'internal scratch']
  %s0 = inlined_call_operand.vmem [shape: f32[16,32], index: 0, kind: input, shape index: {}]
  %s1 = inlined_call_operand.vmem [shape: f32[2,1,32], index: 1, kind: input, shape index: {}]
  %s2 = inlined_call_operand.vmem [shape: f32[2,1,32], index: 2, kind: input, shape index: {}]
  %s3 = inlined_call_operand.vmem [shape: f32[2,32,96], index: 3, kind: input, shape index: {}]
  %s4 = inlined_call_operand.vmem [shape: f32[2,32,32], index: 4, kind: input, shape index: {}]
  %s5 = inlined_call_operand.vmem [shape: f32[2,32,128], index: 5, kind: input, shape index: {}]
  %s6 = inlined_call_operand.vmem [shape: f32[2,1,128], index: 6, kind: input, shape index: {}]
  %s7 = inlined_call_operand.vmem [shape: f32[2,128,32], index: 7, kind: input, shape index: {}]
  %s8 = inlined_call_operand.vmem [shape: f32[2,1,32], index: 8, kind: input, shape index: {}]
  %s9 = inlined_call_operand.vmem [shape: f32[16,32], index: 9, kind: input, shape index: {}]
  %s10 = inlined_call_operand.vmem [shape: f32[16,32], index: 10, kind: input, shape index: {}]
  %s11 = inlined_call_operand.vmem [shape: f32[32,32], index: 11, kind: input, shape index: {}]
  %s12 = inlined_call_operand.vmem [shape: f32[4,32], index: 12, kind: input, shape index: {}]
  %s13 = inlined_call_operand.vmem [shape: f32[32,8], index: 13, kind: input, shape index: {}]
  %s14 = inlined_call_operand.vmem [shape: f32[1,32], index: 14, kind: input, shape index: {}]
  %s15 = inlined_call_operand.vmem [shape: f32[1,32], index: 15, kind: input, shape index: {}]
  %s16 = inlined_call_operand.vmem [shape: f32[32,128], index: 16, kind: input, shape index: {}]
  %s17 = inlined_call_operand.vmem [shape: f32[1,128], index: 17, kind: input, shape index: {}]
  %s18 = inlined_call_operand.vmem [shape: f32[16,128], index: 18, kind: output, shape index: {}]
  %s19 = sld [smem:[#allocation0]]
  $region82: #{gptj_top_forward.1} parent=0
    _
  %s21 = ssub.s32 1, %s19
  %s22 = scalar_select 0, %s21, %s19
  // Predicated region
  $region2: #{gptj_top_forward.1} parent=0 // pred_check
    _
  $region3: #{gptj_top_forward.1} parent=0 // pred_check_branch
    %24 = sbr.rel (0) target = $region5
  $region4: #{gptj_top_forward.1} parent=0 // pred_region
    _
  $region5: #{gptj_top_forward.1} parent=0 // pred_fallthru
    _
  // Predicated region
  $region6: #{gptj_top_forward.1} parent=0 // pred_check
    _
  $region7: #{gptj_top_forward.1} parent=0 // pred_check_branch
    %26 = sbr.rel (0) target = $region9
  $region8: #{gptj_top_forward.1} parent=0 // pred_region
    _
  $region9: #{gptj_top_forward.1} parent=0 // pred_fallthru
    _
  // Predicated region
  $region10: #{gptj_top_forward.1} parent=0 // pred_check
    _
  $region11: #{gptj_top_forward.1} parent=0 // pred_check_branch
    %28 = sbr.rel (0) target = $region13
  $region12: #{gptj_top_forward.1} parent=0 // pred_region
    _
  $region13: #{gptj_top_forward.1} parent=0 // pred_fallthru
    _
  // Predicated region
  $region14: #{gptj_top_forward.1} parent=0 // pred_check
    _
  $region15: #{gptj_top_forward.1} parent=0 // pred_check_branch
    %30 = sbr.rel (0) target = $region17
  $region16: #{gptj_top_forward.1} parent=0 // pred_region
    _
  $region17: #{gptj_top_forward.1} parent=0 // pred_fallthru
    _
  // Predicated region
  $region18: #{gptj_top_forward.1} parent=0 // pred_check
    _
  $region19: #{gptj_top_forward.1} parent=0 // pred_check_branch
    %32 = sbr.rel (0) target = $region21
  $region20: #{gptj_top_forward.1} parent=0 // pred_region
    _
  $region21: #{gptj_top_forward.1} parent=0 // pred_fallthru
    _
  // Predicated region
  $region22: #{gptj_top_forward.1} parent=0 // pred_check
    _
  $region23: #{gptj_top_forward.1} parent=0 // pred_check_branch
    %34 = sbr.rel (0) target = $region25
  $region24: #{gptj_top_forward.1} parent=0 // pred_region
    _
  $region25: #{gptj_top_forward.1} parent=0 // pred_fallthru
    _
  // Predicated region
  $region26: #{gptj_top_forward.1} parent=0 // pred_check
    _
  $region27: #{gptj_top_forward.1} parent=0 // pred_check_branch
    %36 = sbr.rel (0) target = $region29
  $region28: #{gptj_top_forward.1} parent=0 // pred_region
    _
  $region29: #{gptj_top_forward.1} parent=0 // pred_fallthru
    _
  // Predicated region
  $region30: #{gptj_top_forward.1} parent=0 // pred_check
    _
  $region31: #{gptj_top_forward.1} parent=0 // pred_check_branch
    %38 = sbr.rel (0) target = $region33
  $region32: #{gptj_top_forward.1} parent=0 // pred_region
    _
  $region33: #{gptj_top_forward.1} parent=0 // pred_fallthru
    _
  // Predicated region
  $region34: #{gptj_top_forward.1} parent=0 // pred_check
    _
  $region35: #{gptj_top_forward.1} parent=0 // pred_check_branch
    %40 = sbr.rel (0) target = $region37
  $region36: #{gptj_top_forward.1} parent=0 // pred_region
    _
  $region37: #{gptj_top_forward.1} parent=0 // pred_fallthru
    _
  // Predicated region
  $region38: #{gptj_top_forward.1} parent=0 // pred_check
    _
  $region39: #{gptj_top_forward.1} parent=0 // pred_check_branch
    %42 = sbr.rel (0) target = $region41
  $region40: #{gptj_top_forward.1} parent=0 // pred_region
    _
  $region41: #{gptj_top_forward.1} parent=0 // pred_fallthru
    _
  // Predicated region
  $region42: #{gptj_top_forward.1} parent=0 // pred_check
    _
  $region43: #{gptj_top_forward.1} parent=0 // pred_check_branch
    %44 = sbr.rel (0) target = $region45
  $region44: #{gptj_top_forward.1} parent=0 // pred_region
    _
  $region45: #{gptj_top_forward.1} parent=0 // pred_fallthru
    _
  // Predicated region
  $region46: #{gptj_top_forward.1} parent=0 // pred_check
    _
  $region47: #{gptj_top_forward.1} parent=0 // pred_check_branch
    %46 = sbr.rel (0) target = $region49
  $region48: #{gptj_top_forward.1} parent=0 // pred_region
    _
  $region49: #{gptj_top_forward.1} parent=0 // pred_fallthru
    _
  // Predicated region
  $region50: #{gptj_top_forward.1} parent=0 // pred_check
    _
  $region51: #{gptj_top_forward.1} parent=0 // pred_check_branch
    %48 = sbr.rel (0) target = $region53
  $region52: #{gptj_top_forward.1} parent=0 // pred_region
    _
  $region53: #{gptj_top_forward.1} parent=0 // pred_fallthru
    _
  // Predicated region
  $region54: #{gptj_top_forward.1} parent=0 // pred_check
    _
  $region55: #{gptj_top_forward.1} parent=0 // pred_check_branch
    %50 = sbr.rel (0) target = $region57
  $region56: #{gptj_top_forward.1} parent=0 // pred_region
    _
  $region57: #{gptj_top_forward.1} parent=0 // pred_fallthru
    _
  // Predicated region
  $region58: #{gptj_top_forward.1} parent=0 // pred_check
    _
  $region59: #{gptj_top_forward.1} parent=0 // pred_check_branch
    %52 = sbr.rel (0) target = $region61
  $region60: #{gptj_top_forward.1} parent=0 // pred_region
    _
  $region61: #{gptj_top_forward.1} parent=0 // pred_fallthru
    _
  // Predicated region
  $region62: #{gptj_top_forward.1} parent=0 // pred_check
    _
  $region63: #{gptj_top_forward.1} parent=0 // pred_check_branch
    %54 = sbr.rel (0) target = $region65
  $region64: #{gptj_top_forward.1} parent=0 // pred_region
    _
  $region65: #{gptj_top_forward.1} parent=0 // pred_fallthru
    _
  // Predicated region
  $region66: #{gptj_top_forward.1} parent=0 // pred_check
    _
  $region67: #{gptj_top_forward.1} parent=0 // pred_check_branch
    %56 = sbr.rel (0) target = $region69
  $region68: #{gptj_top_forward.1} parent=0 // pred_region
    _
  $region69: #{gptj_top_forward.1} parent=0 // pred_fallthru
    _
  // Predicated region
  $region70: #{gptj_top_forward.1} parent=0 // pred_check
    _
  $region71: #{gptj_top_forward.1} parent=0 // pred_check_branch
    %58 = sbr.rel (0) target = $region73
  $region72: #{gptj_top_forward.1} parent=0 // pred_region
    _
  $region73: #{gptj_top_forward.1} parent=0 // pred_fallthru
    _
  %v59 = vld [vmem:[%s0] sm:$0xff]
  %v60 = vld [vmem:[%s0 + $0x8] sm:$0xff]
  %v61 = vld [vmem:[%s9] sm:$0xff]
  %v62 = vld [vmem:[%s9 + $0x8] sm:$0xff]
  %v63 = vld [vmem:[%s10] sm:$0xff]
  %v64 = vld [vmem:[%s10 + $0x8] sm:$0xff]
  %v65 = vld [vmem:[%s11] sm:$0xff]
  %v66 = vld [vmem:[%s11 + $0x8] sm:$0xff]
  %v67 = vld [vmem:[%s11 + $0x10] sm:$0xff]
  %v68 = vld [vmem:[%s11 + $0x18] sm:$0xff]
  %v69 = vld [vmem:[%s12] sm:$0xf]
  %v70 = vld [vmem:[%s13] sm:$0xff]
  %v71 = vld [vmem:[%s13 + $0x8] sm:$0xff]
  %v72 = vld [vmem:[%s13 + $0x10] sm:$0xff]
  %v73 = vld [vmem:[%s13 + $0x18] sm:$0xff]
  %vm74 = vcmp.gt.f32.partialorder %v70, 0.5
  %vm75 = vcmp.gt.f32.partialorder %v71, 0.5
  %vm76 = vcmp.gt.f32.partialorder %v72, 0.5
  %vm77 = vcmp.gt.f32.partialorder %v73, 0.5
  %v78 = vld [vmem:[%s1] sm:$0x1]
  %v79 = vld [vmem:[%s2] sm:$0x1]
  %vm80 = vcmask 261120
  %v81 = vsel %vm80, %v59, 0.0
  %82 = vadd.xlane.f32.xlu0 %v81
  %v83 = vpop.xlane.xlu0 %82
  %v84 = vsel %vm80, %v60, 0.0
  %85 = vadd.xlane.f32.xlu0 %v84
  %v86 = vpop.xlane.xlu0 %85
  %v87 = vrcp.pop 32.0
  %v88 = vmul.f32 %v83, %v87
  %v89 = vmul.f32 %v86, %v87
  %v90 = vsub.f32 %v59, %v88
  %v91 = vsub.f32 %v60, %v89
  %v92 = vmul.f32 %v90, %v90
  %v93 = vmul.f32 %v91, %v91
  %v94 = vsel %vm80, %v92, 0.0
  %95 = vadd.xlane.f32.xlu0 %v94
  %v96 = vpop.xlane.xlu0 %95
  %v97 = vsel %vm80, %v93, 0.0
  %98 = vadd.xlane.f32.xlu0 %v97
  %v99 = vpop.xlane.xlu0 %98
  %v100 = vmul.f32 %v96, %v87
  %v101 = vmul.f32 %v99, %v87
  %v102 = vadd.f32 %v100, 1e-05
  %v103 = vadd.f32 %v101, 1e-05
  %v104 = vrsqrt.pop %v102
  %v105 = vrsqrt.pop %v103
  %v106 = vmul.f32 %v90, %v104
  %v107 = vmul.f32 %v91, %v105
  %v109 = vlaneseq
  %v110 = vshrl.u32 %v109, 7
  %v111 = vsub.s32 0, %v110
  %v112 = vrot.slane %v78, %v111
  %v114 = vmul.f32 %v106, %v112
  %v115 = vmul.f32 %v107, %v112
  %v117 = vlaneseq
  %v118 = vshrl.u32 %v117, 7
  %v119 = vsub.s32 0, %v118
  %v120 = vrot.slane %v79, %v119
  %v122 = vadd.f32 %v114, %v120
  %v123 = vadd.f32 %v115, %v120
  %v124 = vld [vmem:[%s3] sm:$0xff]
  %v125 = vld [vmem:[%s3 + $0x8] sm:$0xff]
  %v126 = vld [vmem:[%s3 + $0x10] sm:$0xff]
  %v127 = vld [vmem:[%s3 + $0x18] sm:$0xff]
  %v129 = vsel %vm80, %v122, 0
  %v132 = vsel %vm80, %v123, 0
  %134 = vmatprep.subr.mxu0 0.0
  %135 = vmatpush1.msra.mxu0 %v124
  %136 = vmatprep.subr.mxu0 0.0
  %137 = vmatpush1.msra.mxu0 %v125
  %138 = vmatprep.subr.mxu0 0.0
  %139 = vmatpush1.msra.mxu0 %v126
  %140 = vmatprep.subr.mxu0 0.0
  %141 = vmatpush1.msra.mxu0 %v127
  %142 = vmatprep.subr.mxu0 0.0
  %143 = vmatpush1.msra.mxu0 0.0
  %144 = vmatprep.subr.mxu0 0.0
  %145 = vmatpush1.msra.mxu0 0.0
  %146 = vmatprep.subr.mxu0 0.0
  %147 = vmatpush1.msra.mxu0 0.0
  %148 = vmatprep.subr.mxu0 0.0
  %149 = vmatpush1.msra.mxu0 0.0
  %150 = vmatprep.subr.mxu0 0.0
  %151 = vmatpush1.msra.mxu0 0.0
  %152 = vmatprep.subr.mxu0 0.0
  %153 = vmatpush1.msra.mxu0 0.0
  %154 = vmatprep.subr.mxu0 0.0
  %155 = vmatpush1.msra.mxu0 0.0
  %156 = vmatprep.subr.mxu0 0.0
  %157 = vmatpush1.msra.mxu0 0.0
  %158 = vmatprep.subr.mxu0 0.0
  %159 = vmatpush1.msra.mxu0 0.0
  %160 = vmatprep.subr.mxu0 0.0
  %161 = vmatpush1.msra.mxu0 0.0
  %162 = vmatprep.subr.mxu0 0.0
  %163 = vmatpush1.msra.mxu0 0.0
  %164 = vmatprep.subr.mxu0 0.0
  %165 = vmatpush1.msra.mxu0 0.0
  %166 = vmatprep.subr.mxu0 0.0
  %167 = vmatpush1.msra.mxu0 0.0
  %168 = vmatprep.subr.mxu0 0.0
  %169 = vmatpush1.msra.mxu0 0.0
  %170 = vmatprep.subr.mxu0 0.0
  %171 = vmatpush1.msra.mxu0 0.0
  %172 = vmatprep.subr.mxu0 0.0
  %173 = vmatpush1.msra.mxu0 0.0
  %174 = vmatprep.subr.mxu0 0.0
  %175 = vmatpush1.msra.mxu0 0.0
  %176 = vmatprep.subr.mxu0 0.0
  %177 = vmatpush1.msra.mxu0 0.0
  %178 = vmatprep.subr.mxu0 0.0
  %179 = vmatpush1.msra.mxu0 0.0
  %180 = vmatprep.subr.mxu0 0.0
  %181 = vmatpush1.msra.mxu0 0.0
  %182 = vmatprep.subr.mxu0 0.0
  %183 = vmatpush1.msra.mxu0 0.0
  %184 = vmatprep.subr.mxu0 0.0
  %185 = vmatpush1.msra.mxu0 0.0
  %186 = vmatprep.subr.mxu0 0.0
  %187 = vmatpush1.msra.mxu0 0.0
  %188 = vmatprep.subr.mxu0 0.0
  %189 = vmatpush1.msra.mxu0 0.0
  %190 = vmatprep.subr.mxu0 0.0
  %191 = vmatpush1.msra.mxu0 0.0
  %192 = vmatprep.subr.mxu0 0.0
  %193 = vmatpush1.msra.mxu0 0.0
  %194 = vmatprep.subr.mxu0 0.0
  %195 = vmatpush1.msra.mxu0 0.0
  %196 = vmatprep.subr.mxu0 0.0
  %197 = vmatpush1.msra.mxu0 0.0
  %198 = vmatprep.mubr.f32.mxu0 0.0
  %199 = vmatmul.mubr.f32.gmra.mrb[0].mxu0 %v129
  %v200 = vpop.f32.mrb[0].mxu0
  %v201 = vadd.f32 0.0, %v200
  %v202 = vpop.f32.mrb[0].mxu0
  %203 = vmatprep.mubr.f32.mxu0 0.0
  %204 = vmatmul.mubr.f32.gmra.mrb[0].mxu0 %v132
  %v205 = vpop.f32.mrb[0].mxu0
  %v206 = vadd.f32 0.0, %v205
  %v207 = vpop.f32.mrb[0].mxu0
  %208 = vdwg.mxu0
  %v209 = vmul.f32 %v201, %v61
  %v210 = vmul.f32 %v206, %v62
  %v212 = vsel %vm80, %v201, 0
  %v215 = vsel %vm80, %v206, 0
  %217 = vmatprep.subr.mxu0 0.0
  %218 = vmatpush1.msra.mxu0 %v65
  %219 = vmatprep.subr.mxu0 0.0
  %220 = vmatpush1.msra.mxu0 %v66
  %221 = vmatprep.subr.mxu0 0.0
  %222 = vmatpush1.msra.mxu0 %v67
  %223 = vmatprep.subr.mxu0 0.0
  %224 = vmatpush1.msra.mxu0 %v68
  %225 = vmatprep.subr.mxu0 0.0
  %226 = vmatpush1.msra.mxu0 0.0
  %227 = vmatprep.subr.mxu0 0.0
  %228 = vmatpush1.msra.mxu0 0.0
  %229 = vmatprep.subr.mxu0 0.0
  %230 = vmatpush1.msra.mxu0 0.0
  %231 = vmatprep.subr.mxu0 0.0
  %232 = vmatpush1.msra.mxu0 0.0
  %233 = vmatprep.subr.mxu0 0.0
  %234 = vmatpush1.msra.mxu0 0.0
  %235 = vmatprep.subr.mxu0 0.0
  %236 = vmatpush1.msra.mxu0 0.0
  %237 = vmatprep.subr.mxu0 0.0
  %238 = vmatpush1.msra.mxu0 0.0
  %239 = vmatprep.subr.mxu0 0.0
  %240 = vmatpush1.msra.mxu0 0.0
  %241 = vmatprep.subr.mxu0 0.0
  %242 = vmatpush1.msra.mxu0 0.0
  %243 = vmatprep.subr.mxu0 0.0
  %244 = vmatpush1.msra.mxu0 0.0
  %245 = vmatprep.subr.mxu0 0.0
  %246 = vmatpush1.msra.mxu0 0.0
  %247 = vmatprep.subr.mxu0 0.0
  %248 = vmatpush1.msra.mxu0 0.0
  %249 = vmatprep.subr.mxu0 0.0
  %250 = vmatpush1.msra.mxu0 0.0
  %251 = vmatprep.subr.mxu0 0.0
  %252 = vmatpush1.msra.mxu0 0.0
  %253 = vmatprep.subr.mxu0 0.0
  %254 = vmatpush1.msra.mxu0 0.0
  %255 = vmatprep.subr.mxu0 0.0
  %256 = vmatpush1.msra.mxu0 0.0
  %257 = vmatprep.subr.mxu0 0.0
  %258 = vmatpush1.msra.mxu0 0.0
  %259 = vmatprep.subr.mxu0 0.0
  %260 = vmatpush1.msra.mxu0 0.0
  %261 = vmatprep.subr.mxu0 0.0
  %262 = vmatpush1.msra.mxu0 0.0
  %263 = vmatprep.subr.mxu0 0.0
  %264 = vmatpush1.msra.mxu0 0.0
  %265 = vmatprep.subr.mxu0 0.0
  %266 = vmatpush1.msra.mxu0 0.0
  %267 = vmatprep.subr.mxu0 0.0
  %268 = vmatpush1.msra.mxu0 0.0
  %269 = vmatprep.subr.mxu0 0.0
  %270 = vmatpush1.msra.mxu0 0.0
  %271 = vmatprep.subr.mxu0 0.0
  %272 = vmatpush1.msra.mxu0 0.0
  %273 = vmatprep.subr.mxu0 0.0
  %274 = vmatpush1.msra.mxu0 0.0
  %275 = vmatprep.subr.mxu0 0.0
  %276 = vmatpush1.msra.mxu0 0.0
  %277 = vmatprep.subr.mxu0 0.0
  %278 = vmatpush1.msra.mxu0 0.0
  %279 = vmatprep.subr.mxu0 0.0
  %280 = vmatpush1.msra.mxu0 0.0
  %281 = vmatprep.mubr.f32.mxu0 0.0
  %282 = vmatmul.mubr.f32.gmra.mrb[0].mxu0 %v212
  %v283 = vpop.f32.mrb[0].mxu0
  %v284 = vadd.f32 0.0, %v283
  %v285 = vpop.f32.mrb[0].mxu0
  %286 = vmatprep.mubr.f32.mxu0 0.0
  %287 = vmatmul.mubr.f32.gmra.mrb[0].mxu0 %v215
  %v288 = vpop.f32.mrb[0].mxu0
  %v289 = vadd.f32 0.0, %v288
  %v290 = vpop.f32.mrb[0].mxu0
  %291 = vdwg.mxu0
  %v292 = vmul.f32 %v284, %v63
  %v293 = vmul.f32 %v289, %v64
  %v294 = vadd.f32 %v209, %v292
  %v295 = vadd.f32 %v210, %v293
  %298 = vrot.lane.b32.xlu0 %v61, 32
  %v299 = vpop.permute.xlu0 %298
  %300 = vrot.lane.b32.xlu0 %v62, 32
  %v301 = vpop.permute.xlu0 %300
  %v304 = vmul.f32 %v201, %v299
  %v305 = vmul.f32 %v206, %v301
  %306 = vrot.lane.b32.xlu0 %v201, 96
  %v307 = vpop.permute.xlu0 %306
  %308 = vrot.lane.b32.xlu0 %v206, 96
  %v309 = vpop.permute.xlu0 %308
  %v310 = vsel %vm80, %v307, 0
  %v312 = vsel %vm80, %v309, 0
  %314 = vmatprep.subr.mxu0 0.0
  %315 = vmatpush1.msra.mxu0 %v65
  %316 = vmatprep.subr.mxu0 0.0
  %317 = vmatpush1.msra.mxu0 %v66
  %318 = vmatprep.subr.mxu0 0.0
  %319 = vmatpush1.msra.mxu0 %v67
  %320 = vmatprep.subr.mxu0 0.0
  %321 = vmatpush1.msra.mxu0 %v68
  %322 = vmatprep.subr.mxu0 0.0
  %323 = vmatpush1.msra.mxu0 0.0
  %324 = vmatprep.subr.mxu0 0.0
  %325 = vmatpush1.msra.mxu0 0.0
  %326 = vmatprep.subr.mxu0 0.0
  %327 = vmatpush1.msra.mxu0 0.0
  %328 = vmatprep.subr.mxu0 0.0
  %329 = vmatpush1.msra.mxu0 0.0
  %330 = vmatprep.subr.mxu0 0.0
  %331 = vmatpush1.msra.mxu0 0.0
  %332 = vmatprep.subr.mxu0 0.0
  %333 = vmatpush1.msra.mxu0 0.0
  %334 = vmatprep.subr.mxu0 0.0
  %335 = vmatpush1.msra.mxu0 0.0
  %336 = vmatprep.subr.mxu0 0.0
  %337 = vmatpush1.msra.mxu0 0.0
  %338 = vmatprep.subr.mxu0 0.0
  %339 = vmatpush1.msra.mxu0 0.0
  %340 = vmatprep.subr.mxu0 0.0
  %341 = vmatpush1.msra.mxu0 0.0
  %342 = vmatprep.subr.mxu0 0.0
  %343 = vmatpush1.msra.mxu0 0.0
  %344 = vmatprep.subr.mxu0 0.0
  %345 = vmatpush1.msra.mxu0 0.0
  %346 = vmatprep.subr.mxu0 0.0
  %347 = vmatpush1.msra.mxu0 0.0
  %348 = vmatprep.subr.mxu0 0.0
  %349 = vmatpush1.msra.mxu0 0.0
  %350 = vmatprep.subr.mxu0 0.0
  %351 = vmatpush1.msra.mxu0 0.0
  %352 = vmatprep.subr.mxu0 0.0
  %353 = vmatpush1.msra.mxu0 0.0
  %354 = vmatprep.subr.mxu0 0.0
  %355 = vmatpush1.msra.mxu0 0.0
  %356 = vmatprep.subr.mxu0 0.0
  %357 = vmatpush1.msra.mxu0 0.0
  %358 = vmatprep.subr.mxu0 0.0
  %359 = vmatpush1.msra.mxu0 0.0
  %360 = vmatprep.subr.mxu0 0.0
  %361 = vmatpush1.msra.mxu0 0.0
  %362 = vmatprep.subr.mxu0 0.0
  %363 = vmatpush1.msra.mxu0 0.0
  %364 = vmatprep.subr.mxu0 0.0
  %365 = vmatpush1.msra.mxu0 0.0
  %366 = vmatprep.subr.mxu0 0.0
  %367 = vmatpush1.msra.mxu0 0.0
  %368 = vmatprep.subr.mxu0 0.0
  %369 = vmatpush1.msra.mxu0 0.0
  %370 = vmatprep.subr.mxu0 0.0
  %371 = vmatpush1.msra.mxu0 0.0
  %372 = vmatprep.subr.mxu0 0.0
  %373 = vmatpush1.msra.mxu0 0.0
  %374 = vmatprep.subr.mxu0 0.0
  %375 = vmatpush1.msra.mxu0 0.0
  %376 = vmatprep.subr.mxu0 0.0
  %377 = vmatpush1.msra.mxu0 0.0
  %378 = vmatprep.mubr.f32.mxu0 0.0
  %379 = vmatmul.mubr.f32.gmra.mrb[0].mxu0 %v310
  %v380 = vpop.f32.mrb[0].mxu0
  %v381 = vadd.f32 0.0, %v380
  %v382 = vpop.f32.mrb[0].mxu0
  %383 = vmatprep.mubr.f32.mxu0 0.0
  %384 = vmatmul.mubr.f32.gmra.mrb[0].mxu0 %v312
  %v385 = vpop.f32.mrb[0].mxu0
  %v386 = vadd.f32 0.0, %v385
  %v387 = vpop.f32.mrb[0].mxu0
  %388 = vdwg.mxu0
  %v389 = vmul.f32 %v381, %v63
  %v390 = vmul.f32 %v386, %v64
  %393 = vrot.lane.b32.xlu0 %v389, 32
  %v394 = vpop.permute.xlu0 %393
  %395 = vrot.lane.b32.xlu0 %v390, 32
  %v396 = vpop.permute.xlu0 %395
  %v399 = vadd.f32 %v304, %v394
  %v400 = vadd.f32 %v305, %v396
  %v401 = vlaneseq
  %v402 = vshrl.u32 %v401, 7
  %v403 = vsub.s32 0, %v402
  %v404 = vrot.slane %v69, %v403
  %v405 = vmul.f32 %v294, %v404
  %v406 = vmul.f32 %v295, %v404
  %v407 = vlaneseq
  %v408 = vshrl.u32 %v407, 7
  %v409 = vsub.s32 1, %v408
  %v410 = vrot.slane %v69, %v409
  %v411 = vmul.f32 %v294, %v410
  %v412 = vmul.f32 %v295, %v410
  %v413 = vlaneseq
  %v414 = vshrl.u32 %v413, 7
  %v415 = vsub.s32 2, %v414
  %v416 = vrot.slane %v69, %v415
  %v417 = vmul.f32 %v294, %v416
  %v418 = vmul.f32 %v295, %v416
  %v419 = vlaneseq
  %v420 = vshrl.u32 %v419, 7
  %v421 = vsub.s32 3, %v420
  %v422 = vrot.slane %v69, %v421
  %v423 = vmul.f32 %v294, %v422
  %v424 = vmul.f32 %v295, %v422
  %426 = vrot.lane.b32.xlu0 %v399, 96
  %v427 = vpop.permute.xlu0 %426
  %v429 = vsel %vm80, %v405, 0
  %v432 = vsel %vm80, %v411, 0
  %v435 = vsel %vm80, %v417, 0
  %v438 = vsel %vm80, %v423, 0
  %v440 = vsel %vm80, %v427, 0
  %442 = vmatprep.subr.mxu0 0.0
  %443 = vmatpush1.xpose.msra.mxu0 %v440
  %444 = vmatprep.subr.mxu0 0.0
  %445 = vmatpush1.xpose.msra.mxu0 0.0
  %446 = vmatprep.subr.mxu0 0.0
  %447 = vmatpush1.xpose.msra.mxu0 0.0
  %448 = vmatprep.subr.mxu0 0.0
  %449 = vmatpush1.xpose.msra.mxu0 0.0
  %450 = vmatprep.subr.mxu0 0.0
  %451 = vmatpush1.xpose.msra.mxu0 0.0
  %452 = vmatprep.subr.mxu0 0.0
  %453 = vmatpush1.xpose.msra.mxu0 0.0
  %454 = vmatprep.subr.mxu0 0.0
  %455 = vmatpush1.xpose.msra.mxu0 0.0
  %456 = vmatprep.subr.mxu0 0.0
  %457 = vmatpush1.xpose.msra.mxu0 0.0
  %458 = vmatprep.subr.mxu0 0.0
  %459 = vmatpush1.xpose.msra.mxu0 0.0
  %460 = vmatprep.subr.mxu0 0.0
  %461 = vmatpush1.xpose.msra.mxu0 0.0
  %462 = vmatprep.subr.mxu0 0.0
  %463 = vmatpush1.xpose.msra.mxu0 0.0
  %464 = vmatprep.subr.mxu0 0.0
  %465 = vmatpush1.xpose.msra.mxu0 0.0
  %466 = vmatprep.subr.mxu0 0.0
  %467 = vmatpush1.xpose.msra.mxu0 0.0
  %468 = vmatprep.subr.mxu0 0.0
  %469 = vmatpush1.xpose.msra.mxu0 0.0
  %470 = vmatprep.subr.mxu0 0.0
  %471 = vmatpush1.xpose.msra.mxu0 0.0
  %472 = vmatprep.subr.mxu0 0.0
  %473 = vmatpush1.xpose.msra.mxu0 0.0
  %474 = vmatprep.subr.mxu0 0.0
  %475 = vmatpush1.xpose.msra.mxu0 0.0
  %476 = vmatprep.subr.mxu0 0.0
  %477 = vmatpush1.xpose.msra.mxu0 0.0
  %478 = vmatprep.subr.mxu0 0.0
  %479 = vmatpush1.xpose.msra.mxu0 0.0
  %480 = vmatprep.subr.mxu0 0.0
  %481 = vmatpush1.xpose.msra.mxu0 0.0
  %482 = vmatprep.subr.mxu0 0.0
  %483 = vmatpush1.xpose.msra.mxu0 0.0
  %484 = vmatprep.subr.mxu0 0.0
  %485 = vmatpush1.xpose.msra.mxu0 0.0
  %486 = vmatprep.subr.mxu0 0.0
  %487 = vmatpush1.xpose.msra.mxu0 0.0
  %488 = vmatprep.subr.mxu0 0.0
  %489 = vmatpush1.xpose.msra.mxu0 0.0
  %490 = vmatprep.subr.mxu0 0.0
  %491 = vmatpush1.xpose.msra.mxu0 0.0
  %492 = vmatprep.subr.mxu0 0.0
  %493 = vmatpush1.xpose.msra.mxu0 0.0
  %494 = vmatprep.subr.mxu0 0.0
  %495 = vmatpush1.xpose.msra.mxu0 0.0
  %496 = vmatprep.subr.mxu0 0.0
  %497 = vmatpush1.xpose.msra.mxu0 0.0
  %498 = vmatprep.subr.mxu0 0.0
  %499 = vmatpush1.xpose.msra.mxu0 0.0
  %500 = vmatprep.subr.mxu0 0.0
  %501 = vmatpush1.xpose.msra.mxu0 0.0
  %502 = vmatprep.subr.mxu0 0.0
  %503 = vmatpush1.xpose.msra.mxu0 0.0
  %504 = vmatprep.subr.mxu0 0.0
  %505 = vmatpush1.xpose.msra.mxu0 0.0
  %506 = vmatprep.mubr.f32.mxu0 0.0
  %507 = vmatmul.mubr.f32.gmra.mrb[0].mxu0 %v429
  %v508 = vpop.f32.mrb[0].mxu0
  %v509 = vadd.f32 0.0, %v508
  %v510 = vpop.f32.mrb[0].mxu0
  %511 = vmatprep.mubr.f32.mxu0 0.0
  %512 = vmatmul.mubr.f32.gmra.mrb[0].mxu0 %v432
  %v513 = vpop.f32.mrb[0].mxu0
  %v514 = vadd.f32 0.0, %v513
  %v515 = vpop.f32.mrb[0].mxu0
  %516 = vmatprep.mubr.f32.mxu0 0.0
  %517 = vmatmul.mubr.f32.gmra.mrb[0].mxu0 %v435
  %v518 = vpop.f32.mrb[0].mxu0
  %v519 = vadd.f32 0.0, %v518
  %v520 = vpop.f32.mrb[0].mxu0
  %521 = vmatprep.mubr.f32.mxu0 0.0
  %522 = vmatmul.mubr.f32.gmra.mrb[0].mxu0 %v438
  %v523 = vpop.f32.mrb[0].mxu0
  %v524 = vadd.f32 0.0, %v523
  %v525 = vpop.f32.mrb[0].mxu0
  %526 = vdwg.mxu0
  %528 = vrot.lane.b32.xlu0 %v400, 96
  %v529 = vpop.permute.xlu0 %528
  %v531 = vsel %vm80, %v406, 0
  %v534 = vsel %vm80, %v412, 0
  %v537 = vsel %vm80, %v418, 0
  %v540 = vsel %vm80, %v424, 0
  %v542 = vsel %vm80, %v529, 0
  %544 = vmatprep.subr.mxu0 0.0
  %545 = vmatpush1.xpose.msra.mxu0 %v542
  %546 = vmatprep.subr.mxu0 0.0
  %547 = vmatpush1.xpose.msra.mxu0 0.0
  %548 = vmatprep.subr.mxu0 0.0
  %549 = vmatpush1.xpose.msra.mxu0 0.0
  %550 = vmatprep.subr.mxu0 0.0
  %551 = vmatpush1.xpose.msra.mxu0 0.0
  %552 = vmatprep.subr.mxu0 0.0
  %553 = vmatpush1.xpose.msra.mxu0 0.0
  %554 = vmatprep.subr.mxu0 0.0
  %555 = vmatpush1.xpose.msra.mxu0 0.0
  %556 = vmatprep.subr.mxu0 0.0
  %557 = vmatpush1.xpose.msra.mxu0 0.0
  %558 = vmatprep.subr.mxu0 0.0
  %559 = vmatpush1.xpose.msra.mxu0 0.0
  %560 = vmatprep.subr.mxu0 0.0
  %561 = vmatpush1.xpose.msra.mxu0 0.0
  %562 = vmatprep.subr.mxu0 0.0
  %563 = vmatpush1.xpose.msra.mxu0 0.0
  %564 = vmatprep.subr.mxu0 0.0
  %565 = vmatpush1.xpose.msra.mxu0 0.0
  %566 = vmatprep.subr.mxu0 0.0
  %567 = vmatpush1.xpose.msra.mxu0 0.0
  %568 = vmatprep.subr.mxu0 0.0
  %569 = vmatpush1.xpose.msra.mxu0 0.0
  %570 = vmatprep.subr.mxu0 0.0
  %571 = vmatpush1.xpose.msra.mxu0 0.0
  %572 = vmatprep.subr.mxu0 0.0
  %573 = vmatpush1.xpose.msra.mxu0 0.0
  %574 = vmatprep.subr.mxu0 0.0
  %575 = vmatpush1.xpose.msra.mxu0 0.0
  %576 = vmatprep.subr.mxu0 0.0
  %577 = vmatpush1.xpose.msra.mxu0 0.0
  %578 = vmatprep.subr.mxu0 0.0
  %579 = vmatpush1.xpose.msra.mxu0 0.0
  %580 = vmatprep.subr.mxu0 0.0
  %581 = vmatpush1.xpose.msra.mxu0 0.0
  %582 = vmatprep.subr.mxu0 0.0
  %583 = vmatpush1.xpose.msra.mxu0 0.0
  %584 = vmatprep.subr.mxu0 0.0
  %585 = vmatpush1.xpose.msra.mxu0 0.0
  %586 = vmatprep.subr.mxu0 0.0
  %587 = vmatpush1.xpose.msra.mxu0 0.0
  %588 = vmatprep.subr.mxu0 0.0
  %589 = vmatpush1.xpose.msra.mxu0 0.0
  %590 = vmatprep.subr.mxu0 0.0
  %591 = vmatpush1.xpose.msra.mxu0 0.0
  %592 = vmatprep.subr.mxu0 0.0
  %593 = vmatpush1.xpose.msra.mxu0 0.0
  %594 = vmatprep.subr.mxu0 0.0
  %595 = vmatpush1.xpose.msra.mxu0 0.0
  %596 = vmatprep.subr.mxu0 0.0
  %597 = vmatpush1.xpose.msra.mxu0 0.0
  %598 = vmatprep.subr.mxu0 0.0
  %599 = vmatpush1.xpose.msra.mxu0 0.0
  %600 = vmatprep.subr.mxu0 0.0
  %601 = vmatpush1.xpose.msra.mxu0 0.0
  %602 = vmatprep.subr.mxu0 0.0
  %603 = vmatpush1.xpose.msra.mxu0 0.0
  %604 = vmatprep.subr.mxu0 0.0
  %605 = vmatpush1.xpose.msra.mxu0 0.0
  %606 = vmatprep.subr.mxu0 0.0
  %607 = vmatpush1.xpose.msra.mxu0 0.0
  %608 = vmatprep.mubr.f32.mxu0 0.0
  %609 = vmatmul.mubr.f32.gmra.mrb[0].mxu0 %v531
  %v610 = vpop.f32.mrb[0].mxu0
  %v611 = vadd.f32 0.0, %v610
  %v612 = vpop.f32.mrb[0].mxu0
  %613 = vmatprep.mubr.f32.mxu0 0.0
  %614 = vmatmul.mubr.f32.gmra.mrb[0].mxu0 %v534
  %v615 = vpop.f32.mrb[0].mxu0
  %v616 = vadd.f32 0.0, %v615
  %v617 = vpop.f32.mrb[0].mxu0
  %618 = vmatprep.mubr.f32.mxu0 0.0
  %619 = vmatmul.mubr.f32.gmra.mrb[0].mxu0 %v537
  %v620 = vpop.f32.mrb[0].mxu0
  %v621 = vadd.f32 0.0, %v620
  %v622 = vpop.f32.mrb[0].mxu0
  %623 = vmatprep.mubr.f32.mxu0 0.0
  %624 = vmatmul.mubr.f32.gmra.mrb[0].mxu0 %v540
  %v625 = vpop.f32.mrb[0].mxu0
  %v626 = vadd.f32 0.0, %v625
  %v627 = vpop.f32.mrb[0].mxu0
  %628 = vdwg.mxu0
  %v629 = vsel %vm74, 1, 0
  %v630 = vsel %vm75, 1, 0
  %v631 = vsel %vm76, 1, 0
  %v632 = vsel %vm77, 1, 0
  %vm633 = vcmp.eq.s32.totalorder %v629, 1
  %vm634 = vcmp.eq.s32.totalorder %v630, 1
  %vm635 = vcmp.eq.s32.totalorder %v631, 1
  %vm636 = vcmp.eq.s32.totalorder %v632, 1
  %v637 = vsel %vm633, %v509, -3.4028235e+38
  %v638 = vsel %vm634, %v514, -3.4028235e+38
  %v639 = vsel %vm635, %v519, -3.4028235e+38
  %v640 = vsel %vm636, %v524, -3.4028235e+38
  %v641 = vsel %vm633, %v611, -3.4028235e+38
  %v642 = vsel %vm634, %v616, -3.4028235e+38
  %v643 = vsel %vm635, %v621, -3.4028235e+38
  %v644 = vsel %vm636, %v626, -3.4028235e+38
  %v645 = vmul.f32 %v637, 0.35355338
  %v646 = vmul.f32 %v638, 0.35355338
  %v647 = vmul.f32 %v639, 0.35355338
  %v648 = vmul.f32 %v640, 0.35355338
  %v649 = vmul.f32 %v641, 0.35355338
  %v650 = vmul.f32 %v642, 0.35355338
  %v651 = vmul.f32 %v643, 0.35355338
  %v652 = vmul.f32 %v644, 0.35355338
  %vm653 = vcmask 64512
  %v654 = vsel %vm653, %v645, -inf
  %655 = vmax.xlane.f32.xlu0 %v654
  %v656 = vpop.xlane.xlu0 %655
  %v657 = vsel %vm653, %v646, -inf
  %658 = vmax.xlane.f32.xlu0 %v657
  %v659 = vpop.xlane.xlu0 %658
  %v660 = vsel %vm653, %v647, -inf
  %661 = vmax.xlane.f32.xlu0 %v660
  %v662 = vpop.xlane.xlu0 %661
  %v663 = vsel %vm653, %v648, -inf
  %664 = vmax.xlane.f32.xlu0 %v663
  %v665 = vpop.xlane.xlu0 %664
  %v666 = vsel %vm653, %v649, -inf
  %667 = vmax.xlane.f32.xlu0 %v666
  %v668 = vpop.xlane.xlu0 %667
  %v669 = vsel %vm653, %v650, -inf
  %670 = vmax.xlane.f32.xlu0 %v669
  %v671 = vpop.xlane.xlu0 %670
  %v672 = vsel %vm653, %v651, -inf
  %673 = vmax.xlane.f32.xlu0 %v672
  %v674 = vpop.xlane.xlu0 %673
  %v675 = vsel %vm653, %v652, -inf
  %676 = vmax.xlane.f32.xlu0 %v675
  %v677 = vpop.xlane.xlu0 %676
  %v678 = vsub.f32 %v645, %v656
  %v679 = vsub.f32 %v646, %v659
  %v680 = vsub.f32 %v647, %v662
  %v681 = vsub.f32 %v648, %v665
  %v682 = vsub.f32 %v649, %v668
  %v683 = vsub.f32 %v650, %v671
  %v684 = vsub.f32 %v651, %v674
  %v685 = vsub.f32 %v652, %v677
  %v686 = vmul.f32 %v678, 1.442695
  %v687 = vpow.pop %v686
  %v688 = vmul.f32 %v679, 1.442695
  %v689 = vpow.pop %v688
  %v690 = vmul.f32 %v680, 1.442695
  %v691 = vpow.pop %v690
  %v692 = vmul.f32 %v681, 1.442695
  %v693 = vpow.pop %v692
  %v694 = vmul.f32 %v682, 1.442695
  %v695 = vpow.pop %v694
  %v696 = vmul.f32 %v683, 1.442695
  %v697 = vpow.pop %v696
  %v698 = vmul.f32 %v684, 1.442695
  %v699 = vpow.pop %v698
  %v700 = vmul.f32 %v685, 1.442695
  %v701 = vpow.pop %v700
  %v702 = vsel %vm653, %v687, 0.0
  %703 = vadd.xlane.f32.xlu0 %v702
  %v704 = vpop.xlane.xlu0 %703
  %v705 = vsel %vm653, %v689, 0.0
  %706 = vadd.xlane.f32.xlu0 %v705
  %v707 = vpop.xlane.xlu0 %706
  %v708 = vsel %vm653, %v691, 0.0
  %709 = vadd.xlane.f32.xlu0 %v708
  %v710 = vpop.xlane.xlu0 %709
  %v711 = vsel %vm653, %v693, 0.0
  %712 = vadd.xlane.f32.xlu0 %v711
  %v713 = vpop.xlane.xlu0 %712
  %v714 = vsel %vm653, %v695, 0.0
  %715 = vadd.xlane.f32.xlu0 %v714
  %v716 = vpop.xlane.xlu0 %715
  %v717 = vsel %vm653, %v697, 0.0
  %718 = vadd.xlane.f32.xlu0 %v717
  %v719 = vpop.xlane.xlu0 %718
  %v720 = vsel %vm653, %v699, 0.0
  %721 = vadd.xlane.f32.xlu0 %v720
  %v722 = vpop.xlane.xlu0 %721
  %v723 = vsel %vm653, %v701, 0.0
  %724 = vadd.xlane.f32.xlu0 %v723
  %v725 = vpop.xlane.xlu0 %724
  %v726 = vrcp.pop %v704
  %v727 = vrcp.pop %v707
  %v728 = vrcp.pop %v710
  %v729 = vrcp.pop %v713
  %v730 = vrcp.pop %v716
  %v731 = vrcp.pop %v719
  %v732 = vrcp.pop %v722
  %v733 = vrcp.pop %v725
  %v734 = vmul.f32 %v687, %v726
  %v735 = vmul.f32 %v689, %v727
  %v736 = vmul.f32 %v691, %v728
  %v737 = vmul.f32 %v693, %v729
  %v738 = vmul.f32 %v695, %v730
  %v739 = vmul.f32 %v697, %v731
  %v740 = vmul.f32 %v699, %v732
  %v741 = vmul.f32 %v701, %v733
  %742 = vrot.lane.b32.xlu0 %v201, 64
  %v743 = vpop.permute.xlu0 %742
  %v746 = vsel %vm653, %v734, 0
  %v749 = vsel %vm653, %v735, 0
  %v752 = vsel %vm653, %v736, 0
  %v755 = vsel %vm653, %v737, 0
  %757 = vmatprep.subr.mxu0 0.0
  %758 = vmatpush1.msra.mxu0 %v743
  %759 = vmatprep.subr.mxu0 0.0
  %760 = vmatpush1.msra.mxu0 0.0
  %761 = vmatprep.subr.mxu0 0.0
  %762 = vmatpush1.msra.mxu0 0.0
  %763 = vmatprep.subr.mxu0 0.0
  %764 = vmatpush1.msra.mxu0 0.0
  %765 = vmatprep.subr.mxu0 0.0
  %766 = vmatpush1.msra.mxu0 0.0
  %767 = vmatprep.subr.mxu0 0.0
  %768 = vmatpush1.msra.mxu0 0.0
  %769 = vmatprep.subr.mxu0 0.0
  %770 = vmatpush1.msra.mxu0 0.0
  %771 = vmatprep.subr.mxu0 0.0
  %772 = vmatpush1.msra.mxu0 0.0
  %773 = vmatprep.subr.mxu0 0.0
  %774 = vmatpush1.msra.mxu0 0.0
  %775 = vmatprep.subr.mxu0 0.0
  %776 = vmatpush1.msra.mxu0 0.0
  %777 = vmatprep.subr.mxu0 0.0
  %778 = vmatpush1.msra.mxu0 0.0
  %779 = vmatprep.subr.mxu0 0.0
  %780 = vmatpush1.msra.mxu0 0.0
  %781 = vmatprep.subr.mxu0 0.0
  %782 = vmatpush1.msra.mxu0 0.0
  %783 = vmatprep.subr.mxu0 0.0
  %784 = vmatpush1.msra.mxu0 0.0
  %785 = vmatprep.subr.mxu0 0.0
  %786 = vmatpush1.msra.mxu0 0.0
  %787 = vmatprep.subr.mxu0 0.0
  %788 = vmatpush1.msra.mxu0 0.0
  %789 = vmatprep.subr.mxu0 0.0
  %790 = vmatpush1.msra.mxu0 0.0
  %791 = vmatprep.subr.mxu0 0.0
  %792 = vmatpush1.msra.mxu0 0.0
  %793 = vmatprep.subr.mxu0 0.0
  %794 = vmatpush1.msra.mxu0 0.0
  %795 = vmatprep.subr.mxu0 0.0
  %796 = vmatpush1.msra.mxu0 0.0
  %797 = vmatprep.subr.mxu0 0.0
  %798 = vmatpush1.msra.mxu0 0.0
  %799 = vmatprep.subr.mxu0 0.0
  %800 = vmatpush1.msra.mxu0 0.0
  %801 = vmatprep.subr.mxu0 0.0
  %802 = vmatpush1.msra.mxu0 0.0
  %803 = vmatprep.subr.mxu0 0.0
  %804 = vmatpush1.msra.mxu0 0.0
  %805 = vmatprep.subr.mxu0 0.0
  %806 = vmatpush1.msra.mxu0 0.0
  %807 = vmatprep.subr.mxu0 0.0
  %808 = vmatpush1.msra.mxu0 0.0
  %809 = vmatprep.subr.mxu0 0.0
  %810 = vmatpush1.msra.mxu0 0.0
  %811 = vmatprep.subr.mxu0 0.0
  %812 = vmatpush1.msra.mxu0 0.0
  %813 = vmatprep.subr.mxu0 0.0
  %814 = vmatpush1.msra.mxu0 0.0
  %815 = vmatprep.subr.mxu0 0.0
  %816 = vmatpush1.msra.mxu0 0.0
  %817 = vmatprep.subr.mxu0 0.0
  %818 = vmatpush1.msra.mxu0 0.0
  %819 = vmatprep.subr.mxu0 0.0
  %820 = vmatpush1.msra.mxu0 0.0
  %821 = vmatprep.mubr.f32.mxu0 0.0
  %822 = vmatmul.mubr.f32.gmra.mrb[0].mxu0 %v746
  %v823 = vpop.f32.mrb[0].mxu0
  %v824 = vadd.f32 0.0, %v823
  %v825 = vpop.f32.mrb[0].mxu0
  %826 = vmatprep.mubr.f32.mxu0 0.0
  %827 = vmatmul.mubr.f32.gmra.mrb[0].mxu0 %v749
  %v828 = vpop.f32.mrb[0].mxu0
  %v829 = vadd.f32 0.0, %v828
  %v830 = vpop.f32.mrb[0].mxu0
  %831 = vmatprep.mubr.f32.mxu0 0.0
  %832 = vmatmul.mubr.f32.gmra.mrb[0].mxu0 %v752
  %v833 = vpop.f32.mrb[0].mxu0
  %v834 = vadd.f32 0.0, %v833
  %v835 = vpop.f32.mrb[0].mxu0
  %836 = vmatprep.mubr.f32.mxu0 0.0
  %837 = vmatmul.mubr.f32.gmra.mrb[0].mxu0 %v755
  %v838 = vpop.f32.mrb[0].mxu0
  %v839 = vadd.f32 0.0, %v838
  %v840 = vpop.f32.mrb[0].mxu0
  %841 = vdwg.mxu0
  %842 = vrot.lane.b32.xlu0 %v206, 64
  %v843 = vpop.permute.xlu0 %842
  %v846 = vsel %vm653, %v738, 0
  %v849 = vsel %vm653, %v739, 0
  %v852 = vsel %vm653, %v740, 0
  %v855 = vsel %vm653, %v741, 0
  %857 = vmatprep.subr.mxu0 0.0
  %858 = vmatpush1.msra.mxu0 %v843
  %859 = vmatprep.subr.mxu0 0.0
  %860 = vmatpush1.msra.mxu0 0.0
  %861 = vmatprep.subr.mxu0 0.0
  %862 = vmatpush1.msra.mxu0 0.0
  %863 = vmatprep.subr.mxu0 0.0
  %864 = vmatpush1.msra.mxu0 0.0
  %865 = vmatprep.subr.mxu0 0.0
  %866 = vmatpush1.msra.mxu0 0.0
  %867 = vmatprep.subr.mxu0 0.0
  %868 = vmatpush1.msra.mxu0 0.0
  %869 = vmatprep.subr.mxu0 0.0
  %870 = vmatpush1.msra.mxu0 0.0
  %871 = vmatprep.subr.mxu0 0.0
  %872 = vmatpush1.msra.mxu0 0.0
  %873 = vmatprep.subr.mxu0 0.0
  %874 = vmatpush1.msra.mxu0 0.0
  %875 = vmatprep.subr.mxu0 0.0
  %876 = vmatpush1.msra.mxu0 0.0
  %877 = vmatprep.subr.mxu0 0.0
  %878 = vmatpush1.msra.mxu0 0.0
  %879 = vmatprep.subr.mxu0 0.0
  %880 = vmatpush1.msra.mxu0 0.0
  %881 = vmatprep.subr.mxu0 0.0
  %882 = vmatpush1.msra.mxu0 0.0
  %883 = vmatprep.subr.mxu0 0.0
  %884 = vmatpush1.msra.mxu0 0.0
  %885 = vmatprep.subr.mxu0 0.0
  %886 = vmatpush1.msra.mxu0 0.0
  %887 = vmatprep.subr.mxu0 0.0
  %888 = vmatpush1.msra.mxu0 0.0
  %889 = vmatprep.subr.mxu0 0.0
  %890 = vmatpush1.msra.mxu0 0.0
  %891 = vmatprep.subr.mxu0 0.0
  %892 = vmatpush1.msra.mxu0 0.0
  %893 = vmatprep.subr.mxu0 0.0
  %894 = vmatpush1.msra.mxu0 0.0
  %895 = vmatprep.subr.mxu0 0.0
  %896 = vmatpush1.msra.mxu0 0.0
  %897 = vmatprep.subr.mxu0 0.0
  %898 = vmatpush1.msra.mxu0 0.0
  %899 = vmatprep.subr.mxu0 0.0
  %900 = vmatpush1.msra.mxu0 0.0
  %901 = vmatprep.subr.mxu0 0.0
  %902 = vmatpush1.msra.mxu0 0.0
  %903 = vmatprep.subr.mxu0 0.0
  %904 = vmatpush1.msra.mxu0 0.0
  %905 = vmatprep.subr.mxu0 0.0
  %906 = vmatpush1.msra.mxu0 0.0
  %907 = vmatprep.subr.mxu0 0.0
  %908 = vmatpush1.msra.mxu0 0.0
  %909 = vmatprep.subr.mxu0 0.0
  %910 = vmatpush1.msra.mxu0 0.0
  %911 = vmatprep.subr.mxu0 0.0
  %912 = vmatpush1.msra.mxu0 0.0
  %913 = vmatprep.subr.mxu0 0.0
  %914 = vmatpush1.msra.mxu0 0.0
  %915 = vmatprep.subr.mxu0 0.0
  %916 = vmatpush1.msra.mxu0 0.0
  %917 = vmatprep.subr.mxu0 0.0
  %918 = vmatpush1.msra.mxu0 0.0
  %919 = vmatprep.subr.mxu0 0.0
  %920 = vmatpush1.msra.mxu0 0.0
  %921 = vmatprep.mubr.f32.mxu0 0.0
  %922 = vmatmul.mubr.f32.gmra.mrb[0].mxu0 %v846
  %v923 = vpop.f32.mrb[0].mxu0
  %v924 = vadd.f32 0.0, %v923
  %v925 = vpop.f32.mrb[0].mxu0
  %926 = vmatprep.mubr.f32.mxu0 0.0
  %927 = vmatmul.mubr.f32.gmra.mrb[0].mxu0 %v849
  %v928 = vpop.f32.mrb[0].mxu0
  %v929 = vadd.f32 0.0, %v928
  %v930 = vpop.f32.mrb[0].mxu0
  %931 = vmatprep.mubr.f32.mxu0 0.0
  %932 = vmatmul.mubr.f32.gmra.mrb[0].mxu0 %v852
  %v933 = vpop.f32.mrb[0].mxu0
  %v934 = vadd.f32 0.0, %v933
  %v935 = vpop.f32.mrb[0].mxu0
  %936 = vmatprep.mubr.f32.mxu0 0.0
  %937 = vmatmul.mubr.f32.gmra.mrb[0].mxu0 %v855
  %v938 = vpop.f32.mrb[0].mxu0
  %v939 = vadd.f32 0.0, %v938
  %v940 = vpop.f32.mrb[0].mxu0
  %941 = vdwg.mxu0
  %v942 = vmul.f32 %v824, %v404
  %v943 = vmul.f32 %v924, %v404
  %v944 = vmul.f32 %v829, %v410
  %v945 = vmul.f32 %v929, %v410
  %v946 = vadd.f32 %v942, %v944
  %v947 = vadd.f32 %v943, %v945
  %v948 = vmul.f32 %v834, %v416
  %v949 = vmul.f32 %v934, %v416
  %v950 = vadd.f32 %v946, %v948
  %v951 = vadd.f32 %v947, %v949
  %v952 = vmul.f32 %v839, %v422
  %v953 = vmul.f32 %v939, %v422
  %v954 = vadd.f32 %v950, %v952
  %v955 = vadd.f32 %v951, %v953
  %v956 = vld [vmem:[%s4] sm:$0xff]
  %v957 = vld [vmem:[%s4 + $0x8] sm:$0xff]
  %v958 = vld [vmem:[%s4 + $0x10] sm:$0xff]
  %v959 = vld [vmem:[%s4 + $0x18] sm:$0xff]
  %v960 = vld [vmem:[%s5] sm:$0xff]
  %v961 = vld [vmem:[%s5 + $0x8] sm:$0xff]
  %v962 = vld [vmem:[%s5 + $0x10] sm:$0xff]
  %v963 = vld [vmem:[%s5 + $0x18] sm:$0xff]
  %v964 = vld [vmem:[%s6] sm:$0x1]
  %v966 = vlaneseq
  %v967 = vshrl.u32 %v966, 7
  %v968 = vsub.s32 0, %v967
  %v969 = vrot.slane %v964, %v968
  %971 = vmatprep.subr.mxu0 0.0
  %972 = vmatpush1.msra.mxu0 %v960
  %973 = vmatprep.subr.mxu0 0.0
  %974 = vmatpush1.msra.mxu0 %v961
  %975 = vmatprep.subr.mxu0 0.0
  %976 = vmatpush1.msra.mxu0 %v962
  %977 = vmatprep.subr.mxu0 0.0
  %978 = vmatpush1.msra.mxu0 %v963
  %979 = vmatprep.subr.mxu0 0.0
  %980 = vmatpush1.msra.mxu0 0.0
  %981 = vmatprep.subr.mxu0 0.0
  %982 = vmatpush1.msra.mxu0 0.0
  %983 = vmatprep.subr.mxu0 0.0
  %984 = vmatpush1.msra.mxu0 0.0
  %985 = vmatprep.subr.mxu0 0.0
  %986 = vmatpush1.msra.mxu0 0.0
  %987 = vmatprep.subr.mxu0 0.0
  %988 = vmatpush1.msra.mxu0 0.0
  %989 = vmatprep.subr.mxu0 0.0
  %990 = vmatpush1.msra.mxu0 0.0
  %991 = vmatprep.subr.mxu0 0.0
  %992 = vmatpush1.msra.mxu0 0.0
  %993 = vmatprep.subr.mxu0 0.0
  %994 = vmatpush1.msra.mxu0 0.0
  %995 = vmatprep.subr.mxu0 0.0
  %996 = vmatpush1.msra.mxu0 0.0
  %997 = vmatprep.subr.mxu0 0.0
  %998 = vmatpush1.msra.mxu0 0.0
  %999 = vmatprep.subr.mxu0 0.0
  %1000 = vmatpush1.msra.mxu0 0.0
  %1001 = vmatprep.subr.mxu0 0.0
  %1002 = vmatpush1.msra.mxu0 0.0
  %1003 = vmatprep.subr.mxu0 0.0
  %1004 = vmatpush1.msra.mxu0 0.0
  %1005 = vmatprep.subr.mxu0 0.0
  %1006 = vmatpush1.msra.mxu0 0.0
  %1007 = vmatprep.subr.mxu0 0.0
  %1008 = vmatpush1.msra.mxu0 0.0
  %1009 = vmatprep.subr.mxu0 0.0
  %1010 = vmatpush1.msra.mxu0 0.0
  %1011 = vmatprep.subr.mxu0 0.0
  %1012 = vmatpush1.msra.mxu0 0.0
  %1013 = vmatprep.subr.mxu0 0.0
  %1014 = vmatpush1.msra.mxu0 0.0
  %1015 = vmatprep.subr.mxu0 0.0
  %1016 = vmatpush1.msra.mxu0 0.0
  %1017 = vmatprep.subr.mxu0 0.0
  %1018 = vmatpush1.msra.mxu0 0.0
  %1019 = vmatprep.subr.mxu0 0.0
  %1020 = vmatpush1.msra.mxu0 0.0
  %1021 = vmatprep.subr.mxu0 0.0
  %1022 = vmatpush1.msra.mxu0 0.0
  %1023 = vmatprep.subr.mxu0 0.0
  %1024 = vmatpush1.msra.mxu0 0.0
  %1025 = vmatprep.subr.mxu0 0.0
  %1026 = vmatpush1.msra.mxu0 0.0
  %1027 = vmatprep.subr.mxu0 0.0
  %1028 = vmatpush1.msra.mxu0 0.0
  %1029 = vmatprep.subr.mxu0 0.0
  %1030 = vmatpush1.msra.mxu0 0.0
  %1031 = vmatprep.subr.mxu0 0.0
  %1032 = vmatpush1.msra.mxu0 0.0
  %1033 = vmatprep.subr.mxu0 0.0
  %1034 = vmatpush1.msra.mxu0 0.0
  %1035 = vmatprep.mubr.f32.mxu0 0.0
  %1036 = vmatmul.mubr.f32.gmra.mrb[0].mxu0 %v129
  %v1037 = vpop.f32.mrb[0].mxu0
  %v1038 = vadd.f32 %v969, %v1037
  %v1039 = vpop.f32.mrb[0].mxu0
  %1040 = vmatprep.mubr.f32.mxu0 0.0
  %1041 = vmatmul.mubr.f32.gmra.mrb[0].mxu0 %v132
  %v1042 = vpop.f32.mrb[0].mxu0
  %v1043 = vadd.f32 %v969, %v1042
  %v1044 = vpop.f32.mrb[0].mxu0
  %1045 = vdwg.mxu0
  %v1046 = vmul.f32 %v1038, 0.5
  %v1047 = vmul.f32 %v1043, 0.5
  %v1048 = vmul.f32 %v1038, 0.044715
  %v1049 = vmul.f32 %v1043, 0.044715
  %v1050 = vmul.f32 %v1048, %v1038
  %v1051 = vmul.f32 %v1049, %v1043
  %v1052 = vmul.f32 %v1050, %v1038
  %v1053 = vmul.f32 %v1051, %v1043
  %v1054 = vadd.f32 %v1038, %v1052
  %v1055 = vadd.f32 %v1043, %v1053
  %v1056 = vmul.f32 %v1054, 0.7978846
  %v1057 = vmul.f32 %v1055, 0.7978846
  %v1058 = vtanh.pop %v1056
  %v1059 = vtanh.pop %v1057
  %v1060 = vadd.f32 %v1058, 1.0
  %v1061 = vadd.f32 %v1059, 1.0
  %v1062 = vmul.f32 %v1046, %v1060
  %v1063 = vmul.f32 %v1047, %v1061
  %v1064 = vld [vmem:[%s7] sm:$0xff]
  %v1065 = vld [vmem:[%s7 + $0x8] sm:$0xff]
  %v1066 = vld [vmem:[%s7 + $0x10] sm:$0xff]
  %v1067 = vld [vmem:[%s7 + $0x18] sm:$0xff]
  %v1068 = vld [vmem:[%s7 + $0x20] sm:$0xff]
  %v1069 = vld [vmem:[%s7 + $0x28] sm:$0xff]
  %v1070 = vld [vmem:[%s7 + $0x30] sm:$0xff]
  %v1071 = vld [vmem:[%s7 + $0x38] sm:$0xff]
  %v1072 = vld [vmem:[%s7 + $0x40] sm:$0xff]
  %v1073 = vld [vmem:[%s7 + $0x48] sm:$0xff]
  %v1074 = vld [vmem:[%s7 + $0x50] sm:$0xff]
  %v1075 = vld [vmem:[%s7 + $0x58] sm:$0xff]
  %v1076 = vld [vmem:[%s7 + $0x60] sm:$0xff]
  %v1077 = vld [vmem:[%s7 + $0x68] sm:$0xff]
  %v1078 = vld [vmem:[%s7 + $0x70] sm:$0xff]
  %v1079 = vld [vmem:[%s7 + $0x78] sm:$0xff]
  %v1080 = vld [vmem:[%s8] sm:$0x1]
  %v1082 = vlaneseq
  %v1083 = vshrl.u32 %v1082, 7
  %v1084 = vsub.s32 0, %v1083
  %v1085 = vrot.slane %v1080, %v1084
  %1087 = vmatprep.subr.mxu0 0.0
  %1088 = vmatpush1.msra.mxu0 %v1064
  %1089 = vmatprep.subr.mxu0 0.0
  %1090 = vmatpush1.msra.mxu0 %v1065
  %1091 = vmatprep.subr.mxu0 0.0
  %1092 = vmatpush1.msra.mxu0 %v1066
  %1093 = vmatprep.subr.mxu0 0.0
  %1094 = vmatpush1.msra.mxu0 %v1067
  %1095 = vmatprep.subr.mxu0 0.0
  %1096 = vmatpush1.msra.mxu0 %v1068
  %1097 = vmatprep.subr.mxu0 0.0
  %1098 = vmatpush1.msra.mxu0 %v1069
  %1099 = vmatprep.subr.mxu0 0.0
  %1100 = vmatpush1.msra.mxu0 %v1070
  %1101 = vmatprep.subr.mxu0 0.0
  %1102 = vmatpush1.msra.mxu0 %v1071
  %1103 = vmatprep.subr.mxu0 0.0
  %1104 = vmatpush1.msra.mxu0 %v1072
  %1105 = vmatprep.subr.mxu0 0.0
  %1106 = vmatpush1.msra.mxu0 %v1073
  %1107 = vmatprep.subr.mxu0 0.0
  %1108 = vmatpush1.msra.mxu0 %v1074
  %1109 = vmatprep.subr.mxu0 0.0
  %1110 = vmatpush1.msra.mxu0 %v1075
  %1111 = vmatprep.subr.mxu0 0.0
  %1112 = vmatpush1.msra.mxu0 %v1076
  %1113 = vmatprep.subr.mxu0 0.0
  %1114 = vmatpush1.msra.mxu0 %v1077
  %1115 = vmatprep.subr.mxu0 0.0
  %1116 = vmatpush1.msra.mxu0 %v1078
  %1117 = vmatprep.subr.mxu0 0.0
  %1118 = vmatpush1.msra.mxu0 %v1079
  %1119 = vmatprep.subr.mxu0 0.0
  %1120 = vmatpush1.msra.mxu0 0.0
  %1121 = vmatprep.subr.mxu0 0.0
  %1122 = vmatpush1.msra.mxu0 0.0
  %1123 = vmatprep.subr.mxu0 0.0
  %1124 = vmatpush1.msra.mxu0 0.0
  %1125 = vmatprep.subr.mxu0 0.0
  %1126 = vmatpush1.msra.mxu0 0.0
  %1127 = vmatprep.subr.mxu0 0.0
  %1128 = vmatpush1.msra.mxu0 0.0
  %1129 = vmatprep.subr.mxu0 0.0
  %1130 = vmatpush1.msra.mxu0 0.0
  %1131 = vmatprep.subr.mxu0 0.0
  %1132 = vmatpush1.msra.mxu0 0.0
  %1133 = vmatprep.subr.mxu0 0.0
  %1134 = vmatpush1.msra.mxu0 0.0
  %1135 = vmatprep.subr.mxu0 0.0
  %1136 = vmatpush1.msra.mxu0 0.0
  %1137 = vmatprep.subr.mxu0 0.0
  %1138 = vmatpush1.msra.mxu0 0.0
  %1139 = vmatprep.subr.mxu0 0.0
  %1140 = vmatpush1.msra.mxu0 0.0
  %1141 = vmatprep.subr.mxu0 0.0
  %1142 = vmatpush1.msra.mxu0 0.0
  %1143 = vmatprep.subr.mxu0 0.0
  %1144 = vmatpush1.msra.mxu0 0.0
  %1145 = vmatprep.subr.mxu0 0.0
  %1146 = vmatpush1.msra.mxu0 0.0
  %1147 = vmatprep.subr.mxu0 0.0
  %1148 = vmatpush1.msra.mxu0 0.0
  %1149 = vmatprep.subr.mxu0 0.0
  %1150 = vmatpush1.msra.mxu0 0.0
  %1151 = vmatprep.mubr.f32.mxu0 0.0
  %1152 = vmatmul.mubr.f32.gmra.mrb[0].mxu0 %v1062
  %v1153 = vpop.f32.mrb[0].mxu0
  %v1154 = vadd.f32 %v1085, %v1153
  %v1155 = vpop.f32.mrb[0].mxu0
  %1156 = vmatprep.mubr.f32.mxu0 0.0
  %1157 = vmatmul.mubr.f32.gmra.mrb[0].mxu0 %v1063
  %v1158 = vpop.f32.mrb[0].mxu0
  %v1159 = vadd.f32 %v1085, %v1158
  %v1160 = vpop.f32.mrb[0].mxu0
  %1161 = vdwg.mxu0
  %v1163 = vsel %vm80, %v954, 0
  %v1166 = vsel %vm80, %v955, 0
  %1168 = vmatprep.subr.mxu0 0.0
  %1169 = vmatpush1.msra.mxu0 %v956
  %1170 = vmatprep.subr.mxu0 0.0
  %1171 = vmatpush1.msra.mxu0 %v957
  %1172 = vmatprep.subr.mxu0 0.0
  %1173 = vmatpush1.msra.mxu0 %v958
  %1174 = vmatprep.subr.mxu0 0.0
  %1175 = vmatpush1.msra.mxu0 %v959
  %1176 = vmatprep.subr.mxu0 0.0
  %1177 = vmatpush1.msra.mxu0 0.0
  %1178 = vmatprep.subr.mxu0 0.0
  %1179 = vmatpush1.msra.mxu0 0.0
  %1180 = vmatprep.subr.mxu0 0.0
  %1181 = vmatpush1.msra.mxu0 0.0
  %1182 = vmatprep.subr.mxu0 0.0
  %1183 = vmatpush1.msra.mxu0 0.0
  %1184 = vmatprep.subr.mxu0 0.0
  %1185 = vmatpush1.msra.mxu0 0.0
  %1186 = vmatprep.subr.mxu0 0.0
  %1187 = vmatpush1.msra.mxu0 0.0
  %1188 = vmatprep.subr.mxu0 0.0
  %1189 = vmatpush1.msra.mxu0 0.0
  %1190 = vmatprep.subr.mxu0 0.0
  %1191 = vmatpush1.msra.mxu0 0.0
  %1192 = vmatprep.subr.mxu0 0.0
  %1193 = vmatpush1.msra.mxu0 0.0
  %1194 = vmatprep.subr.mxu0 0.0
  %1195 = vmatpush1.msra.mxu0 0.0
  %1196 = vmatprep.subr.mxu0 0.0
  %1197 = vmatpush1.msra.mxu0 0.0
  %1198 = vmatprep.subr.mxu0 0.0
  %1199 = vmatpush1.msra.mxu0 0.0
  %1200 = vmatprep.subr.mxu0 0.0
  %1201 = vmatpush1.msra.mxu0 0.0
  %1202 = vmatprep.subr.mxu0 0.0
  %1203 = vmatpush1.msra.mxu0 0.0
  %1204 = vmatprep.subr.mxu0 0.0
  %1205 = vmatpush1.msra.mxu0 0.0
  %1206 = vmatprep.subr.mxu0 0.0
  %1207 = vmatpush1.msra.mxu0 0.0
  %1208 = vmatprep.subr.mxu0 0.0
  %1209 = vmatpush1.msra.mxu0 0.0
  %1210 = vmatprep.subr.mxu0 0.0
  %1211 = vmatpush1.msra.mxu0 0.0
  %1212 = vmatprep.subr.mxu0 0.0
  %1213 = vmatpush1.msra.mxu0 0.0
  %1214 = vmatprep.subr.mxu0 0.0
  %1215 = vmatpush1.msra.mxu0 0.0
  %1216 = vmatprep.subr.mxu0 0.0
  %1217 = vmatpush1.msra.mxu0 0.0
  %1218 = vmatprep.subr.mxu0 0.0
  %1219 = vmatpush1.msra.mxu0 0.0
  %1220 = vmatprep.subr.mxu0 0.0
  %1221 = vmatpush1.msra.mxu0 0.0
  %1222 = vmatprep.subr.mxu0 0.0
  %1223 = vmatpush1.msra.mxu0 0.0
  %1224 = vmatprep.subr.mxu0 0.0
  %1225 = vmatpush1.msra.mxu0 0.0
  %1226 = vmatprep.subr.mxu0 0.0
  %1227 = vmatpush1.msra.mxu0 0.0
  %1228 = vmatprep.subr.mxu0 0.0
  %1229 = vmatpush1.msra.mxu0 0.0
  %1230 = vmatprep.subr.mxu0 0.0
  %1231 = vmatpush1.msra.mxu0 0.0
  %1232 = vmatprep.mubr.f32.mxu0 0.0
  %1233 = vmatmul.mubr.f32.gmra.mrb[0].mxu0 %v1163
  %v1234 = vpop.f32.mrb[0].mxu0
  %v1235 = vadd.f32 %v1154, %v1234
  %v1236 = vpop.f32.mrb[0].mxu0
  %1237 = vmatprep.mubr.f32.mxu0 0.0
  %1238 = vmatmul.mubr.f32.gmra.mrb[0].mxu0 %v1166
  %v1239 = vpop.f32.mrb[0].mxu0
  %v1240 = vadd.f32 %v1159, %v1239
  %v1241 = vpop.f32.mrb[0].mxu0
  %1242 = vdwg.mxu0
  %v1243 = vadd.f32 %v1235, %v59
  %v1244 = vadd.f32 %v1240, %v60
  %s1245 = scalar_lea.vmem %s1, 1
  %v1246 = vld [vmem:[%s1245] sm:$0x1]
  %s1247 = scalar_lea.vmem %s2, 1
  %v1248 = vld [vmem:[%s1247] sm:$0x1]
  %v1249 = vsel %vm80, %v1243, 0.0
  %1250 = vadd.xlane.f32.xlu0 %v1249
  %v1251 = vpop.xlane.xlu0 %1250
  %v1252 = vsel %vm80, %v1244, 0.0
  %1253 = vadd.xlane.f32.xlu0 %v1252
  %v1254 = vpop.xlane.xlu0 %1253
  %v1255 = vmul.f32 %v1251, %v87
  %v1256 = vmul.f32 %v1254, %v87
  %v1257 = vsub.f32 %v1243, %v1255
  %v1258 = vsub.f32 %v1244, %v1256
  %v1259 = vmul.f32 %v1257, %v1257
  %v1260 = vmul.f32 %v1258, %v1258
  %v1261 = vsel %vm80, %v1259, 0.0
  %1262 = vadd.xlane.f32.xlu0 %v1261
  %v1263 = vpop.xlane.xlu0 %1262
  %v1264 = vsel %vm80, %v1260, 0.0
  %1265 = vadd.xlane.f32.xlu0 %v1264
  %v1266 = vpop.xlane.xlu0 %1265
  %v1267 = vmul.f32 %v1263, %v87
  %v1268 = vmul.f32 %v1266, %v87
  %v1269 = vadd.f32 %v1267, 1e-05
  %v1270 = vadd.f32 %v1268, 1e-05
  %v1271 = vrsqrt.pop %v1269
  %v1272 = vrsqrt.pop %v1270
  %v1273 = vmul.f32 %v1257, %v1271
  %v1274 = vmul.f32 %v1258, %v1272
  %v1276 = vlaneseq
  %v1277 = vshrl.u32 %v1276, 7
  %v1278 = vsub.s32 0, %v1277
  %v1279 = vrot.slane %v1246, %v1278
  %v1281 = vmul.f32 %v1273, %v1279
  %v1282 = vmul.f32 %v1274, %v1279
  %v1284 = vlaneseq
  %v1285 = vshrl.u32 %v1284, 7
  %v1286 = vsub.s32 0, %v1285
  %v1287 = vrot.slane %v1248, %v1286
  %v1289 = vadd.f32 %v1281, %v1287
  %v1290 = vadd.f32 %v1282, %v1287
  %s1291 = scalar_lea.vmem %s3, 32
  %v1292 = vld [vmem:[%s1291] sm:$0xff]
  %v1293 = vld [vmem:[%s1291 + $0x8] sm:$0xff]
  %v1294 = vld [vmem:[%s1291 + $0x10] sm:$0xff]
  %v1295 = vld [vmem:[%s1291 + $0x18] sm:$0xff]
  %v1297 = vsel %vm80, %v1289, 0
  %v1300 = vsel %vm80, %v1290, 0
  %1302 = vmatprep.subr.mxu0 0.0
  %1303 = vmatpush1.msra.mxu0 %v1292
  %1304 = vmatprep.subr.mxu0 0.0
  %1305 = vmatpush1.msra.mxu0 %v1293
  %1306 = vmatprep.subr.mxu0 0.0
  %1307 = vmatpush1.msra.mxu0 %v1294
  %1308 = vmatprep.subr.mxu0 0.0
  %1309 = vmatpush1.msra.mxu0 %v1295
  %1310 = vmatprep.subr.mxu0 0.0
  %1311 = vmatpush1.msra.mxu0 0.0
  %1312 = vmatprep.subr.mxu0 0.0
  %1313 = vmatpush1.msra.mxu0 0.0
  %1314 = vmatprep.subr.mxu0 0.0
  %1315 = vmatpush1.msra.mxu0 0.0
  %1316 = vmatprep.subr.mxu0 0.0
  %1317 = vmatpush1.msra.mxu0 0.0
  %1318 = vmatprep.subr.mxu0 0.0
  %1319 = vmatpush1.msra.mxu0 0.0
  %1320 = vmatprep.subr.mxu0 0.0
  %1321 = vmatpush1.msra.mxu0 0.0
  %1322 = vmatprep.subr.mxu0 0.0
  %1323 = vmatpush1.msra.mxu0 0.0
  %1324 = vmatprep.subr.mxu0 0.0
  %1325 = vmatpush1.msra.mxu0 0.0
  %1326 = vmatprep.subr.mxu0 0.0
  %1327 = vmatpush1.msra.mxu0 0.0
  %1328 = vmatprep.subr.mxu0 0.0
  %1329 = vmatpush1.msra.mxu0 0.0
  %1330 = vmatprep.subr.mxu0 0.0
  %1331 = vmatpush1.msra.mxu0 0.0
  %1332 = vmatprep.subr.mxu0 0.0
  %1333 = vmatpush1.msra.mxu0 0.0
  %1334 = vmatprep.subr.mxu0 0.0
  %1335 = vmatpush1.msra.mxu0 0.0
  %1336 = vmatprep.subr.mxu0 0.0
  %1337 = vmatpush1.msra.mxu0 0.0
  %1338 = vmatprep.subr.mxu0 0.0
  %1339 = vmatpush1.msra.mxu0 0.0
  %1340 = vmatprep.subr.mxu0 0.0
  %1341 = vmatpush1.msra.mxu0 0.0
  %1342 = vmatprep.subr.mxu0 0.0
  %1343 = vmatpush1.msra.mxu0 0.0
  %1344 = vmatprep.subr.mxu0 0.0
  %1345 = vmatpush1.msra.mxu0 0.0
  %1346 = vmatprep.subr.mxu0 0.0
  %1347 = vmatpush1.msra.mxu0 0.0
  %1348 = vmatprep.subr.mxu0 0.0
  %1349 = vmatpush1.msra.mxu0 0.0
  %1350 = vmatprep.subr.mxu0 0.0
  %1351 = vmatpush1.msra.mxu0 0.0
  %1352 = vmatprep.subr.mxu0 0.0
  %1353 = vmatpush1.msra.mxu0 0.0
  %1354 = vmatprep.subr.mxu0 0.0
  %1355 = vmatpush1.msra.mxu0 0.0
  %1356 = vmatprep.subr.mxu0 0.0
  %1357 = vmatpush1.msra.mxu0 0.0
  %1358 = vmatprep.subr.mxu0 0.0
  %1359 = vmatpush1.msra.mxu0 0.0
  %1360 = vmatprep.subr.mxu0 0.0
  %1361 = vmatpush1.msra.mxu0 0.0
  %1362 = vmatprep.subr.mxu0 0.0
  %1363 = vmatpush1.msra.mxu0 0.0
  %1364 = vmatprep.subr.mxu0 0.0
  %1365 = vmatpush1.msra.mxu0 0.0
  %1366 = vmatprep.mubr.f32.mxu0 0.0
  %1367 = vmatmul.mubr.f32.gmra.mrb[0].mxu0 %v1297
  %v1368 = vpop.f32.mrb[0].mxu0
  %v1369 = vadd.f32 0.0, %v1368
  %v1370 = vpop.f32.mrb[0].mxu0
  %1371 = vmatprep.mubr.f32.mxu0 0.0
  %1372 = vmatmul.mubr.f32.gmra.mrb[0].mxu0 %v1300
  %v1373 = vpop.f32.mrb[0].mxu0
  %v1374 = vadd.f32 0.0, %v1373
  %v1375 = vpop.f32.mrb[0].mxu0
  %1376 = vdwg.mxu0
  %v1377 = vmul.f32 %v1369, %v61
  %v1378 = vmul.f32 %v1374, %v62
  %v1380 = vsel %vm80, %v1369, 0
  %v1383 = vsel %vm80, %v1374, 0
  %1385 = vmatprep.subr.mxu0 0.0
  %1386 = vmatpush1.msra.mxu0 %v65
  %1387 = vmatprep.subr.mxu0 0.0
  %1388 = vmatpush1.msra.mxu0 %v66
  %1389 = vmatprep.subr.mxu0 0.0
  %1390 = vmatpush1.msra.mxu0 %v67
  %1391 = vmatprep.subr.mxu0 0.0
  %1392 = vmatpush1.msra.mxu0 %v68
  %1393 = vmatprep.subr.mxu0 0.0
  %1394 = vmatpush1.msra.mxu0 0.0
  %1395 = vmatprep.subr.mxu0 0.0
  %1396 = vmatpush1.msra.mxu0 0.0
  %1397 = vmatprep.subr.mxu0 0.0
  %1398 = vmatpush1.msra.mxu0 0.0
  %1399 = vmatprep.subr.mxu0 0.0
  %1400 = vmatpush1.msra.mxu0 0.0
  %1401 = vmatprep.subr.mxu0 0.0
  %1402 = vmatpush1.msra.mxu0 0.0
  %1403 = vmatprep.subr.mxu0 0.0
  %1404 = vmatpush1.msra.mxu0 0.0
  %1405 = vmatprep.subr.mxu0 0.0
  %1406 = vmatpush1.msra.mxu0 0.0
  %1407 = vmatprep.subr.mxu0 0.0
  %1408 = vmatpush1.msra.mxu0 0.0
  %1409 = vmatprep.subr.mxu0 0.0
  %1410 = vmatpush1.msra.mxu0 0.0
  %1411 = vmatprep.subr.mxu0 0.0
  %1412 = vmatpush1.msra.mxu0 0.0
  %1413 = vmatprep.subr.mxu0 0.0
  %1414 = vmatpush1.msra.mxu0 0.0
  %1415 = vmatprep.subr.mxu0 0.0
  %1416 = vmatpush1.msra.mxu0 0.0
  %1417 = vmatprep.subr.mxu0 0.0
  %1418 = vmatpush1.msra.mxu0 0.0
  %1419 = vmatprep.subr.mxu0 0.0
  %1420 = vmatpush1.msra.mxu0 0.0
  %1421 = vmatprep.subr.mxu0 0.0
  %1422 = vmatpush1.msra.mxu0 0.0
  %1423 = vmatprep.subr.mxu0 0.0
  %1424 = vmatpush1.msra.mxu0 0.0
  %1425 = vmatprep.subr.mxu0 0.0
  %1426 = vmatpush1.msra.mxu0 0.0
  %1427 = vmatprep.subr.mxu0 0.0
  %1428 = vmatpush1.msra.mxu0 0.0
  %1429 = vmatprep.subr.mxu0 0.0
  %1430 = vmatpush1.msra.mxu0 0.0
  %1431 = vmatprep.subr.mxu0 0.0
  %1432 = vmatpush1.msra.mxu0 0.0
  %1433 = vmatprep.subr.mxu0 0.0
  %1434 = vmatpush1.msra.mxu0 0.0
  %1435 = vmatprep.subr.mxu0 0.0
  %1436 = vmatpush1.msra.mxu0 0.0
  %1437 = vmatprep.subr.mxu0 0.0
  %1438 = vmatpush1.msra.mxu0 0.0
  %1439 = vmatprep.subr.mxu0 0.0
  %1440 = vmatpush1.msra.mxu0 0.0
  %1441 = vmatprep.subr.mxu0 0.0
  %1442 = vmatpush1.msra.mxu0 0.0
  %1443 = vmatprep.subr.mxu0 0.0
  %1444 = vmatpush1.msra.mxu0 0.0
  %1445 = vmatprep.subr.mxu0 0.0
  %1446 = vmatpush1.msra.mxu0 0.0
  %1447 = vmatprep.subr.mxu0 0.0
  %1448 = vmatpush1.msra.mxu0 0.0
  %1449 = vmatprep.mubr.f32.mxu0 0.0
  %1450 = vmatmul.mubr.f32.gmra.mrb[0].mxu0 %v1380
  %v1451 = vpop.f32.mrb[0].mxu0
  %v1452 = vadd.f32 0.0, %v1451
  %v1453 = vpop.f32.mrb[0].mxu0
  %1454 = vmatprep.mubr.f32.mxu0 0.0
  %1455 = vmatmul.mubr.f32.gmra.mrb[0].mxu0 %v1383
  %v1456 = vpop.f32.mrb[0].mxu0
  %v1457 = vadd.f32 0.0, %v1456
  %v1458 = vpop.f32.mrb[0].mxu0
  %1459 = vdwg.mxu0
  %v1460 = vmul.f32 %v1452, %v63
  %v1461 = vmul.f32 %v1457, %v64
  %v1462 = vadd.f32 %v1377, %v1460
  %v1463 = vadd.f32 %v1378, %v1461
  %v1464 = vmul.f32 %v1369, %v299
  %v1465 = vmul.f32 %v1374, %v301
  %1466 = vrot.lane.b32.xlu0 %v1369, 96
  %v1467 = vpop.permute.xlu0 %1466
  %1468 = vrot.lane.b32.xlu0 %v1374, 96
  %v1469 = vpop.permute.xlu0 %1468
  %v1470 = vsel %vm80, %v1467, 0
  %v1472 = vsel %vm80, %v1469, 0
  %1474 = vmatprep.subr.mxu0 0.0
  %1475 = vmatpush1.msra.mxu0 %v65
  %1476 = vmatprep.subr.mxu0 0.0
  %1477 = vmatpush1.msra.mxu0 %v66
  %1478 = vmatprep.subr.mxu0 0.0
  %1479 = vmatpush1.msra.mxu0 %v67
  %1480 = vmatprep.subr.mxu0 0.0
  %1481 = vmatpush1.msra.mxu0 %v68
  %1482 = vmatprep.subr.mxu0 0.0
  %1483 = vmatpush1.msra.mxu0 0.0
  %1484 = vmatprep.subr.mxu0 0.0
  %1485 = vmatpush1.msra.mxu0 0.0
  %1486 = vmatprep.subr.mxu0 0.0
  %1487 = vmatpush1.msra.mxu0 0.0
  %1488 = vmatprep.subr.mxu0 0.0
  %1489 = vmatpush1.msra.mxu0 0.0
  %1490 = vmatprep.subr.mxu0 0.0
  %1491 = vmatpush1.msra.mxu0 0.0
  %1492 = vmatprep.subr.mxu0 0.0
  %1493 = vmatpush1.msra.mxu0 0.0
  %1494 = vmatprep.subr.mxu0 0.0
  %1495 = vmatpush1.msra.mxu0 0.0
  %1496 = vmatprep.subr.mxu0 0.0
  %1497 = vmatpush1.msra.mxu0 0.0
  %1498 = vmatprep.subr.mxu0 0.0
  %1499 = vmatpush1.msra.mxu0 0.0
  %1500 = vmatprep.subr.mxu0 0.0
  %1501 = vmatpush1.msra.mxu0 0.0
  %1502 = vmatprep.subr.mxu0 0.0
  %1503 = vmatpush1.msra.mxu0 0.0
  %1504 = vmatprep.subr.mxu0 0.0
  %1505 = vmatpush1.msra.mxu0 0.0
  %1506 = vmatprep.subr.mxu0 0.0
  %1507 = vmatpush1.msra.mxu0 0.0
  %1508 = vmatprep.subr.mxu0 0.0
  %1509 = vmatpush1.msra.mxu0 0.0
  %1510 = vmatprep.subr.mxu0 0.0
  %1511 = vmatpush1.msra.mxu0 0.0
  %1512 = vmatprep.subr.mxu0 0.0
  %1513 = vmatpush1.msra.mxu0 0.0
  %1514 = vmatprep.subr.mxu0 0.0
  %1515 = vmatpush1.msra.mxu0 0.0
  %1516 = vmatprep.subr.mxu0 0.0
  %1517 = vmatpush1.msra.mxu0 0.0
  %1518 = vmatprep.subr.mxu0 0.0
  %1519 = vmatpush1.msra.mxu0 0.0
  %1520 = vmatprep.subr.mxu0 0.0
  %1521 = vmatpush1.msra.mxu0 0.0
  %1522 = vmatprep.subr.mxu0 0.0
  %1523 = vmatpush1.msra.mxu0 0.0
  %1524 = vmatprep.subr.mxu0 0.0
  %1525 = vmatpush1.msra.mxu0 0.0
  %1526 = vmatprep.subr.mxu0 0.0
  %1527 = vmatpush1.msra.mxu0 0.0
  %1528 = vmatprep.subr.mxu0 0.0
  %1529 = vmatpush1.msra.mxu0 0.0
  %1530 = vmatprep.subr.mxu0 0.0
  %1531 = vmatpush1.msra.mxu0 0.0
  %1532 = vmatprep.subr.mxu0 0.0
  %1533 = vmatpush1.msra.mxu0 0.0
  %1534 = vmatprep.subr.mxu0 0.0
  %1535 = vmatpush1.msra.mxu0 0.0
  %1536 = vmatprep.subr.mxu0 0.0
  %1537 = vmatpush1.msra.mxu0 0.0
  %1538 = vmatprep.mubr.f32.mxu0 0.0
  %1539 = vmatmul.mubr.f32.gmra.mrb[0].mxu0 %v1470
  %v1540 = vpop.f32.mrb[0].mxu0
  %v1541 = vadd.f32 0.0, %v1540
  %v1542 = vpop.f32.mrb[0].mxu0
  %1543 = vmatprep.mubr.f32.mxu0 0.0
  %1544 = vmatmul.mubr.f32.gmra.mrb[0].mxu0 %v1472
  %v1545 = vpop.f32.mrb[0].mxu0
  %v1546 = vadd.f32 0.0, %v1545
  %v1547 = vpop.f32.mrb[0].mxu0
  %1548 = vdwg.mxu0
  %v1549 = vmul.f32 %v1541, %v63
  %v1550 = vmul.f32 %v1546, %v64
  %1553 = vrot.lane.b32.xlu0 %v1549, 32
  %v1554 = vpop.permute.xlu0 %1553
  %1555 = vrot.lane.b32.xlu0 %v1550, 32
  %v1556 = vpop.permute.xlu0 %1555
  %v1559 = vadd.f32 %v1464, %v1554
  %v1560 = vadd.f32 %v1465, %v1556
  %v1561 = vmul.f32 %v1462, %v404
  %v1562 = vmul.f32 %v1463, %v404
  %v1563 = vmul.f32 %v1462, %v410
  %v1564 = vmul.f32 %v1463, %v410
  %v1565 = vmul.f32 %v1462, %v416
  %v1566 = vmul.f32 %v1463, %v416
  %v1567 = vmul.f32 %v1462, %v422
  %v1568 = vmul.f32 %v1463, %v422
  %1570 = vrot.lane.b32.xlu0 %v1559, 96
  %v1571 = vpop.permute.xlu0 %1570
  %v1573 = vsel %vm80, %v1561, 0
  %v1576 = vsel %vm80, %v1563, 0
  %v1579 = vsel %vm80, %v1565, 0
  %v1582 = vsel %vm80, %v1567, 0
  %v1584 = vsel %vm80, %v1571, 0
  %1586 = vmatprep.subr.mxu0 0.0
  %1587 = vmatpush1.xpose.msra.mxu0 %v1584
  %1588 = vmatprep.subr.mxu0 0.0
  %1589 = vmatpush1.xpose.msra.mxu0 0.0
  %1590 = vmatprep.subr.mxu0 0.0
  %1591 = vmatpush1.xpose.msra.mxu0 0.0
  %1592 = vmatprep.subr.mxu0 0.0
  %1593 = vmatpush1.xpose.msra.mxu0 0.0
  %1594 = vmatprep.subr.mxu0 0.0
  %1595 = vmatpush1.xpose.msra.mxu0 0.0
  %1596 = vmatprep.subr.mxu0 0.0
  %1597 = vmatpush1.xpose.msra.mxu0 0.0
  %1598 = vmatprep.subr.mxu0 0.0
  %1599 = vmatpush1.xpose.msra.mxu0 0.0
  %1600 = vmatprep.subr.mxu0 0.0
  %1601 = vmatpush1.xpose.msra.mxu0 0.0
  %1602 = vmatprep.subr.mxu0 0.0
  %1603 = vmatpush1.xpose.msra.mxu0 0.0
  %1604 = vmatprep.subr.mxu0 0.0
  %1605 = vmatpush1.xpose.msra.mxu0 0.0
  %1606 = vmatprep.subr.mxu0 0.0
  %1607 = vmatpush1.xpose.msra.mxu0 0.0
  %1608 = vmatprep.subr.mxu0 0.0
  %1609 = vmatpush1.xpose.msra.mxu0 0.0
  %1610 = vmatprep.subr.mxu0 0.0
  %1611 = vmatpush1.xpose.msra.mxu0 0.0
  %1612 = vmatprep.subr.mxu0 0.0
  %1613 = vmatpush1.xpose.msra.mxu0 0.0
  %1614 = vmatprep.subr.mxu0 0.0
  %1615 = vmatpush1.xpose.msra.mxu0 0.0
  %1616 = vmatprep.subr.mxu0 0.0
  %1617 = vmatpush1.xpose.msra.mxu0 0.0
  %1618 = vmatprep.subr.mxu0 0.0
  %1619 = vmatpush1.xpose.msra.mxu0 0.0
  %1620 = vmatprep.subr.mxu0 0.0
  %1621 = vmatpush1.xpose.msra.mxu0 0.0
  %1622 = vmatprep.subr.mxu0 0.0
  %1623 = vmatpush1.xpose.msra.mxu0 0.0
  %1624 = vmatprep.subr.mxu0 0.0
  %1625 = vmatpush1.xpose.msra.mxu0 0.0
  %1626 = vmatprep.subr.mxu0 0.0
  %1627 = vmatpush1.xpose.msra.mxu0 0.0
  %1628 = vmatprep.subr.mxu0 0.0
  %1629 = vmatpush1.xpose.msra.mxu0 0.0
  %1630 = vmatprep.subr.mxu0 0.0
  %1631 = vmatpush1.xpose.msra.mxu0 0.0
  %1632 = vmatprep.subr.mxu0 0.0
  %1633 = vmatpush1.xpose.msra.mxu0 0.0
  %1634 = vmatprep.subr.mxu0 0.0
  %1635 = vmatpush1.xpose.msra.mxu0 0.0
  %1636 = vmatprep.subr.mxu0 0.0
  %1637 = vmatpush1.xpose.msra.mxu0 0.0
  %1638 = vmatprep.subr.mxu0 0.0
  %1639 = vmatpush1.xpose.msra.mxu0 0.0
  %1640 = vmatprep.subr.mxu0 0.0
  %1641 = vmatpush1.xpose.msra.mxu0 0.0
  %1642 = vmatprep.subr.mxu0 0.0
  %1643 = vmatpush1.xpose.msra.mxu0 0.0
  %1644 = vmatprep.subr.mxu0 0.0
  %1645 = vmatpush1.xpose.msra.mxu0 0.0
  %1646 = vmatprep.subr.mxu0 0.0
  %1647 = vmatpush1.xpose.msra.mxu0 0.0
  %1648 = vmatprep.subr.mxu0 0.0
  %1649 = vmatpush1.xpose.msra.mxu0 0.0
  %1650 = vmatprep.mubr.f32.mxu0 0.0
  %1651 = vmatmul.mubr.f32.gmra.mrb[0].mxu0 %v1573
  %v1652 = vpop.f32.mrb[0].mxu0
  %v1653 = vadd.f32 0.0, %v1652
  %v1654 = vpop.f32.mrb[0].mxu0
  %1655 = vmatprep.mubr.f32.mxu0 0.0
  %1656 = vmatmul.mubr.f32.gmra.mrb[0].mxu0 %v1576
  %v1657 = vpop.f32.mrb[0].mxu0
  %v1658 = vadd.f32 0.0, %v1657
  %v1659 = vpop.f32.mrb[0].mxu0
  %1660 = vmatprep.mubr.f32.mxu0 0.0
  %1661 = vmatmul.mubr.f32.gmra.mrb[0].mxu0 %v1579
  %v1662 = vpop.f32.mrb[0].mxu0
  %v1663 = vadd.f32 0.0, %v1662
  %v1664 = vpop.f32.mrb[0].mxu0
  %1665 = vmatprep.mubr.f32.mxu0 0.0
  %1666 = vmatmul.mubr.f32.gmra.mrb[0].mxu0 %v1582
  %v1667 = vpop.f32.mrb[0].mxu0
  %v1668 = vadd.f32 0.0, %v1667
  %v1669 = vpop.f32.mrb[0].mxu0
  %1670 = vdwg.mxu0
  %1672 = vrot.lane.b32.xlu0 %v1560, 96
  %v1673 = vpop.permute.xlu0 %1672
  %v1675 = vsel %vm80, %v1562, 0
  %v1678 = vsel %vm80, %v1564, 0
  %v1681 = vsel %vm80, %v1566, 0
  %v1684 = vsel %vm80, %v1568, 0
  %v1686 = vsel %vm80, %v1673, 0
  %1688 = vmatprep.subr.mxu0 0.0
  %1689 = vmatpush1.xpose.msra.mxu0 %v1686
  %1690 = vmatprep.subr.mxu0 0.0
  %1691 = vmatpush1.xpose.msra.mxu0 0.0
  %1692 = vmatprep.subr.mxu0 0.0
  %1693 = vmatpush1.xpose.msra.mxu0 0.0
  %1694 = vmatprep.subr.mxu0 0.0
  %1695 = vmatpush1.xpose.msra.mxu0 0.0
  %1696 = vmatprep.subr.mxu0 0.0
  %1697 = vmatpush1.xpose.msra.mxu0 0.0
  %1698 = vmatprep.subr.mxu0 0.0
  %1699 = vmatpush1.xpose.msra.mxu0 0.0
  %1700 = vmatprep.subr.mxu0 0.0
  %1701 = vmatpush1.xpose.msra.mxu0 0.0
  %1702 = vmatprep.subr.mxu0 0.0
  %1703 = vmatpush1.xpose.msra.mxu0 0.0
  %1704 = vmatprep.subr.mxu0 0.0
  %1705 = vmatpush1.xpose.msra.mxu0 0.0
  %1706 = vmatprep.subr.mxu0 0.0
  %1707 = vmatpush1.xpose.msra.mxu0 0.0
  %1708 = vmatprep.subr.mxu0 0.0
  %1709 = vmatpush1.xpose.msra.mxu0 0.0
  %1710 = vmatprep.subr.mxu0 0.0
  %1711 = vmatpush1.xpose.msra.mxu0 0.0
  %1712 = vmatprep.subr.mxu0 0.0
  %1713 = vmatpush1.xpose.msra.mxu0 0.0
  %1714 = vmatprep.subr.mxu0 0.0
  %1715 = vmatpush1.xpose.msra.mxu0 0.0
  %1716 = vmatprep.subr.mxu0 0.0
  %1717 = vmatpush1.xpose.msra.mxu0 0.0
  %1718 = vmatprep.subr.mxu0 0.0
  %1719 = vmatpush1.xpose.msra.mxu0 0.0
  %1720 = vmatprep.subr.mxu0 0.0
  %1721 = vmatpush1.xpose.msra.mxu0 0.0
  %1722 = vmatprep.subr.mxu0 0.0
  %1723 = vmatpush1.xpose.msra.mxu0 0.0
  %1724 = vmatprep.subr.mxu0 0.0
  %1725 = vmatpush1.xpose.msra.mxu0 0.0
  %1726 = vmatprep.subr.mxu0 0.0
  %1727 = vmatpush1.xpose.msra.mxu0 0.0
  %1728 = vmatprep.subr.mxu0 0.0
  %1729 = vmatpush1.xpose.msra.mxu0 0.0
  %1730 = vmatprep.subr.mxu0 0.0
  %1731 = vmatpush1.xpose.msra.mxu0 0.0
  %1732 = vmatprep.subr.mxu0 0.0
  %1733 = vmatpush1.xpose.msra.mxu0 0.0
  %1734 = vmatprep.subr.mxu0 0.0
  %1735 = vmatpush1.xpose.msra.mxu0 0.0
  %1736 = vmatprep.subr.mxu0 0.0
  %1737 = vmatpush1.xpose.msra.mxu0 0.0
  %1738 = vmatprep.subr.mxu0 0.0
  %1739 = vmatpush1.xpose.msra.mxu0 0.0
  %1740 = vmatprep.subr.mxu0 0.0
  %1741 = vmatpush1.xpose.msra.mxu0 0.0
  %1742 = vmatprep.subr.mxu0 0.0
  %1743 = vmatpush1.xpose.msra.mxu0 0.0
  %1744 = vmatprep.subr.mxu0 0.0
  %1745 = vmatpush1.xpose.msra.mxu0 0.0
  %1746 = vmatprep.subr.mxu0 0.0
  %1747 = vmatpush1.xpose.msra.mxu0 0.0
  %1748 = vmatprep.subr.mxu0 0.0
  %1749 = vmatpush1.xpose.msra.mxu0 0.0
  %1750 = vmatprep.subr.mxu0 0.0
  %1751 = vmatpush1.xpose.msra.mxu0 0.0
  %1752 = vmatprep.mubr.f32.mxu0 0.0
  %1753 = vmatmul.mubr.f32.gmra.mrb[0].mxu0 %v1675
  %v1754 = vpop.f32.mrb[0].mxu0
  %v1755 = vadd.f32 0.0, %v1754
  %v1756 = vpop.f32.mrb[0].mxu0
  %1757 = vmatprep.mubr.f32.mxu0 0.0
  %1758 = vmatmul.mubr.f32.gmra.mrb[0].mxu0 %v1678
  %v1759 = vpop.f32.mrb[0].mxu0
  %v1760 = vadd.f32 0.0, %v1759
  %v1761 = vpop.f32.mrb[0].mxu0
  %1762 = vmatprep.mubr.f32.mxu0 0.0
  %1763 = vmatmul.mubr.f32.gmra.mrb[0].mxu0 %v1681
  %v1764 = vpop.f32.mrb[0].mxu0
  %v1765 = vadd.f32 0.0, %v1764
  %v1766 = vpop.f32.mrb[0].mxu0
  %1767 = vmatprep.mubr.f32.mxu0 0.0
  %1768 = vmatmul.mubr.f32.gmra.mrb[0].mxu0 %v1684
  %v1769 = vpop.f32.mrb[0].mxu0
  %v1770 = vadd.f32 0.0, %v1769
  %v1771 = vpop.f32.mrb[0].mxu0
  %1772 = vdwg.mxu0
  %v1773 = vsel %vm633, %v1653, -3.4028235e+38
  %v1774 = vsel %vm634, %v1658, -3.4028235e+38
  %v1775 = vsel %vm635, %v1663, -3.4028235e+38
  %v1776 = vsel %vm636, %v1668, -3.4028235e+38
  %v1777 = vsel %vm633, %v1755, -3.4028235e+38
  %v1778 = vsel %vm634, %v1760, -3.4028235e+38
  %v1779 = vsel %vm635, %v1765, -3.4028235e+38
  %v1780 = vsel %vm636, %v1770, -3.4028235e+38
  %v1781 = vmul.f32 %v1773, 0.35355338
  %v1782 = vmul.f32 %v1774, 0.35355338
  %v1783 = vmul.f32 %v1775, 0.35355338
  %v1784 = vmul.f32 %v1776, 0.35355338
  %v1785 = vmul.f32 %v1777, 0.35355338
  %v1786 = vmul.f32 %v1778, 0.35355338
  %v1787 = vmul.f32 %v1779, 0.35355338
  %v1788 = vmul.f32 %v1780, 0.35355338
  %v1789 = vsel %vm653, %v1781, -inf
  %1790 = vmax.xlane.f32.xlu0 %v1789
  %v1791 = vpop.xlane.xlu0 %1790
  %v1792 = vsel %vm653, %v1782, -inf
  %1793 = vmax.xlane.f32.xlu0 %v1792
  %v1794 = vpop.xlane.xlu0 %1793
  %v1795 = vsel %vm653, %v1783, -inf
  %1796 = vmax.xlane.f32.xlu0 %v1795
  %v1797 = vpop.xlane.xlu0 %1796
  %v1798 = vsel %vm653, %v1784, -inf
  %1799 = vmax.xlane.f32.xlu0 %v1798
  %v1800 = vpop.xlane.xlu0 %1799
  %v1801 = vsel %vm653, %v1785, -inf
  %1802 = vmax.xlane.f32.xlu0 %v1801
  %v1803 = vpop.xlane.xlu0 %1802
  %v1804 = vsel %vm653, %v1786, -inf
  %1805 = vmax.xlane.f32.xlu0 %v1804
  %v1806 = vpop.xlane.xlu0 %1805
  %v1807 = vsel %vm653, %v1787, -inf
  %1808 = vmax.xlane.f32.xlu0 %v1807
  %v1809 = vpop.xlane.xlu0 %1808
  %v1810 = vsel %vm653, %v1788, -inf
  %1811 = vmax.xlane.f32.xlu0 %v1810
  %v1812 = vpop.xlane.xlu0 %1811
  %v1813 = vsub.f32 %v1781, %v1791
  %v1814 = vsub.f32 %v1782, %v1794
  %v1815 = vsub.f32 %v1783, %v1797
  %v1816 = vsub.f32 %v1784, %v1800
  %v1817 = vsub.f32 %v1785, %v1803
  %v1818 = vsub.f32 %v1786, %v1806
  %v1819 = vsub.f32 %v1787, %v1809
  %v1820 = vsub.f32 %v1788, %v1812
  %v1821 = vmul.f32 %v1813, 1.442695
  %v1822 = vpow.pop %v1821
  %v1823 = vmul.f32 %v1814, 1.442695
  %v1824 = vpow.pop %v1823
  %v1825 = vmul.f32 %v1815, 1.442695
  %v1826 = vpow.pop %v1825
  %v1827 = vmul.f32 %v1816, 1.442695
  %v1828 = vpow.pop %v1827
  %v1829 = vmul.f32 %v1817, 1.442695
  %v1830 = vpow.pop %v1829
  %v1831 = vmul.f32 %v1818, 1.442695
  %v1832 = vpow.pop %v1831
  %v1833 = vmul.f32 %v1819, 1.442695
  %v1834 = vpow.pop %v1833
  %v1835 = vmul.f32 %v1820, 1.442695
  %v1836 = vpow.pop %v1835
  %v1837 = vsel %vm653, %v1822, 0.0
  %1838 = vadd.xlane.f32.xlu0 %v1837
  %v1839 = vpop.xlane.xlu0 %1838
  %v1840 = vsel %vm653, %v1824, 0.0
  %1841 = vadd.xlane.f32.xlu0 %v1840
  %v1842 = vpop.xlane.xlu0 %1841
  %v1843 = vsel %vm653, %v1826, 0.0
  %1844 = vadd.xlane.f32.xlu0 %v1843
  %v1845 = vpop.xlane.xlu0 %1844
  %v1846 = vsel %vm653, %v1828, 0.0
  %1847 = vadd.xlane.f32.xlu0 %v1846
  %v1848 = vpop.xlane.xlu0 %1847
  %v1849 = vsel %vm653, %v1830, 0.0
  %1850 = vadd.xlane.f32.xlu0 %v1849
  %v1851 = vpop.xlane.xlu0 %1850
  %v1852 = vsel %vm653, %v1832, 0.0
  %1853 = vadd.xlane.f32.xlu0 %v1852
  %v1854 = vpop.xlane.xlu0 %1853
  %v1855 = vsel %vm653, %v1834, 0.0
  %1856 = vadd.xlane.f32.xlu0 %v1855
  %v1857 = vpop.xlane.xlu0 %1856
  %v1858 = vsel %vm653, %v1836, 0.0
  %1859 = vadd.xlane.f32.xlu0 %v1858
  %v1860 = vpop.xlane.xlu0 %1859
  %v1861 = vrcp.pop %v1839
  %v1862 = vrcp.pop %v1842
  %v1863 = vrcp.pop %v1845
  %v1864 = vrcp.pop %v1848
  %v1865 = vrcp.pop %v1851
  %v1866 = vrcp.pop %v1854
  %v1867 = vrcp.pop %v1857
  %v1868 = vrcp.pop %v1860
  %v1869 = vmul.f32 %v1822, %v1861
  %v1870 = vmul.f32 %v1824, %v1862
  %v1871 = vmul.f32 %v1826, %v1863
  %v1872 = vmul.f32 %v1828, %v1864
  %v1873 = vmul.f32 %v1830, %v1865
  %v1874 = vmul.f32 %v1832, %v1866
  %v1875 = vmul.f32 %v1834, %v1867
  %v1876 = vmul.f32 %v1836, %v1868
  %1877 = vrot.lane.b32.xlu0 %v1369, 64
  %v1878 = vpop.permute.xlu0 %1877
  %v1881 = vsel %vm653, %v1869, 0
  %v1884 = vsel %vm653, %v1870, 0
  %v1887 = vsel %vm653, %v1871, 0
  %v1890 = vsel %vm653, %v1872, 0
  %1892 = vmatprep.subr.mxu0 0.0
  %1893 = vmatpush1.msra.mxu0 %v1878
  %1894 = vmatprep.subr.mxu0 0.0
  %1895 = vmatpush1.msra.mxu0 0.0
  %1896 = vmatprep.subr.mxu0 0.0
  %1897 = vmatpush1.msra.mxu0 0.0
  %1898 = vmatprep.subr.mxu0 0.0
  %1899 = vmatpush1.msra.mxu0 0.0
  %1900 = vmatprep.subr.mxu0 0.0
  %1901 = vmatpush1.msra.mxu0 0.0
  %1902 = vmatprep.subr.mxu0 0.0
  %1903 = vmatpush1.msra.mxu0 0.0
  %1904 = vmatprep.subr.mxu0 0.0
  %1905 = vmatpush1.msra.mxu0 0.0
  %1906 = vmatprep.subr.mxu0 0.0
  %1907 = vmatpush1.msra.mxu0 0.0
  %1908 = vmatprep.subr.mxu0 0.0
  %1909 = vmatpush1.msra.mxu0 0.0
  %1910 = vmatprep.subr.mxu0 0.0
  %1911 = vmatpush1.msra.mxu0 0.0
  %1912 = vmatprep.subr.mxu0 0.0
  %1913 = vmatpush1.msra.mxu0 0.0
  %1914 = vmatprep.subr.mxu0 0.0
  %1915 = vmatpush1.msra.mxu0 0.0
  %1916 = vmatprep.subr.mxu0 0.0
  %1917 = vmatpush1.msra.mxu0 0.0
  %1918 = vmatprep.subr.mxu0 0.0
  %1919 = vmatpush1.msra.mxu0 0.0
  %1920 = vmatprep.subr.mxu0 0.0
  %1921 = vmatpush1.msra.mxu0 0.0
  %1922 = vmatprep.subr.mxu0 0.0
  %1923 = vmatpush1.msra.mxu0 0.0
  %1924 = vmatprep.subr.mxu0 0.0
  %1925 = vmatpush1.msra.mxu0 0.0
  %1926 = vmatprep.subr.mxu0 0.0
  %1927 = vmatpush1.msra.mxu0 0.0
  %1928 = vmatprep.subr.mxu0 0.0
  %1929 = vmatpush1.msra.mxu0 0.0
  %1930 = vmatprep.subr.mxu0 0.0
  %1931 = vmatpush1.msra.mxu0 0.0
  %1932 = vmatprep.subr.mxu0 0.0
  %1933 = vmatpush1.msra.mxu0 0.0
  %1934 = vmatprep.subr.mxu0 0.0
  %1935 = vmatpush1.msra.mxu0 0.0
  %1936 = vmatprep.subr.mxu0 0.0
  %1937 = vmatpush1.msra.mxu0 0.0
  %1938 = vmatprep.subr.mxu0 0.0
  %1939 = vmatpush1.msra.mxu0 0.0
  %1940 = vmatprep.subr.mxu0 0.0
  %1941 = vmatpush1.msra.mxu0 0.0
  %1942 = vmatprep.subr.mxu0 0.0
  %1943 = vmatpush1.msra.mxu0 0.0
  %1944 = vmatprep.subr.mxu0 0.0
  %1945 = vmatpush1.msra.mxu0 0.0
  %1946 = vmatprep.subr.mxu0 0.0
  %1947 = vmatpush1.msra.mxu0 0.0
  %1948 = vmatprep.subr.mxu0 0.0
  %1949 = vmatpush1.msra.mxu0 0.0
  %1950 = vmatprep.subr.mxu0 0.0
  %1951 = vmatpush1.msra.mxu0 0.0
  %1952 = vmatprep.subr.mxu0 0.0
  %1953 = vmatpush1.msra.mxu0 0.0
  %1954 = vmatprep.subr.mxu0 0.0
  %1955 = vmatpush1.msra.mxu0 0.0
  %1956 = vmatprep.mubr.f32.mxu0 0.0
  %1957 = vmatmul.mubr.f32.gmra.mrb[0].mxu0 %v1881
  %v1958 = vpop.f32.mrb[0].mxu0
  %v1959 = vadd.f32 0.0, %v1958
  %v1960 = vpop.f32.mrb[0].mxu0
  %1961 = vmatprep.mubr.f32.mxu0 0.0
  %1962 = vmatmul.mubr.f32.gmra.mrb[0].mxu0 %v1884
  %v1963 = vpop.f32.mrb[0].mxu0
  %v1964 = vadd.f32 0.0, %v1963
  %v1965 = vpop.f32.mrb[0].mxu0
  %1966 = vmatprep.mubr.f32.mxu0 0.0
  %1967 = vmatmul.mubr.f32.gmra.mrb[0].mxu0 %v1887
  %v1968 = vpop.f32.mrb[0].mxu0
  %v1969 = vadd.f32 0.0, %v1968
  %v1970 = vpop.f32.mrb[0].mxu0
  %1971 = vmatprep.mubr.f32.mxu0 0.0
  %1972 = vmatmul.mubr.f32.gmra.mrb[0].mxu0 %v1890
  %v1973 = vpop.f32.mrb[0].mxu0
  %v1974 = vadd.f32 0.0, %v1973
  %v1975 = vpop.f32.mrb[0].mxu0
  %1976 = vdwg.mxu0
  %1977 = vrot.lane.b32.xlu0 %v1374, 64
  %v1978 = vpop.permute.xlu0 %1977
  %v1981 = vsel %vm653, %v1873, 0
  %v1984 = vsel %vm653, %v1874, 0
  %v1987 = vsel %vm653, %v1875, 0
  %v1990 = vsel %vm653, %v1876, 0
  %1992 = vmatprep.subr.mxu0 0.0
  %1993 = vmatpush1.msra.mxu0 %v1978
  %1994 = vmatprep.subr.mxu0 0.0
  %1995 = vmatpush1.msra.mxu0 0.0
  %1996 = vmatprep.subr.mxu0 0.0
  %1997 = vmatpush1.msra.mxu0 0.0
  %1998 = vmatprep.subr.mxu0 0.0
  %1999 = vmatpush1.msra.mxu0 0.0
  %2000 = vmatprep.subr.mxu0 0.0
  %2001 = vmatpush1.msra.mxu0 0.0
  %2002 = vmatprep.subr.mxu0 0.0
  %2003 = vmatpush1.msra.mxu0 0.0
  %2004 = vmatprep.subr.mxu0 0.0
  %2005 = vmatpush1.msra.mxu0 0.0
  %2006 = vmatprep.subr.mxu0 0.0
  %2007 = vmatpush1.msra.mxu0 0.0
  %2008 = vmatprep.subr.mxu0 0.0
  %2009 = vmatpush1.msra.mxu0 0.0
  %2010 = vmatprep.subr.mxu0 0.0
  %2011 = vmatpush1.msra.mxu0 0.0
  %2012 = vmatprep.subr.mxu0 0.0
  %2013 = vmatpush1.msra.mxu0 0.0
  %2014 = vmatprep.subr.mxu0 0.0
  %2015 = vmatpush1.msra.mxu0 0.0
  %2016 = vmatprep.subr.mxu0 0.0
  %2017 = vmatpush1.msra.mxu0 0.0
  %2018 = vmatprep.subr.mxu0 0.0
  %2019 = vmatpush1.msra.mxu0 0.0
  %2020 = vmatprep.subr.mxu0 0.0
  %2021 = vmatpush1.msra.mxu0 0.0
  %2022 = vmatprep.subr.mxu0 0.0
  %2023 = vmatpush1.msra.mxu0 0.0
  %2024 = vmatprep.subr.mxu0 0.0
  %2025 = vmatpush1.msra.mxu0 0.0
  %2026 = vmatprep.subr.mxu0 0.0
  %2027 = vmatpush1.msra.mxu0 0.0
  %2028 = vmatprep.subr.mxu0 0.0
  %2029 = vmatpush1.msra.mxu0 0.0
  %2030 = vmatprep.subr.mxu0 0.0
  %2031 = vmatpush1.msra.mxu0 0.0
  %2032 = vmatprep.subr.mxu0 0.0
  %2033 = vmatpush1.msra.mxu0 0.0
  %2034 = vmatprep.subr.mxu0 0.0
  %2035 = vmatpush1.msra.mxu0 0.0
  %2036 = vmatprep.subr.mxu0 0.0
  %2037 = vmatpush1.msra.mxu0 0.0
  %2038 = vmatprep.subr.mxu0 0.0
  %2039 = vmatpush1.msra.mxu0 0.0
  %2040 = vmatprep.subr.mxu0 0.0
  %2041 = vmatpush1.msra.mxu0 0.0
  %2042 = vmatprep.subr.mxu0 0.0
  %2043 = vmatpush1.msra.mxu0 0.0
  %2044 = vmatprep.subr.mxu0 0.0
  %2045 = vmatpush1.msra.mxu0 0.0
  %2046 = vmatprep.subr.mxu0 0.0
  %2047 = vmatpush1.msra.mxu0 0.0
  %2048 = vmatprep.subr.mxu0 0.0
  %2049 = vmatpush1.msra.mxu0 0.0
  %2050 = vmatprep.subr.mxu0 0.0
  %2051 = vmatpush1.msra.mxu0 0.0
  %2052 = vmatprep.subr.mxu0 0.0
  %2053 = vmatpush1.msra.mxu0 0.0
  %2054 = vmatprep.subr.mxu0 0.0
  %2055 = vmatpush1.msra.mxu0 0.0
  %2056 = vmatprep.mubr.f32.mxu0 0.0
  %2057 = vmatmul.mubr.f32.gmra.mrb[0].mxu0 %v1981
  %v2058 = vpop.f32.mrb[0].mxu0
  %v2059 = vadd.f32 0.0, %v2058
  %v2060 = vpop.f32.mrb[0].mxu0
  %2061 = vmatprep.mubr.f32.mxu0 0.0
  %2062 = vmatmul.mubr.f32.gmra.mrb[0].mxu0 %v1984
  %v2063 = vpop.f32.mrb[0].mxu0
  %v2064 = vadd.f32 0.0, %v2063
  %v2065 = vpop.f32.mrb[0].mxu0
  %2066 = vmatprep.mubr.f32.mxu0 0.0
  %2067 = vmatmul.mubr.f32.gmra.mrb[0].mxu0 %v1987
  %v2068 = vpop.f32.mrb[0].mxu0
  %v2069 = vadd.f32 0.0, %v2068
  %v2070 = vpop.f32.mrb[0].mxu0
  %2071 = vmatprep.mubr.f32.mxu0 0.0
  %2072 = vmatmul.mubr.f32.gmra.mrb[0].mxu0 %v1990
  %v2073 = vpop.f32.mrb[0].mxu0
  %v2074 = vadd.f32 0.0, %v2073
  %v2075 = vpop.f32.mrb[0].mxu0
  %2076 = vdwg.mxu0
  %v2077 = vmul.f32 %v1959, %v404
  %v2078 = vmul.f32 %v2059, %v404
  %v2079 = vmul.f32 %v1964, %v410
  %v2080 = vmul.f32 %v2064, %v410
  %v2081 = vadd.f32 %v2077, %v2079
  %v2082 = vadd.f32 %v2078, %v2080
  %v2083 = vmul.f32 %v1969, %v416
  %v2084 = vmul.f32 %v2069, %v416
  %v2085 = vadd.f32 %v2081, %v2083
  %v2086 = vadd.f32 %v2082, %v2084
  %v2087 = vmul.f32 %v1974, %v422
  %v2088 = vmul.f32 %v2074, %v422
  %v2089 = vadd.f32 %v2085, %v2087
  %v2090 = vadd.f32 %v2086, %v2088
  %s2091 = scalar_lea.vmem %s4, 32
  %v2092 = vld [vmem:[%s2091] sm:$0xff]
  %v2093 = vld [vmem:[%s2091 + $0x8] sm:$0xff]
  %v2094 = vld [vmem:[%s2091 + $0x10] sm:$0xff]
  %v2095 = vld [vmem:[%s2091 + $0x18] sm:$0xff]
  %s2096 = scalar_lea.vmem %s5, 32
  %v2097 = vld [vmem:[%s2096] sm:$0xff]
  %v2098 = vld [vmem:[%s2096 + $0x8] sm:$0xff]
  %v2099 = vld [vmem:[%s2096 + $0x10] sm:$0xff]
  %v2100 = vld [vmem:[%s2096 + $0x18] sm:$0xff]
  %s2101 = scalar_lea.vmem %s6, 1
  %v2102 = vld [vmem:[%s2101] sm:$0x1]
  %v2104 = vlaneseq
  %v2105 = vshrl.u32 %v2104, 7
  %v2106 = vsub.s32 0, %v2105
  %v2107 = vrot.slane %v2102, %v2106
  %2109 = vmatprep.subr.mxu0 0.0
  %2110 = vmatpush1.msra.mxu0 %v2097
  %2111 = vmatprep.subr.mxu0 0.0
  %2112 = vmatpush1.msra.mxu0 %v2098
  %2113 = vmatprep.subr.mxu0 0.0
  %2114 = vmatpush1.msra.mxu0 %v2099
  %2115 = vmatprep.subr.mxu0 0.0
  %2116 = vmatpush1.msra.mxu0 %v2100
  %2117 = vmatprep.subr.mxu0 0.0
  %2118 = vmatpush1.msra.mxu0 0.0
  %2119 = vmatprep.subr.mxu0 0.0
  %2120 = vmatpush1.msra.mxu0 0.0
  %2121 = vmatprep.subr.mxu0 0.0
  %2122 = vmatpush1.msra.mxu0 0.0
  %2123 = vmatprep.subr.mxu0 0.0
  %2124 = vmatpush1.msra.mxu0 0.0
  %2125 = vmatprep.subr.mxu0 0.0
  %2126 = vmatpush1.msra.mxu0 0.0
  %2127 = vmatprep.subr.mxu0 0.0
  %2128 = vmatpush1.msra.mxu0 0.0
  %2129 = vmatprep.subr.mxu0 0.0
  %2130 = vmatpush1.msra.mxu0 0.0
  %2131 = vmatprep.subr.mxu0 0.0
  %2132 = vmatpush1.msra.mxu0 0.0
  %2133 = vmatprep.subr.mxu0 0.0
  %2134 = vmatpush1.msra.mxu0 0.0
  %2135 = vmatprep.subr.mxu0 0.0
  %2136 = vmatpush1.msra.mxu0 0.0
  %2137 = vmatprep.subr.mxu0 0.0
  %2138 = vmatpush1.msra.mxu0 0.0
  %2139 = vmatprep.subr.mxu0 0.0
  %2140 = vmatpush1.msra.mxu0 0.0
  %2141 = vmatprep.subr.mxu0 0.0
  %2142 = vmatpush1.msra.mxu0 0.0
  %2143 = vmatprep.subr.mxu0 0.0
  %2144 = vmatpush1.msra.mxu0 0.0
  %2145 = vmatprep.subr.mxu0 0.0
  %2146 = vmatpush1.msra.mxu0 0.0
  %2147 = vmatprep.subr.mxu0 0.0
  %2148 = vmatpush1.msra.mxu0 0.0
  %2149 = vmatprep.subr.mxu0 0.0
  %2150 = vmatpush1.msra.mxu0 0.0
  %2151 = vmatprep.subr.mxu0 0.0
  %2152 = vmatpush1.msra.mxu0 0.0
  %2153 = vmatprep.subr.mxu0 0.0
  %2154 = vmatpush1.msra.mxu0 0.0
  %2155 = vmatprep.subr.mxu0 0.0
  %2156 = vmatpush1.msra.mxu0 0.0
  %2157 = vmatprep.subr.mxu0 0.0
  %2158 = vmatpush1.msra.mxu0 0.0
  %2159 = vmatprep.subr.mxu0 0.0
  %2160 = vmatpush1.msra.mxu0 0.0
  %2161 = vmatprep.subr.mxu0 0.0
  %2162 = vmatpush1.msra.mxu0 0.0
  %2163 = vmatprep.subr.mxu0 0.0
  %2164 = vmatpush1.msra.mxu0 0.0
  %2165 = vmatprep.subr.mxu0 0.0
  %2166 = vmatpush1.msra.mxu0 0.0
  %2167 = vmatprep.subr.mxu0 0.0
  %2168 = vmatpush1.msra.mxu0 0.0
  %2169 = vmatprep.subr.mxu0 0.0
  %2170 = vmatpush1.msra.mxu0 0.0
  %2171 = vmatprep.subr.mxu0 0.0
  %2172 = vmatpush1.msra.mxu0 0.0
  %2173 = vmatprep.mubr.f32.mxu0 0.0
  %2174 = vmatmul.mubr.f32.gmra.mrb[0].mxu0 %v1297
  %v2175 = vpop.f32.mrb[0].mxu0
  %v2176 = vadd.f32 %v2107, %v2175
  %v2177 = vpop.f32.mrb[0].mxu0
  %2178 = vmatprep.mubr.f32.mxu0 0.0
  %2179 = vmatmul.mubr.f32.gmra.mrb[0].mxu0 %v1300
  %v2180 = vpop.f32.mrb[0].mxu0
  %v2181 = vadd.f32 %v2107, %v2180
  %v2182 = vpop.f32.mrb[0].mxu0
  %2183 = vdwg.mxu0
  %v2184 = vmul.f32 %v2176, 0.5
  %v2185 = vmul.f32 %v2181, 0.5
  %v2186 = vmul.f32 %v2176, 0.044715
  %v2187 = vmul.f32 %v2181, 0.044715
  %v2188 = vmul.f32 %v2186, %v2176
  %v2189 = vmul.f32 %v2187, %v2181
  %v2190 = vmul.f32 %v2188, %v2176
  %v2191 = vmul.f32 %v2189, %v2181
  %v2192 = vadd.f32 %v2176, %v2190
  %v2193 = vadd.f32 %v2181, %v2191
  %v2194 = vmul.f32 %v2192, 0.7978846
  %v2195 = vmul.f32 %v2193, 0.7978846
  %v2196 = vtanh.pop %v2194
  %v2197 = vtanh.pop %v2195
  %v2198 = vadd.f32 %v2196, 1.0
  %v2199 = vadd.f32 %v2197, 1.0
  %v2200 = vmul.f32 %v2184, %v2198
  %v2201 = vmul.f32 %v2185, %v2199
  %s2202 = scalar_lea.vmem %s7, 128
  %v2203 = vld [vmem:[%s2202] sm:$0xff]
  %v2204 = vld [vmem:[%s2202 + $0x8] sm:$0xff]
  %v2205 = vld [vmem:[%s2202 + $0x10] sm:$0xff]
  %v2206 = vld [vmem:[%s2202 + $0x18] sm:$0xff]
  %v2207 = vld [vmem:[%s2202 + $0x20] sm:$0xff]
  %v2208 = vld [vmem:[%s2202 + $0x28] sm:$0xff]
  %v2209 = vld [vmem:[%s2202 + $0x30] sm:$0xff]
  %v2210 = vld [vmem:[%s2202 + $0x38] sm:$0xff]
  %v2211 = vld [vmem:[%s2202 + $0x40] sm:$0xff]
  %v2212 = vld [vmem:[%s2202 + $0x48] sm:$0xff]
  %v2213 = vld [vmem:[%s2202 + $0x50] sm:$0xff]
  %v2214 = vld [vmem:[%s2202 + $0x58] sm:$0xff]
  %v2215 = vld [vmem:[%s2202 + $0x60] sm:$0xff]
  %v2216 = vld [vmem:[%s2202 + $0x68] sm:$0xff]
  %v2217 = vld [vmem:[%s2202 + $0x70] sm:$0xff]
  %v2218 = vld [vmem:[%s2202 + $0x78] sm:$0xff]
  %s2219 = scalar_lea.vmem %s8, 1
  %v2220 = vld [vmem:[%s2219] sm:$0x1]
  %v2222 = vlaneseq
  %v2223 = vshrl.u32 %v2222, 7
  %v2224 = vsub.s32 0, %v2223
  %v2225 = vrot.slane %v2220, %v2224
  %2227 = vmatprep.subr.mxu0 0.0
  %2228 = vmatpush1.msra.mxu0 %v2203
  %2229 = vmatprep.subr.mxu0 0.0
  %2230 = vmatpush1.msra.mxu0 %v2204
  %2231 = vmatprep.subr.mxu0 0.0
  %2232 = vmatpush1.msra.mxu0 %v2205
  %2233 = vmatprep.subr.mxu0 0.0
  %2234 = vmatpush1.msra.mxu0 %v2206
  %2235 = vmatprep.subr.mxu0 0.0
  %2236 = vmatpush1.msra.mxu0 %v2207
  %2237 = vmatprep.subr.mxu0 0.0
  %2238 = vmatpush1.msra.mxu0 %v2208
  %2239 = vmatprep.subr.mxu0 0.0
  %2240 = vmatpush1.msra.mxu0 %v2209
  %2241 = vmatprep.subr.mxu0 0.0
  %2242 = vmatpush1.msra.mxu0 %v2210
  %2243 = vmatprep.subr.mxu0 0.0
  %2244 = vmatpush1.msra.mxu0 %v2211
  %2245 = vmatprep.subr.mxu0 0.0
  %2246 = vmatpush1.msra.mxu0 %v2212
  %2247 = vmatprep.subr.mxu0 0.0
  %2248 = vmatpush1.msra.mxu0 %v2213
  %2249 = vmatprep.subr.mxu0 0.0
  %2250 = vmatpush1.msra.mxu0 %v2214
  %2251 = vmatprep.subr.mxu0 0.0
  %2252 = vmatpush1.msra.mxu0 %v2215
  %2253 = vmatprep.subr.mxu0 0.0
  %2254 = vmatpush1.msra.mxu0 %v2216
  %2255 = vmatprep.subr.mxu0 0.0
  %2256 = vmatpush1.msra.mxu0 %v2217
  %2257 = vmatprep.subr.mxu0 0.0
  %2258 = vmatpush1.msra.mxu0 %v2218
  %2259 = vmatprep.subr.mxu0 0.0
  %2260 = vmatpush1.msra.mxu0 0.0
  %2261 = vmatprep.subr.mxu0 0.0
  %2262 = vmatpush1.msra.mxu0 0.0
  %2263 = vmatprep.subr.mxu0 0.0
  %2264 = vmatpush1.msra.mxu0 0.0
  %2265 = vmatprep.subr.mxu0 0.0
  %2266 = vmatpush1.msra.mxu0 0.0
  %2267 = vmatprep.subr.mxu0 0.0
  %2268 = vmatpush1.msra.mxu0 0.0
  %2269 = vmatprep.subr.mxu0 0.0
  %2270 = vmatpush1.msra.mxu0 0.0
  %2271 = vmatprep.subr.mxu0 0.0
  %2272 = vmatpush1.msra.mxu0 0.0
  %2273 = vmatprep.subr.mxu0 0.0
  %2274 = vmatpush1.msra.mxu0 0.0
  %2275 = vmatprep.subr.mxu0 0.0
  %2276 = vmatpush1.msra.mxu0 0.0
  %2277 = vmatprep.subr.mxu0 0.0
  %2278 = vmatpush1.msra.mxu0 0.0
  %2279 = vmatprep.subr.mxu0 0.0
  %2280 = vmatpush1.msra.mxu0 0.0
  %2281 = vmatprep.subr.mxu0 0.0
  %2282 = vmatpush1.msra.mxu0 0.0
  %2283 = vmatprep.subr.mxu0 0.0
  %2284 = vmatpush1.msra.mxu0 0.0
  %2285 = vmatprep.subr.mxu0 0.0
  %2286 = vmatpush1.msra.mxu0 0.0
  %2287 = vmatprep.subr.mxu0 0.0
  %2288 = vmatpush1.msra.mxu0 0.0
  %2289 = vmatprep.subr.mxu0 0.0
  %2290 = vmatpush1.msra.mxu0 0.0
  %2291 = vmatprep.mubr.f32.mxu0 0.0
  %2292 = vmatmul.mubr.f32.gmra.mrb[0].mxu0 %v2200
  %v2293 = vpop.f32.mrb[0].mxu0
  %v2294 = vadd.f32 %v2225, %v2293
  %v2295 = vpop.f32.mrb[0].mxu0
  %2296 = vmatprep.mubr.f32.mxu0 0.0
  %2297 = vmatmul.mubr.f32.gmra.mrb[0].mxu0 %v2201
  %v2298 = vpop.f32.mrb[0].mxu0
  %v2299 = vadd.f32 %v2225, %v2298
  %v2300 = vpop.f32.mrb[0].mxu0
  %2301 = vdwg.mxu0
  %v2303 = vsel %vm80, %v2089, 0
  %v2306 = vsel %vm80, %v2090, 0
  %2308 = vmatprep.subr.mxu0 0.0
  %2309 = vmatpush1.msra.mxu0 %v2092
  %2310 = vmatprep.subr.mxu0 0.0
  %2311 = vmatpush1.msra.mxu0 %v2093
  %2312 = vmatprep.subr.mxu0 0.0
  %2313 = vmatpush1.msra.mxu0 %v2094
  %2314 = vmatprep.subr.mxu0 0.0
  %2315 = vmatpush1.msra.mxu0 %v2095
  %2316 = vmatprep.subr.mxu0 0.0
  %2317 = vmatpush1.msra.mxu0 0.0
  %2318 = vmatprep.subr.mxu0 0.0
  %2319 = vmatpush1.msra.mxu0 0.0
  %2320 = vmatprep.subr.mxu0 0.0
  %2321 = vmatpush1.msra.mxu0 0.0
  %2322 = vmatprep.subr.mxu0 0.0
  %2323 = vmatpush1.msra.mxu0 0.0
  %2324 = vmatprep.subr.mxu0 0.0
  %2325 = vmatpush1.msra.mxu0 0.0
  %2326 = vmatprep.subr.mxu0 0.0
  %2327 = vmatpush1.msra.mxu0 0.0
  %2328 = vmatprep.subr.mxu0 0.0
  %2329 = vmatpush1.msra.mxu0 0.0
  %2330 = vmatprep.subr.mxu0 0.0
  %2331 = vmatpush1.msra.mxu0 0.0
  %2332 = vmatprep.subr.mxu0 0.0
  %2333 = vmatpush1.msra.mxu0 0.0
  %2334 = vmatprep.subr.mxu0 0.0
  %2335 = vmatpush1.msra.mxu0 0.0
  %2336 = vmatprep.subr.mxu0 0.0
  %2337 = vmatpush1.msra.mxu0 0.0
  %2338 = vmatprep.subr.mxu0 0.0
  %2339 = vmatpush1.msra.mxu0 0.0
  %2340 = vmatprep.subr.mxu0 0.0
  %2341 = vmatpush1.msra.mxu0 0.0
  %2342 = vmatprep.subr.mxu0 0.0
  %2343 = vmatpush1.msra.mxu0 0.0
  %2344 = vmatprep.subr.mxu0 0.0
  %2345 = vmatpush1.msra.mxu0 0.0
  %2346 = vmatprep.subr.mxu0 0.0
  %2347 = vmatpush1.msra.mxu0 0.0
  %2348 = vmatprep.subr.mxu0 0.0
  %2349 = vmatpush1.msra.mxu0 0.0
  %2350 = vmatprep.subr.mxu0 0.0
  %2351 = vmatpush1.msra.mxu0 0.0
  %2352 = vmatprep.subr.mxu0 0.0
  %2353 = vmatpush1.msra.mxu0 0.0
  %2354 = vmatprep.subr.mxu0 0.0
  %2355 = vmatpush1.msra.mxu0 0.0
  %2356 = vmatprep.subr.mxu0 0.0
  %2357 = vmatpush1.msra.mxu0 0.0
  %2358 = vmatprep.subr.mxu0 0.0
  %2359 = vmatpush1.msra.mxu0 0.0
  %2360 = vmatprep.subr.mxu0 0.0
  %2361 = vmatpush1.msra.mxu0 0.0
  %2362 = vmatprep.subr.mxu0 0.0
  %2363 = vmatpush1.msra.mxu0 0.0
  %2364 = vmatprep.subr.mxu0 0.0
  %2365 = vmatpush1.msra.mxu0 0.0
  %2366 = vmatprep.subr.mxu0 0.0
  %2367 = vmatpush1.msra.mxu0 0.0
  %2368 = vmatprep.subr.mxu0 0.0
  %2369 = vmatpush1.msra.mxu0 0.0
  %2370 = vmatprep.subr.mxu0 0.0
  %2371 = vmatpush1.msra.mxu0 0.0
  %2372 = vmatprep.mubr.f32.mxu0 0.0
  %2373 = vmatmul.mubr.f32.gmra.mrb[0].mxu0 %v2303
  %v2374 = vpop.f32.mrb[0].mxu0
  %v2375 = vadd.f32 %v2294, %v2374
  %v2376 = vpop.f32.mrb[0].mxu0
  %2377 = vmatprep.mubr.f32.mxu0 0.0
  %2378 = vmatmul.mubr.f32.gmra.mrb[0].mxu0 %v2306
  %v2379 = vpop.f32.mrb[0].mxu0
  %v2380 = vadd.f32 %v2299, %v2379
  %v2381 = vpop.f32.mrb[0].mxu0
  %2382 = vdwg.mxu0
  %v2383 = vadd.f32 %v2375, %v1243
  %v2384 = vadd.f32 %v2380, %v1244
  %v2385 = vld [vmem:[%s14] sm:$0x1]
  %v2386 = vld [vmem:[%s15] sm:$0x1]
  %v2387 = vsel %vm80, %v2383, 0.0
  %2388 = vadd.xlane.f32.xlu0 %v2387
  %v2389 = vpop.xlane.xlu0 %2388
  %v2390 = vsel %vm80, %v2384, 0.0
  %2391 = vadd.xlane.f32.xlu0 %v2390
  %v2392 = vpop.xlane.xlu0 %2391
  %v2393 = vmul.f32 %v2389, %v87
  %v2394 = vmul.f32 %v2392, %v87
  %v2395 = vsub.f32 %v2383, %v2393
  %v2396 = vsub.f32 %v2384, %v2394
  %v2397 = vmul.f32 %v2395, %v2395
  %v2398 = vmul.f32 %v2396, %v2396
  %v2399 = vsel %vm80, %v2397, 0.0
  %2400 = vadd.xlane.f32.xlu0 %v2399
  %v2401 = vpop.xlane.xlu0 %2400
  %v2402 = vsel %vm80, %v2398, 0.0
  %2403 = vadd.xlane.f32.xlu0 %v2402
  %v2404 = vpop.xlane.xlu0 %2403
  %v2405 = vmul.f32 %v2401, %v87
  %v2406 = vmul.f32 %v2404, %v87
  %v2407 = vadd.f32 %v2405, 1e-05
  %v2408 = vadd.f32 %v2406, 1e-05
  %v2409 = vrsqrt.pop %v2407
  %v2410 = vrsqrt.pop %v2408
  %v2411 = vmul.f32 %v2395, %v2409
  %v2412 = vmul.f32 %v2396, %v2410
  %v2414 = vlaneseq
  %v2415 = vshrl.u32 %v2414, 7
  %v2416 = vsub.s32 0, %v2415
  %v2417 = vrot.slane %v2385, %v2416
  %v2419 = vmul.f32 %v2411, %v2417
  %v2420 = vmul.f32 %v2412, %v2417
  %v2422 = vlaneseq
  %v2423 = vshrl.u32 %v2422, 7
  %v2424 = vsub.s32 0, %v2423
  %v2425 = vrot.slane %v2386, %v2424
  %v2427 = vadd.f32 %v2419, %v2425
  %v2428 = vadd.f32 %v2420, %v2425
  %v2429 = vld [vmem:[%s16] sm:$0xff]
  %v2430 = vld [vmem:[%s16 + $0x8] sm:$0xff]
  %v2431 = vld [vmem:[%s16 + $0x10] sm:$0xff]
  %v2432 = vld [vmem:[%s16 + $0x18] sm:$0xff]
  %v2433 = vld [vmem:[%s17] sm:$0x1]
  %v2435 = vlaneseq
  %v2436 = vshrl.u32 %v2435, 7
  %v2437 = vsub.s32 0, %v2436
  %v2438 = vrot.slane %v2433, %v2437
  %v2441 = vsel %vm80, %v2427, 0
  %v2444 = vsel %vm80, %v2428, 0
  %2446 = vmatprep.subr.mxu0 0.0
  %2447 = vmatpush1.msra.mxu0 %v2429
  %2448 = vmatprep.subr.mxu0 0.0
  %2449 = vmatpush1.msra.mxu0 %v2430
  %2450 = vmatprep.subr.mxu0 0.0
  %2451 = vmatpush1.msra.mxu0 %v2431
  %2452 = vmatprep.subr.mxu0 0.0
  %2453 = vmatpush1.msra.mxu0 %v2432
  %2454 = vmatprep.subr.mxu0 0.0
  %2455 = vmatpush1.msra.mxu0 0.0
  %2456 = vmatprep.subr.mxu0 0.0
  %2457 = vmatpush1.msra.mxu0 0.0
  %2458 = vmatprep.subr.mxu0 0.0
  %2459 = vmatpush1.msra.mxu0 0.0
  %2460 = vmatprep.subr.mxu0 0.0
  %2461 = vmatpush1.msra.mxu0 0.0
  %2462 = vmatprep.subr.mxu0 0.0
  %2463 = vmatpush1.msra.mxu0 0.0
  %2464 = vmatprep.subr.mxu0 0.0
  %2465 = vmatpush1.msra.mxu0 0.0
  %2466 = vmatprep.subr.mxu0 0.0
  %2467 = vmatpush1.msra.mxu0 0.0
  %2468 = vmatprep.subr.mxu0 0.0
  %2469 = vmatpush1.msra.mxu0 0.0
  %2470 = vmatprep.subr.mxu0 0.0
  %2471 = vmatpush1.msra.mxu0 0.0
  %2472 = vmatprep.subr.mxu0 0.0
  %2473 = vmatpush1.msra.mxu0 0.0
  %2474 = vmatprep.subr.mxu0 0.0
  %2475 = vmatpush1.msra.mxu0 0.0
  %2476 = vmatprep.subr.mxu0 0.0
  %2477 = vmatpush1.msra.mxu0 0.0
  %2478 = vmatprep.subr.mxu0 0.0
  %2479 = vmatpush1.msra.mxu0 0.0
  %2480 = vmatprep.subr.mxu0 0.0
  %2481 = vmatpush1.msra.mxu0 0.0
  %2482 = vmatprep.subr.mxu0 0.0
  %2483 = vmatpush1.msra.mxu0 0.0
  %2484 = vmatprep.subr.mxu0 0.0
  %2485 = vmatpush1.msra.mxu0 0.0
  %2486 = vmatprep.subr.mxu0 0.0
  %2487 = vmatpush1.msra.mxu0 0.0
  %2488 = vmatprep.subr.mxu0 0.0
  %2489 = vmatpush1.msra.mxu0 0.0
  %2490 = vmatprep.subr.mxu0 0.0
  %2491 = vmatpush1.msra.mxu0 0.0
  %2492 = vmatprep.subr.mxu0 0.0
  %2493 = vmatpush1.msra.mxu0 0.0
  %2494 = vmatprep.subr.mxu0 0.0
  %2495 = vmatpush1.msra.mxu0 0.0
  %2496 = vmatprep.subr.mxu0 0.0
  %2497 = vmatpush1.msra.mxu0 0.0
  %2498 = vmatprep.subr.mxu0 0.0
  %2499 = vmatpush1.msra.mxu0 0.0
  %2500 = vmatprep.subr.mxu0 0.0
  %2501 = vmatpush1.msra.mxu0 0.0
  %2502 = vmatprep.subr.mxu0 0.0
  %2503 = vmatpush1.msra.mxu0 0.0
  %2504 = vmatprep.subr.mxu0 0.0
  %2505 = vmatpush1.msra.mxu0 0.0
  %2506 = vmatprep.subr.mxu0 0.0
  %2507 = vmatpush1.msra.mxu0 0.0
  %2508 = vmatprep.subr.mxu0 0.0
  %2509 = vmatpush1.msra.mxu0 0.0
  %2510 = vmatprep.mubr.f32.mxu0 0.0
  %2511 = vmatmul.mubr.f32.gmra.mrb[0].mxu0 %v2441
  %v2512 = vpop.f32.mrb[0].mxu0
  %v2513 = vadd.f32 %v2438, %v2512
  %v2514 = vpop.f32.mrb[0].mxu0
  %2515 = vmatprep.mubr.f32.mxu0 0.0
  %2516 = vmatmul.mubr.f32.gmra.mrb[0].mxu0 %v2444
  %v2517 = vpop.f32.mrb[0].mxu0
  %v2518 = vadd.f32 %v2438, %v2517
  %v2519 = vpop.f32.mrb[0].mxu0
  %2520 = vdwg.mxu0
  %2521 = vst [vmem:[%s18] sm:$0xff] %v2513
  %2522 = vst [vmem:[%s18 + $0x8] sm:$0xff] %v2518
  // Predicated region
  $region74: #{gptj_top_forward.1} parent=0 // pred_check
    _
  $region75: #{gptj_top_forward.1} parent=0 // pred_check_branch
    %2524 = sbr.rel (0) target = $region77
  $region76: #{gptj_top_forward.1} parent=0 // pred_region
    _
  $region77: #{gptj_top_forward.1} parent=0 // pred_fallthru
    _
  // Predicated region
  $region78: #{gptj_top_forward.1} parent=0 // pred_check
    _
  $region79: #{gptj_top_forward.1} parent=0 // pred_check_branch
    %2526 = sbr.rel (0) target = $region81
  $region80: #{gptj_top_forward.1} parent=0 // pred_region
    _
  $region81: #{gptj_top_forward.1} parent=0 // pred_fallthru
    _

</llo_original>
